<compile_context>
chip_gen: v7x
topology: tpu7x:2x2x1
jax: 0.10.0
libtpu: 0.0.40
codegen_flags: <defaults>
</compile_context>

<pallas_src>
import jax
import jax.numpy as jnp
from jax.experimental import pallas as pl
from jax.experimental.pallas import tpu as pltpu


# ---------------------------------------------------------------------------
# helpers
# ---------------------------------------------------------------------------
def _round_up(x, m):
    return ((x + m - 1) // m) * m


def _vmem_capacity_bytes():
    """Physical per-core VMEM (generation-aware), conservative fallback."""
    try:
        info = pltpu.get_tpu_info()
        cap = int(getattr(info, "vmem_capacity_bytes", 0))
        if cap > 0:
            return cap
    except Exception:
        pass
    return 64 << 20  # v7x per-TensorCore size; safe lower bound for v5e/v6e


def _pick_batch_tile(B, per_row_bytes, fixed_bytes, budget_bytes):
    """VMEM-budget-driven batch tile for stage 1.

    Largest tile that fits the budget; prefers >= 4 grid steps (2 per
    TensorCore on v7x) so BlockSpec double-buffering has work to overlap;
    keeps the tile a multiple of 8 rows and prefers exact divisors of B.
    """
    fit = (budget_bytes - fixed_bytes) // max(per_row_bytes, 1)
    fit = max(8, min(int(fit), B))
    tb = fit
    if B >= 32:                      # leave >= 4 pipeline steps when possible
        tb = min(tb, max(8, B // 4))
    if tb >= B:
        return B
    tb = max(8, (tb // 8) * 8)
    for cand in range(tb, 7, -8):    # prefer a divisor of B (no ragged block)
        if B % cand == 0:
            return cand
    return tb


def _pick_feature_tile(Hd, B, O, budget_bytes):
    """Hd tile for stage 2 (bounds VMEM, gives MXU-friendly K tiles)."""
    best = None
    for t in (512, 384, 256, 128):
        if Hd % t == 0:
            need = 2 * B * t * 4 + 2 * t * _round_up(O, 128) * 2 \
                   + 2 * B * _round_up(O, 128) * 4 + (1 << 20)
            if need <= budget_bytes:
                if Hd // t >= 2:     # prefer >= 2 steps so h tiles pipeline
                    return t
                if best is None:
                    best = t
    return best if best is not None else Hd


# ---------------------------------------------------------------------------
# Stage 1: AdaptiveAvgPool2d((1,1)) + Flatten + Linear(C -> Hd) per batch tile
# ---------------------------------------------------------------------------
def _pool_linear1_kernel(x_ref, w1_ref, h_ref):
    # x_ref:  (TB, C, HW) f32   (original NCHW layout, H*W flattened)
    # w1_ref: (C, Hd)     bf16  (pre-scaled by 1/HW in the wrapper)
    # h_ref:  (TB, Hd)    f32
    # Pool-as-sum directly off the Ref (no full f32 tile temp); the reduction
    # over the minor HW axis runs on the XLU and hides under the tile DMA.
    pooled = jnp.sum(x_ref[...], axis=2)                       # (TB, C) f32
    # Linear1 without bias: the bias cancels exactly under train-mode BN.
    h_ref[...] = jnp.dot(pooled.astype(jnp.bfloat16), w1_ref[...],
                         preferred_element_type=jnp.float32)


def _run_stage1(x3, w1_s, TB, grid, vmem_limit, single_buffer_w1):
    B, C, HW = x3.shape
    Hd = w1_s.shape[1]
    if single_buffer_w1:
        # W1's block index is constant across the grid -> single buffer
        # (returns its VMEM to the x-tile pipeline).
        w1_spec = pl.BlockSpec((C, Hd), lambda i: (0, 0),
                               pipeline_mode=pl.Buffered(1))
    else:
        w1_spec = pl.BlockSpec((C, Hd), lambda i: (0, 0))
    return pl.pallas_call(
        _pool_linear1_kernel,
        out_shape=jax.ShapeDtypeStruct((B, Hd), jnp.float32),
        grid_spec=pltpu.PrefetchScalarGridSpec(
            num_scalar_prefetch=0,
            grid=grid,
            in_specs=[
                pl.BlockSpec((TB, C, HW), lambda i: (i, 0, 0)),
                w1_spec,
            ],
            out_specs=pl.BlockSpec((TB, Hd), lambda i: (i, 0)),
        ),
        compiler_params=pltpu.CompilerParams(
            dimension_semantics=("parallel",),
            vmem_limit_bytes=vmem_limit,
        ),
    )(x3, w1_s)


# ---------------------------------------------------------------------------
# Stage 2: BatchNorm1d (train mode) + ReLU + Linear(Hd -> O) + F.normalize
#          gridded over Hd feature tiles, f32 (B, O) accumulator
# ---------------------------------------------------------------------------
def _bn_relu_linear2_normalize_kernel(h_ref, gamma_ref, beta_ref, w2_ref,
                                      o_ref, acc_ref):
    k = pl.program_id(0)

    @pl.when(k == 0)
    def _():
        acc_ref[...] = jnp.zeros_like(acc_ref)

    h = h_ref[...]                                   # (B, THd) f32
    # BatchNorm1d train mode: per-feature batch mean, biased var, eps=1e-5.
    # Stats are per-feature, so computing them per Hd tile is exact.
    mean = jnp.mean(h, axis=0, keepdims=True)
    d = h - mean
    var = jnp.mean(d * d, axis=0, keepdims=True)
    hbn = d * jax.lax.rsqrt(var + 1e-5) * gamma_ref[...] + beta_ref[...]
    hbn = jnp.maximum(hbn, 0.0)                      # ReLU
    # Linear2 (no bias): bf16 operands, f32 accumulation across Hd tiles.
    acc_ref[...] += jnp.dot(hbn.astype(jnp.bfloat16), w2_ref[...],
                            preferred_element_type=jnp.float32)

    @pl.when(k == pl.num_programs(0) - 1)
    def _():
        y = acc_ref[...]
        # F.normalize(dim=1): x / max(||x||_2, 1e-12) == x * rsqrt(max(ss,1e-24))
        sumsq = jnp.sum(y * y, axis=1, keepdims=True)
        o_ref[...] = y * jax.lax.rsqrt(jnp.maximum(sumsq, 1e-24))


# ---------------------------------------------------------------------------
# Wrapper
# ---------------------------------------------------------------------------
def projection_forward(x_nchw, w1, b1, gamma, beta, w2):
    """x_nchw: (B, C, H, W) float32. Returns (B, output_dim) float32.

    Matches the PyTorch module in train mode. `b1` is accepted for API
    fidelity but is mathematically dropped: train-mode BatchNorm1d subtracts
    the batch mean immediately after Linear1, cancelling the bias exactly.
    """
    del b1
    B, C, H, W = x_nchw.shape
    HW = H * W
    Hd = w1.shape[1]
    O = w2.shape[1]

    # Free reshape (contiguous): keep the original NCHW layout, no HBM pass.
    x3 = x_nchw.reshape(B, C, HW)

    # Fold the 1/(H*W) pooling scale into W1 (f32) before the bf16 cast.
    w1_s = (w1 * (1.0 / HW)).astype(jnp.bfloat16)
    w2_b = w2.astype(jnp.bfloat16)
    gr = gamma.reshape(1, Hd).astype(jnp.float32)
    br = beta.reshape(1, Hd).astype(jnp.float32)

    # ---- VMEM budget (generation-aware) and stage-1 tiling ----
    cap = _vmem_capacity_bytes()
    budget = int(cap * 0.6)          # leave Mosaic scratch / output headroom
    limit_cap = int(cap * 0.9)

    C_pad = _round_up(C, 8)
    HW_pad = _round_up(HW, 128)
    per_row = 2 * C_pad * HW_pad * 4 + 2 * _round_up(Hd, 128) * 4
    w1_bytes = 2 * C_pad * _round_up(Hd, 128) * 2   # conservative (2 buffers)
    fixed = w1_bytes + (2 << 20)
    TB = _pick_batch_tile(B, per_row, fixed, budget)
    grid1 = (pl.cdiv(B, TB),)
    need1 = TB * per_row + fixed
    vmem1 = int(min(limit_cap, max(need1 + (4 << 20), 16 << 20)))

    try:
        h = _run_stage1(x3, w1_s, TB, grid1, vmem1, single_buffer_w1=True)
    except Exception:
        # pipeline_mode=pl.Buffered(1) unsupported here: fall back to the
        # default double-buffered weight block (correct, slightly more VMEM).
        h = _run_stage1(x3, w1_s, TB, grid1, vmem1, single_buffer_w1=False)

    # ---- Stage 2: tiled over Hd, f32 (B, O) accumulator ----
    THd = _pick_feature_tile(Hd, B, O, budget)
    grid2 = (Hd // THd,)
    need2 = (2 * B * THd * 4 + 2 * _round_up(THd, 8) * _round_up(O, 128) * 2
             + 2 * B * _round_up(O, 128) * 4)
    vmem2 = int(min(limit_cap, max(need2 + (4 << 20), 16 << 20)))

    out = pl.pallas_call(
        _bn_relu_linear2_normalize_kernel,
        out_shape=jax.ShapeDtypeStruct((B, O), jnp.float32),
        grid_spec=pltpu.PrefetchScalarGridSpec(
            num_scalar_prefetch=0,
            grid=grid2,
            in_specs=[
                pl.BlockSpec((B, THd), lambda k: (0, k)),
                pl.BlockSpec((1, THd), lambda k: (0, k)),
                pl.BlockSpec((1, THd), lambda k: (0, k)),
                pl.BlockSpec((THd, O), lambda k: (k, 0)),
            ],
            out_specs=pl.BlockSpec((B, O), lambda k: (0, 0)),
            scratch_shapes=[pltpu.VMEM((B, O), jnp.float32)],
        ),
        compiler_params=pltpu.CompilerParams(
            dimension_semantics=("arbitrary",),
            vmem_limit_bytes=vmem2,
        ),
    )(h, gr, br, w2_b)
    return out


# ---------------------------------------------------------------------------
# Pure-JAX f32 reference (matches the PyTorch module, train-mode BN)
# ---------------------------------------------------------------------------
def _reference_forward(x_nchw, w1, b1, gamma, beta, w2):
    pooled = jnp.mean(x_nchw, axis=(2, 3))                        # (B, C)
    h = pooled @ w1 + b1[None, :]
    mean = jnp.mean(h, axis=0, keepdims=True)
    var = jnp.mean((h - mean) ** 2, axis=0, keepdims=True)
    h = (h - mean) * jax.lax.rsqrt(var + 1e-5) * gamma[None, :] + beta[None, :]
    h = jnp.maximum(h, 0.0)
    y = h @ w2
    norm = jnp.linalg.norm(y, axis=1, keepdims=True)
    return y / jnp.maximum(norm, 1e-12)


def init_params(key, input_dim, hidden_dim, output_dim):
    """Deterministic init matching PyTorch nn.Linear / BatchNorm1d defaults."""
    k1, k2, k3 = jax.random.split(key, 3)
    bound1 = 1.0 / jnp.sqrt(input_dim)
    # stored as (in, out) — transposed vs. PyTorch's (out, in)
    w1 = jax.random.uniform(k1, (input_dim, hidden_dim), jnp.float32, -bound1, bound1)
    b1 = jax.random.uniform(k2, (hidden_dim,), jnp.float32, -bound1, bound1)
    gamma = jnp.ones((hidden_dim,), jnp.float32)
    beta = jnp.zeros((hidden_dim,), jnp.float32)
    bound2 = 1.0 / jnp.sqrt(hidden_dim)
    w2 = jax.random.uniform(k3, (hidden_dim, output_dim), jnp.float32, -bound2, bound2)
    return w1, b1, gamma, beta, w2


if __name__ == "__main__":
    # Small shapes consistent with the module's forward:
    # x: (B, input_dim, H, W); pool -> (B, input_dim)
    B, input_dim, Hs, Ws = 32, 128, 4, 4
    hidden_dim, output_dim = 256, 128

    key = jax.random.PRNGKey(0)
    kx, kp = jax.random.split(key)
    x = jax.random.normal(kx, (B, input_dim, Hs, Ws), jnp.float32)
    w1, b1, gamma, beta, w2 = init_params(kp, input_dim, hidden_dim, output_dim)

    out = projection_forward(x, w1, b1, gamma, beta, w2)
    out = jax.block_until_ready(out)

    # Sanity: shape, unit row norms, agreement with the f32 reference
    # (loose tolerance: matmul operands are bf16 with f32 accumulation).
    assert out.shape == (B, output_dim)
    row_norms = jnp.linalg.norm(out, axis=1)
    assert jnp.allclose(row_norms, 1.0, atol=1e-3)
    ref = _reference_forward(x, w1, b1, gamma, beta, w2)
    assert jnp.max(jnp.abs(out - ref)) < 5e-2

    print("KERNEL_OK")
</pallas_src>

<mosaic_0001>
module attributes {stable_mosaic.version = 11 : i64} {
  func.func @_pool_linear1_kernel(%arg0: i32, %arg1: memref<8x128x16xf32, #tpu.memory_space<vmem>>, %arg2: memref<128x256xbf16, #tpu.memory_space<vmem>>, %arg3: memref<8x256xf32, #tpu.memory_space<vmem>>) attributes {dimension_semantics = [#tpu.dimension_semantics<parallel>], iteration_bounds = array<i64: 4>, scalar_prefetch = 0 : i64, scratch_operands = 0 : i64, tpu.core_type = #tpu.core_type<tc>, window_params = [{transform_indices = @transform_0, window_bounds = array<i64: 8, 128, 16>}, {pipeline_mode = #tpu.pipeline_mode<synchronous>, transform_indices = @transform_1, window_bounds = array<i64: 128, 256>}, {transform_indices = @transform_2, window_bounds = array<i64: 8, 256>}]} {
    %c0 = arith.constant 0 : index
    %c0_0 = arith.constant 0 : index
    %c0_1 = arith.constant 0 : index
    %0 = vector.load %arg1[%c0, %c0_0, %c0_1] : memref<8x128x16xf32, #tpu.memory_space<vmem>>, vector<8x128x16xf32>
    %cst = arith.constant dense<0.000000e+00> : vector<8x128xf32>
    %1 = vector.multi_reduction <add>, %0, %cst [2] : vector<8x128x16xf32> to vector<8x128xf32>
    %2 = arith.truncf %1 : vector<8x128xf32> to vector<8x128xbf16>
    %c0_2 = arith.constant 0 : index
    %c0_3 = arith.constant 0 : index
    %3 = vector.load %arg2[%c0_2, %c0_3] : memref<128x256xbf16, #tpu.memory_space<vmem>>, vector<128x256xbf16>
    %cst_4 = arith.constant dense<0.000000e+00> : vector<8x256xf32>
    %4 = tpu.matmul %2, %3, %cst_4 {dimension_numbers = #tpu.dot_dimension_numbers<[1], [0], [0], [1], [0, 0, 1, 1], [], []>} : vector<8x128xbf16>, vector<128x256xbf16>, vector<8x256xf32> -> vector<8x256xf32>
    %c0_5 = arith.constant 0 : index
    %c0_6 = arith.constant 0 : index
    %5 = vector.load %arg3[%c0_5, %c0_6] : memref<8x256xf32, #tpu.memory_space<vmem>>, vector<8x256xf32>
    tpu.vector_store %arg3[%c0_5, %c0_6], %4 {strides = array<i32>} : memref<8x256xf32, #tpu.memory_space<vmem>>, vector<8x256xf32>,
    return
  }
  func.func @transform_0(%arg0: i32) -> (i32, i32, i32) {
    %c0_i32 = arith.constant 0 : i32
    %c0_i32_0 = arith.constant 0 : i32
    %c0_i32_1 = arith.constant 0 : i32
    return %arg0, %c0_i32, %c0_i32_0 : i32, i32, i32
  }
  func.func @transform_1(%arg0: i32) -> (i32, i32) {
    %c0_i32 = arith.constant 0 : i32
    %c0_i32_0 = arith.constant 0 : i32
    %c0_i32_1 = arith.constant 0 : i32
    return %c0_i32, %c0_i32_0 : i32, i32
  }
  func.func @transform_2(%arg0: i32) -> (i32, i32) {
    %c0_i32 = arith.constant 0 : i32
    %c0_i32_0 = arith.constant 0 : i32
    return %arg0, %c0_i32 : i32, i32
  }
}

module attributes {stable_mosaic.version = 11 : i64} {
  func.func @_pool_linear1_kernel(%arg0: i32, %arg1: memref<8x128x16xf32, #tpu.memory_space<vmem>>, %arg2: memref<128x256xbf16, #tpu.memory_space<vmem>>, %arg3: memref<8x256xf32, #tpu.memory_space<vmem>>) attributes {dimension_semantics = [#tpu.dimension_semantics<parallel>], iteration_bounds = array<i64: 4>, scalar_prefetch = 0 : i64, scratch_operands = 0 : i64, tpu.core_type = #tpu.core_type<tc>, window_params = [{transform_indices = @transform_0, window_bounds = array<i64: 8, 128, 16>}, {pipeline_mode = #tpu.pipeline_mode<synchronous>, transform_indices = @transform_1, window_bounds = array<i64: 128, 256>}, {transform_indices = @transform_2, window_bounds = array<i64: 8, 256>}]} {
    %c0 = arith.constant 0 : index
    %c0_0 = arith.constant 0 : index
    %c0_1 = arith.constant 0 : index
    %0 = vector.load %arg1[%c0, %c0_0, %c0_1] : memref<8x128x16xf32, #tpu.memory_space<vmem>>, vector<8x128x16xf32>
    %cst = arith.constant dense<0.000000e+00> : vector<8x128xf32>
    %1 = vector.multi_reduction <add>, %0, %cst [2] : vector<8x128x16xf32> to vector<8x128xf32>
    %2 = arith.truncf %1 : vector<8x128xf32> to vector<8x128xbf16>
    %c0_2 = arith.constant 0 : index
    %c0_3 = arith.constant 0 : index
    %3 = vector.load %arg2[%c0_2, %c0_3] : memref<128x256xbf16, #tpu.memory_space<vmem>>, vector<128x256xbf16>
    %cst_4 = arith.constant dense<0.000000e+00> : vector<8x256xf32>
    %4 = tpu.matmul %2, %3, %cst_4 {dimension_numbers = #tpu.dot_dimension_numbers<[1], [0], [0], [1], [0, 0, 1, 1], [], []>} : vector<8x128xbf16>, vector<128x256xbf16>, vector<8x256xf32> -> vector<8x256xf32>
    %c0_5 = arith.constant 0 : index
    %c0_6 = arith.constant 0 : index
    %5 = vector.load %arg3[%c0_5, %c0_6] : memref<8x256xf32, #tpu.memory_space<vmem>>, vector<8x256xf32>
    tpu.vector_store %arg3[%c0_5, %c0_6], %4 {strides = array<i32>} : memref<8x256xf32, #tpu.memory_space<vmem>>, vector<8x256xf32>,
    return
  }
  func.func @transform_0(%arg0: i32) -> (i32, i32, i32) {
    %c0_i32 = arith.constant 0 : i32
    %c0_i32_0 = arith.constant 0 : i32
    %c0_i32_1 = arith.constant 0 : i32
    return %arg0, %c0_i32, %c0_i32_0 : i32, i32, i32
  }
  func.func @transform_1(%arg0: i32) -> (i32, i32) {
    %c0_i32 = arith.constant 0 : i32
    %c0_i32_0 = arith.constant 0 : i32
    %c0_i32_1 = arith.constant 0 : i32
    return %c0_i32, %c0_i32_0 : i32, i32
  }
  func.func @transform_2(%arg0: i32) -> (i32, i32) {
    %c0_i32 = arith.constant 0 : i32
    %c0_i32_0 = arith.constant 0 : i32
    return %arg0, %c0_i32 : i32, i32
  }
}

</mosaic_0001>

<llo_original>
// kernel: tpu_custom_call.1
$region0: #{tpu_custom_call.1}
  #allocation0 [shape = 'u32[]', space=smem, size = 0x4, offset = 0x4, fixed_abs, tag = 'smem constant byte address 0x4 - core index']
  #allocation1 [shape = 'u32[144,128]{1,0:T(1,128)}', space=vmem, size = 0x12000, scoped, tag = 'internal scratch']
  %s0 = inlined_call_operand.vmem [shape: f32[32,128,16], index: 0, kind: input, shape index: {}]
  %s1 = inlined_call_operand.vmem [shape: bf16[128,256], index: 1, kind: input, shape index: {}]
  %s2 = inlined_call_operand.hbm [shape: f32[32,256], index: 2, kind: output, shape index: {}]
  %s3 = sld [smem:[#allocation0]]
  $region41: #{tpu_custom_call.1} parent=0
    _
  %s5 = ssub.s32 1, %s3
  %s6 = scalar_select 0, %s5, %s3
  $region1: #{tpu_custom_call.1} parent=0
    #allocation2 [shape = 'u8[16384]{0}', space=vmem, size = 0x4000, scoped, tag = 'output window, operand 0']
    #allocation3 [shape = 's32[2]{0}', space=sflag, size = 0x8, scoped, tag = 'scoped memory for tpu_custom_call.1']
    %7 = vsyncpa [#allocation3], 0
    %s8 = scalar_lea.sflag [#allocation3], 1
    %9 = vsyncpa %s8, 0
    loop: start=0, step=1, limit=6
    $region2: #{tpu_custom_call.1} parent=1 // loop_pre_header
      _
    $region3: #{tpu_custom_call.1} parent=1 // loop_header
      %s11 = sphi 0, %s15
      %p12 = scmp.ge.s32.totalorder %s11, 6
      %s21 = sphi 0, %s23
      %s24 = sphi 0, %s21
      %s25 = sphi 0, %s24
      %s41 = sphi 0, %s25
      %s45 = sphi 0, %s45
      %s47 = sphi 0, %s45
      %s48 = sphi 0, %s47
      %s62 = sphi 0, %s48
      %s68 = sphi 0, %s70
      %s71 = sphi 0, %s68
      %s72 = sphi 0, %s71
      %s88 = sphi 0, %s72
    $region4: #{tpu_custom_call.1} parent=1 // loop_header_branch
      %14 = sbr.rel (%p12) target = $region8
    $region5: #{tpu_custom_call.1} parent=1 // loop_body
      %s16 = ssub.s32 %s11, 1
      %s17 = ssub.s32 %s11, 2
      %s18 = sadd.s32 %s11, 1
      %s19 = ssub.s32 %s11, %s18
      %p20 = scmp.eq.s32.totalorder %s19, 0
      %s22 = sadd.s32 %s21, 1
      %s23 = scalar_select %p20, %s21, %s22
      %p26 = pneg %p20
      %p27 = scmp.eq.s32.totalorder %s11, 3
      %p28 = por %p26, %p27
      %p29 = scmp.ne.s32.totalorder %s21, %s24
      %p30 = scmp.eq.s32.totalorder %s11, 0
      %p31 = por %p29, %p30
      %p32 = scmp.ne.s32.totalorder %s21, %s24
      %p33 = scmp.eq.s32.totalorder %s16, 3
      %p34 = por %p32, %p33
      %p35 = scmp.ne.s32.totalorder %s24, %s25
      %p36 = scmp.eq.s32.totalorder %s16, 0
      %p37 = por %p35, %p36
      %p38 = scmp.ne.s32.totalorder %s24, %s25
      %p39 = scmp.eq.s32.totalorder %s17, 3
      %p40 = por %p38, %p39
      %p42 = scmp.ne.s32.totalorder %s25, %s41
      %p43 = scmp.eq.s32.totalorder %s17, 0
      %p44 = por %p42, %p43
      %s46 = sadd.s32 %s45, 1
      %p49 = scmp.eq.s32.totalorder %s11, 3
      %p50 = scmp.ne.s32.totalorder %s45, %s47
      %p51 = scmp.eq.s32.totalorder %s11, 0
      %p52 = por %p50, %p51
      %p53 = scmp.ne.s32.totalorder %s45, %s47
      %p54 = scmp.eq.s32.totalorder %s16, 3
      %p55 = por %p53, %p54
      %p56 = scmp.ne.s32.totalorder %s47, %s48
      %p57 = scmp.eq.s32.totalorder %s16, 0
      %p58 = por %p56, %p57
      %p59 = scmp.ne.s32.totalorder %s47, %s48
      %p60 = scmp.eq.s32.totalorder %s17, 3
      %p61 = por %p59, %p60
      %p63 = scmp.ne.s32.totalorder %s48, %s62
      %p64 = scmp.eq.s32.totalorder %s17, 0
      %p65 = por %p63, %p64
      %s66 = ssub.s32 %s11, %s18
      %p67 = scmp.eq.s32.totalorder %s66, 0
      %s69 = sadd.s32 %s68, 1
      %s70 = scalar_select %p67, %s68, %s69
      %p73 = pneg %p67
      %p74 = scmp.eq.s32.totalorder %s11, 3
      %p75 = por %p73, %p74
      %p76 = scmp.ne.s32.totalorder %s68, %s71
      %p77 = scmp.eq.s32.totalorder %s11, 0
      %p78 = por %p76, %p77
      %p79 = scmp.ne.s32.totalorder %s68, %s71
      %p80 = scmp.eq.s32.totalorder %s16, 3
      %p81 = por %p79, %p80
      %p82 = scmp.ne.s32.totalorder %s71, %s72
      %p83 = scmp.eq.s32.totalorder %s16, 0
      %p84 = por %p82, %p83
      %p85 = scmp.ne.s32.totalorder %s71, %s72
      %p86 = scmp.eq.s32.totalorder %s17, 3
      %p87 = por %p85, %p86
      %p89 = scmp.ne.s32.totalorder %s72, %s88
      %p90 = scmp.eq.s32.totalorder %s17, 0
      %p91 = por %p89, %p90
      %p92 = scmp.le.s32.totalorder 1, %s11
      %p93 = scmp.lt.s32.totalorder %s11, 5
      %p94 = pnand %p92, %p93
      %p95 = pneg %p94
      // Predicated region
      $region9: #{tpu_custom_call.1} parent=5 // pred_check
        _
      $region10: #{tpu_custom_call.1} parent=5 // pred_check_branch
        %97 = sbr.rel (%p94) target = $region12
      $region11: #{tpu_custom_call.1} parent=5 // pred_region
        %s98 = ssub.s32 %s11, 1
        // Predicated region
        $region13: #{tpu_custom_call.1} parent=11 // pred_check
          %p99 = pneg %p58
        $region14: #{tpu_custom_call.1} parent=11 // pred_check_branch
          %101 = sbr.rel (%p99) target = $region16
        $region15: #{tpu_custom_call.1} parent=11 // pred_region
          _
        $region16: #{tpu_custom_call.1} parent=11 // pred_fallthru
          _
      $region12: #{tpu_custom_call.1} parent=5 // pred_fallthru
        _
      %p102 = scmp.lt.s32.totalorder %s11, 4
      // Predicated region
      $region17: #{tpu_custom_call.1} parent=5 // pred_check
        %p103 = pneg %p102
      $region18: #{tpu_custom_call.1} parent=5 // pred_check_branch
        %105 = sbr.rel (%p103) target = $region20
      $region19: #{tpu_custom_call.1} parent=5 // pred_region
        // Predicated region
        $region21: #{tpu_custom_call.1} parent=19 // pred_check
          %p106 = pneg %p31
        $region22: #{tpu_custom_call.1} parent=19 // pred_check_branch
          %108 = sbr.rel (%p106) target = $region24
        $region23: #{tpu_custom_call.1} parent=19 // pred_region
          %s109 = smul.u32 8, %s11
          %p110 = scmp.lt.s32.totalorder %s109, 31
          %s111 = scalar_select %p110, %s109, 31
          %s112 = smul.addr %s111, 16
          %s113 = smul.addr %s112, 8
          %s114 = scalar_lea.vmem %s0, %s113
          %s115 = smul.u32 8, %s11
        $region24: #{tpu_custom_call.1} parent=19 // pred_fallthru
          _
      $region20: #{tpu_custom_call.1} parent=5 // pred_fallthru
        _
      %p116 = scmp.le.s32.totalorder 1, %s11
      %p117 = scmp.lt.s32.totalorder %s11, 5
      %p118 = pnand %p116, %p117
      %p119 = pneg %p118
      // Predicated region
      $region25: #{tpu_custom_call.1} parent=5 // pred_check
        _
      $region26: #{tpu_custom_call.1} parent=5 // pred_check_branch
        %121 = sbr.rel (%p118) target = $region28
      $region27: #{tpu_custom_call.1} parent=5 // pred_region
        %s122 = ssub.s32 %s11, 1
        %s123 = smul.u32 8, %s16
        %p124 = scmp.lt.s32.totalorder %s123, 31
        %s125 = scalar_select %p124, %s123, 31
        %s126 = smul.addr %s125, 16
        %s127 = smul.addr %s126, 8
        %s128 = scalar_lea.vmem %s0, %s127
        %p129 = pneg %p37
        %p130 = pneg %p34
        %p131 = pneg %p58
        %p132 = pneg %p55
        %p133 = pneg %p84
        %p134 = pneg %p81
        %s135 = sand.u32 %s71, 1
        %s136 = scalar_lea.sflag [#allocation3], %s135
        %s137 = sand.u32 %s71, 1
        %s138 = smul.addr %s137, 16
        %s139 = scalar_lea.vmem [#allocation2], %s138
        %s140 = smul.u32 8, %s16
        %p141 = scmp.lt.s32.totalorder %s140, 31
        %s142 = scalar_select %p141, %s140, 31
        %s143 = smul.addr %s142, 16
        %s144 = smul.addr %s143, 8
        %s145 = scalar_lea.vmem %s0, %s144
        %s146 = smul.u32 8, %s16
        %v148 = vld [vmem:[%s145] sm:$0xff]
        %v149 = vld [vmem:[%s145 + $0x8] sm:$0xff]
        %v150 = vld [vmem:[%s145 + $0x10] sm:$0xff]
        %v151 = vld [vmem:[%s145 + $0x18] sm:$0xff]
        %v152 = vld [vmem:[%s145 + $0x20] sm:$0xff]
        %v153 = vld [vmem:[%s145 + $0x28] sm:$0xff]
        %v154 = vld [vmem:[%s145 + $0x30] sm:$0xff]
        %v155 = vld [vmem:[%s145 + $0x38] sm:$0xff]
        %v156 = vld [vmem:[%s145 + $0x40] sm:$0xff]
        %v157 = vld [vmem:[%s145 + $0x48] sm:$0xff]
        %v158 = vld [vmem:[%s145 + $0x50] sm:$0xff]
        %v159 = vld [vmem:[%s145 + $0x58] sm:$0xff]
        %v160 = vld [vmem:[%s145 + $0x60] sm:$0xff]
        %v161 = vld [vmem:[%s145 + $0x68] sm:$0xff]
        %v162 = vld [vmem:[%s145 + $0x70] sm:$0xff]
        %v163 = vld [vmem:[%s145 + $0x78] sm:$0xff]
        %v164 = vld [vmem:[%s145 + $0x80] sm:$0xff]
        %v165 = vld [vmem:[%s145 + $0x88] sm:$0xff]
        %v166 = vld [vmem:[%s145 + $0x90] sm:$0xff]
        %v167 = vld [vmem:[%s145 + $0x98] sm:$0xff]
        %v168 = vld [vmem:[%s145 + $0xa0] sm:$0xff]
        %v169 = vld [vmem:[%s145 + $0xa8] sm:$0xff]
        %v170 = vld [vmem:[%s145 + $0xb0] sm:$0xff]
        %v171 = vld [vmem:[%s145 + $0xb8] sm:$0xff]
        %v172 = vld [vmem:[%s145 + $0xc0] sm:$0xff]
        %v173 = vld [vmem:[%s145 + $0xc8] sm:$0xff]
        %v174 = vld [vmem:[%s145 + $0xd0] sm:$0xff]
        %v175 = vld [vmem:[%s145 + $0xd8] sm:$0xff]
        %v176 = vld [vmem:[%s145 + $0xe0] sm:$0xff]
        %v177 = vld [vmem:[%s145 + $0xe8] sm:$0xff]
        %v178 = vld [vmem:[%s145 + $0xf0] sm:$0xff]
        %v179 = vld [vmem:[%s145 + $0xf8] sm:$0xff]
        %v180 = vld [vmem:[%s145 + $0x100] sm:$0xff]
        %v181 = vld [vmem:[%s145 + $0x108] sm:$0xff]
        %v182 = vld [vmem:[%s145 + $0x110] sm:$0xff]
        %v183 = vld [vmem:[%s145 + $0x118] sm:$0xff]
        %v184 = vld [vmem:[%s145 + $0x120] sm:$0xff]
        %v185 = vld [vmem:[%s145 + $0x128] sm:$0xff]
        %v186 = vld [vmem:[%s145 + $0x130] sm:$0xff]
        %v187 = vld [vmem:[%s145 + $0x138] sm:$0xff]
        %v188 = vld [vmem:[%s145 + $0x140] sm:$0xff]
        %v189 = vld [vmem:[%s145 + $0x148] sm:$0xff]
        %v190 = vld [vmem:[%s145 + $0x150] sm:$0xff]
        %v191 = vld [vmem:[%s145 + $0x158] sm:$0xff]
        %v192 = vld [vmem:[%s145 + $0x160] sm:$0xff]
        %v193 = vld [vmem:[%s145 + $0x168] sm:$0xff]
        %v194 = vld [vmem:[%s145 + $0x170] sm:$0xff]
        %v195 = vld [vmem:[%s145 + $0x178] sm:$0xff]
        %v196 = vld [vmem:[%s145 + $0x180] sm:$0xff]
        %v197 = vld [vmem:[%s145 + $0x188] sm:$0xff]
        %v198 = vld [vmem:[%s145 + $0x190] sm:$0xff]
        %v199 = vld [vmem:[%s145 + $0x198] sm:$0xff]
        %v200 = vld [vmem:[%s145 + $0x1a0] sm:$0xff]
        %v201 = vld [vmem:[%s145 + $0x1a8] sm:$0xff]
        %v202 = vld [vmem:[%s145 + $0x1b0] sm:$0xff]
        %v203 = vld [vmem:[%s145 + $0x1b8] sm:$0xff]
        %v204 = vld [vmem:[%s145 + $0x1c0] sm:$0xff]
        %v205 = vld [vmem:[%s145 + $0x1c8] sm:$0xff]
        %v206 = vld [vmem:[%s145 + $0x1d0] sm:$0xff]
        %v207 = vld [vmem:[%s145 + $0x1d8] sm:$0xff]
        %v208 = vld [vmem:[%s145 + $0x1e0] sm:$0xff]
        %v209 = vld [vmem:[%s145 + $0x1e8] sm:$0xff]
        %v210 = vld [vmem:[%s145 + $0x1f0] sm:$0xff]
        %v211 = vld [vmem:[%s145 + $0x1f8] sm:$0xff]
        %v212 = vld [vmem:[%s145 + $0x200] sm:$0xff]
        %v213 = vld [vmem:[%s145 + $0x208] sm:$0xff]
        %v214 = vld [vmem:[%s145 + $0x210] sm:$0xff]
        %v215 = vld [vmem:[%s145 + $0x218] sm:$0xff]
        %v216 = vld [vmem:[%s145 + $0x220] sm:$0xff]
        %v217 = vld [vmem:[%s145 + $0x228] sm:$0xff]
        %v218 = vld [vmem:[%s145 + $0x230] sm:$0xff]
        %v219 = vld [vmem:[%s145 + $0x238] sm:$0xff]
        %v220 = vld [vmem:[%s145 + $0x240] sm:$0xff]
        %v221 = vld [vmem:[%s145 + $0x248] sm:$0xff]
        %v222 = vld [vmem:[%s145 + $0x250] sm:$0xff]
        %v223 = vld [vmem:[%s145 + $0x258] sm:$0xff]
        %v224 = vld [vmem:[%s145 + $0x260] sm:$0xff]
        %v225 = vld [vmem:[%s145 + $0x268] sm:$0xff]
        %v226 = vld [vmem:[%s145 + $0x270] sm:$0xff]
        %v227 = vld [vmem:[%s145 + $0x278] sm:$0xff]
        %v228 = vld [vmem:[%s145 + $0x280] sm:$0xff]
        %v229 = vld [vmem:[%s145 + $0x288] sm:$0xff]
        %v230 = vld [vmem:[%s145 + $0x290] sm:$0xff]
        %v231 = vld [vmem:[%s145 + $0x298] sm:$0xff]
        %v232 = vld [vmem:[%s145 + $0x2a0] sm:$0xff]
        %v233 = vld [vmem:[%s145 + $0x2a8] sm:$0xff]
        %v234 = vld [vmem:[%s145 + $0x2b0] sm:$0xff]
        %v235 = vld [vmem:[%s145 + $0x2b8] sm:$0xff]
        %v236 = vld [vmem:[%s145 + $0x2c0] sm:$0xff]
        %v237 = vld [vmem:[%s145 + $0x2c8] sm:$0xff]
        %v238 = vld [vmem:[%s145 + $0x2d0] sm:$0xff]
        %v239 = vld [vmem:[%s145 + $0x2d8] sm:$0xff]
        %v240 = vld [vmem:[%s145 + $0x2e0] sm:$0xff]
        %v241 = vld [vmem:[%s145 + $0x2e8] sm:$0xff]
        %v242 = vld [vmem:[%s145 + $0x2f0] sm:$0xff]
        %v243 = vld [vmem:[%s145 + $0x2f8] sm:$0xff]
        %v244 = vld [vmem:[%s145 + $0x300] sm:$0xff]
        %v245 = vld [vmem:[%s145 + $0x308] sm:$0xff]
        %v246 = vld [vmem:[%s145 + $0x310] sm:$0xff]
        %v247 = vld [vmem:[%s145 + $0x318] sm:$0xff]
        %v248 = vld [vmem:[%s145 + $0x320] sm:$0xff]
        %v249 = vld [vmem:[%s145 + $0x328] sm:$0xff]
        %v250 = vld [vmem:[%s145 + $0x330] sm:$0xff]
        %v251 = vld [vmem:[%s145 + $0x338] sm:$0xff]
        %v252 = vld [vmem:[%s145 + $0x340] sm:$0xff]
        %v253 = vld [vmem:[%s145 + $0x348] sm:$0xff]
        %v254 = vld [vmem:[%s145 + $0x350] sm:$0xff]
        %v255 = vld [vmem:[%s145 + $0x358] sm:$0xff]
        %v256 = vld [vmem:[%s145 + $0x360] sm:$0xff]
        %v257 = vld [vmem:[%s145 + $0x368] sm:$0xff]
        %v258 = vld [vmem:[%s145 + $0x370] sm:$0xff]
        %v259 = vld [vmem:[%s145 + $0x378] sm:$0xff]
        %v260 = vld [vmem:[%s145 + $0x380] sm:$0xff]
        %v261 = vld [vmem:[%s145 + $0x388] sm:$0xff]
        %v262 = vld [vmem:[%s145 + $0x390] sm:$0xff]
        %v263 = vld [vmem:[%s145 + $0x398] sm:$0xff]
        %v264 = vld [vmem:[%s145 + $0x3a0] sm:$0xff]
        %v265 = vld [vmem:[%s145 + $0x3a8] sm:$0xff]
        %v266 = vld [vmem:[%s145 + $0x3b0] sm:$0xff]
        %v267 = vld [vmem:[%s145 + $0x3b8] sm:$0xff]
        %v268 = vld [vmem:[%s145 + $0x3c0] sm:$0xff]
        %v269 = vld [vmem:[%s145 + $0x3c8] sm:$0xff]
        %v270 = vld [vmem:[%s145 + $0x3d0] sm:$0xff]
        %v271 = vld [vmem:[%s145 + $0x3d8] sm:$0xff]
        %v272 = vld [vmem:[%s145 + $0x3e0] sm:$0xff]
        %v273 = vld [vmem:[%s145 + $0x3e8] sm:$0xff]
        %v274 = vld [vmem:[%s145 + $0x3f0] sm:$0xff]
        %v275 = vld [vmem:[%s145 + $0x3f8] sm:$0xff]
        %vm276 = vcmask 130048
        %v277 = vsel %vm276, %v148, 0.0
        %278 = vadd.xlane.f32.xlu0 %v277
        %v279 = vpop.xlane.xlu0 %278
        %v280 = vsel %vm276, %v149, 0.0
        %281 = vadd.xlane.f32.xlu0 %v280
        %v282 = vpop.xlane.xlu0 %281
        %v283 = vsel %vm276, %v150, 0.0
        %284 = vadd.xlane.f32.xlu0 %v283
        %v285 = vpop.xlane.xlu0 %284
        %v286 = vsel %vm276, %v151, 0.0
        %287 = vadd.xlane.f32.xlu0 %v286
        %v288 = vpop.xlane.xlu0 %287
        %v289 = vsel %vm276, %v152, 0.0
        %290 = vadd.xlane.f32.xlu0 %v289
        %v291 = vpop.xlane.xlu0 %290
        %v292 = vsel %vm276, %v153, 0.0
        %293 = vadd.xlane.f32.xlu0 %v292
        %v294 = vpop.xlane.xlu0 %293
        %v295 = vsel %vm276, %v154, 0.0
        %296 = vadd.xlane.f32.xlu0 %v295
        %v297 = vpop.xlane.xlu0 %296
        %v298 = vsel %vm276, %v155, 0.0
        %299 = vadd.xlane.f32.xlu0 %v298
        %v300 = vpop.xlane.xlu0 %299
        %v301 = vsel %vm276, %v156, 0.0
        %302 = vadd.xlane.f32.xlu0 %v301
        %v303 = vpop.xlane.xlu0 %302
        %v304 = vsel %vm276, %v157, 0.0
        %305 = vadd.xlane.f32.xlu0 %v304
        %v306 = vpop.xlane.xlu0 %305
        %v307 = vsel %vm276, %v158, 0.0
        %308 = vadd.xlane.f32.xlu0 %v307
        %v309 = vpop.xlane.xlu0 %308
        %v310 = vsel %vm276, %v159, 0.0
        %311 = vadd.xlane.f32.xlu0 %v310
        %v312 = vpop.xlane.xlu0 %311
        %v313 = vsel %vm276, %v160, 0.0
        %314 = vadd.xlane.f32.xlu0 %v313
        %v315 = vpop.xlane.xlu0 %314
        %v316 = vsel %vm276, %v161, 0.0
        %317 = vadd.xlane.f32.xlu0 %v316
        %v318 = vpop.xlane.xlu0 %317
        %v319 = vsel %vm276, %v162, 0.0
        %320 = vadd.xlane.f32.xlu0 %v319
        %v321 = vpop.xlane.xlu0 %320
        %v322 = vsel %vm276, %v163, 0.0
        %323 = vadd.xlane.f32.xlu0 %v322
        %v324 = vpop.xlane.xlu0 %323
        %v325 = vsel %vm276, %v164, 0.0
        %326 = vadd.xlane.f32.xlu0 %v325
        %v327 = vpop.xlane.xlu0 %326
        %v328 = vsel %vm276, %v165, 0.0
        %329 = vadd.xlane.f32.xlu0 %v328
        %v330 = vpop.xlane.xlu0 %329
        %v331 = vsel %vm276, %v166, 0.0
        %332 = vadd.xlane.f32.xlu0 %v331
        %v333 = vpop.xlane.xlu0 %332
        %v334 = vsel %vm276, %v167, 0.0
        %335 = vadd.xlane.f32.xlu0 %v334
        %v336 = vpop.xlane.xlu0 %335
        %v337 = vsel %vm276, %v168, 0.0
        %338 = vadd.xlane.f32.xlu0 %v337
        %v339 = vpop.xlane.xlu0 %338
        %v340 = vsel %vm276, %v169, 0.0
        %341 = vadd.xlane.f32.xlu0 %v340
        %v342 = vpop.xlane.xlu0 %341
        %v343 = vsel %vm276, %v170, 0.0
        %344 = vadd.xlane.f32.xlu0 %v343
        %v345 = vpop.xlane.xlu0 %344
        %v346 = vsel %vm276, %v171, 0.0
        %347 = vadd.xlane.f32.xlu0 %v346
        %v348 = vpop.xlane.xlu0 %347
        %v349 = vsel %vm276, %v172, 0.0
        %350 = vadd.xlane.f32.xlu0 %v349
        %v351 = vpop.xlane.xlu0 %350
        %v352 = vsel %vm276, %v173, 0.0
        %353 = vadd.xlane.f32.xlu0 %v352
        %v354 = vpop.xlane.xlu0 %353
        %v355 = vsel %vm276, %v174, 0.0
        %356 = vadd.xlane.f32.xlu0 %v355
        %v357 = vpop.xlane.xlu0 %356
        %v358 = vsel %vm276, %v175, 0.0
        %359 = vadd.xlane.f32.xlu0 %v358
        %v360 = vpop.xlane.xlu0 %359
        %v361 = vsel %vm276, %v176, 0.0
        %362 = vadd.xlane.f32.xlu0 %v361
        %v363 = vpop.xlane.xlu0 %362
        %v364 = vsel %vm276, %v177, 0.0
        %365 = vadd.xlane.f32.xlu0 %v364
        %v366 = vpop.xlane.xlu0 %365
        %v367 = vsel %vm276, %v178, 0.0
        %368 = vadd.xlane.f32.xlu0 %v367
        %v369 = vpop.xlane.xlu0 %368
        %v370 = vsel %vm276, %v179, 0.0
        %371 = vadd.xlane.f32.xlu0 %v370
        %v372 = vpop.xlane.xlu0 %371
        %v373 = vsel %vm276, %v180, 0.0
        %374 = vadd.xlane.f32.xlu0 %v373
        %v375 = vpop.xlane.xlu0 %374
        %v376 = vsel %vm276, %v181, 0.0
        %377 = vadd.xlane.f32.xlu0 %v376
        %v378 = vpop.xlane.xlu0 %377
        %v379 = vsel %vm276, %v182, 0.0
        %380 = vadd.xlane.f32.xlu0 %v379
        %v381 = vpop.xlane.xlu0 %380
        %v382 = vsel %vm276, %v183, 0.0
        %383 = vadd.xlane.f32.xlu0 %v382
        %v384 = vpop.xlane.xlu0 %383
        %v385 = vsel %vm276, %v184, 0.0
        %386 = vadd.xlane.f32.xlu0 %v385
        %v387 = vpop.xlane.xlu0 %386
        %v388 = vsel %vm276, %v185, 0.0
        %389 = vadd.xlane.f32.xlu0 %v388
        %v390 = vpop.xlane.xlu0 %389
        %v391 = vsel %vm276, %v186, 0.0
        %392 = vadd.xlane.f32.xlu0 %v391
        %v393 = vpop.xlane.xlu0 %392
        %v394 = vsel %vm276, %v187, 0.0
        %395 = vadd.xlane.f32.xlu0 %v394
        %v396 = vpop.xlane.xlu0 %395
        %v397 = vsel %vm276, %v188, 0.0
        %398 = vadd.xlane.f32.xlu0 %v397
        %v399 = vpop.xlane.xlu0 %398
        %v400 = vsel %vm276, %v189, 0.0
        %401 = vadd.xlane.f32.xlu0 %v400
        %v402 = vpop.xlane.xlu0 %401
        %v403 = vsel %vm276, %v190, 0.0
        %404 = vadd.xlane.f32.xlu0 %v403
        %v405 = vpop.xlane.xlu0 %404
        %v406 = vsel %vm276, %v191, 0.0
        %407 = vadd.xlane.f32.xlu0 %v406
        %v408 = vpop.xlane.xlu0 %407
        %v409 = vsel %vm276, %v192, 0.0
        %410 = vadd.xlane.f32.xlu0 %v409
        %v411 = vpop.xlane.xlu0 %410
        %v412 = vsel %vm276, %v193, 0.0
        %413 = vadd.xlane.f32.xlu0 %v412
        %v414 = vpop.xlane.xlu0 %413
        %v415 = vsel %vm276, %v194, 0.0
        %416 = vadd.xlane.f32.xlu0 %v415
        %v417 = vpop.xlane.xlu0 %416
        %v418 = vsel %vm276, %v195, 0.0
        %419 = vadd.xlane.f32.xlu0 %v418
        %v420 = vpop.xlane.xlu0 %419
        %v421 = vsel %vm276, %v196, 0.0
        %422 = vadd.xlane.f32.xlu0 %v421
        %v423 = vpop.xlane.xlu0 %422
        %v424 = vsel %vm276, %v197, 0.0
        %425 = vadd.xlane.f32.xlu0 %v424
        %v426 = vpop.xlane.xlu0 %425
        %v427 = vsel %vm276, %v198, 0.0
        %428 = vadd.xlane.f32.xlu0 %v427
        %v429 = vpop.xlane.xlu0 %428
        %v430 = vsel %vm276, %v199, 0.0
        %431 = vadd.xlane.f32.xlu0 %v430
        %v432 = vpop.xlane.xlu0 %431
        %v433 = vsel %vm276, %v200, 0.0
        %434 = vadd.xlane.f32.xlu0 %v433
        %v435 = vpop.xlane.xlu0 %434
        %v436 = vsel %vm276, %v201, 0.0
        %437 = vadd.xlane.f32.xlu0 %v436
        %v438 = vpop.xlane.xlu0 %437
        %v439 = vsel %vm276, %v202, 0.0
        %440 = vadd.xlane.f32.xlu0 %v439
        %v441 = vpop.xlane.xlu0 %440
        %v442 = vsel %vm276, %v203, 0.0
        %443 = vadd.xlane.f32.xlu0 %v442
        %v444 = vpop.xlane.xlu0 %443
        %v445 = vsel %vm276, %v204, 0.0
        %446 = vadd.xlane.f32.xlu0 %v445
        %v447 = vpop.xlane.xlu0 %446
        %v448 = vsel %vm276, %v205, 0.0
        %449 = vadd.xlane.f32.xlu0 %v448
        %v450 = vpop.xlane.xlu0 %449
        %v451 = vsel %vm276, %v206, 0.0
        %452 = vadd.xlane.f32.xlu0 %v451
        %v453 = vpop.xlane.xlu0 %452
        %v454 = vsel %vm276, %v207, 0.0
        %455 = vadd.xlane.f32.xlu0 %v454
        %v456 = vpop.xlane.xlu0 %455
        %v457 = vsel %vm276, %v208, 0.0
        %458 = vadd.xlane.f32.xlu0 %v457
        %v459 = vpop.xlane.xlu0 %458
        %v460 = vsel %vm276, %v209, 0.0
        %461 = vadd.xlane.f32.xlu0 %v460
        %v462 = vpop.xlane.xlu0 %461
        %v463 = vsel %vm276, %v210, 0.0
        %464 = vadd.xlane.f32.xlu0 %v463
        %v465 = vpop.xlane.xlu0 %464
        %v466 = vsel %vm276, %v211, 0.0
        %467 = vadd.xlane.f32.xlu0 %v466
        %v468 = vpop.xlane.xlu0 %467
        %v469 = vsel %vm276, %v212, 0.0
        %470 = vadd.xlane.f32.xlu0 %v469
        %v471 = vpop.xlane.xlu0 %470
        %v472 = vsel %vm276, %v213, 0.0
        %473 = vadd.xlane.f32.xlu0 %v472
        %v474 = vpop.xlane.xlu0 %473
        %v475 = vsel %vm276, %v214, 0.0
        %476 = vadd.xlane.f32.xlu0 %v475
        %v477 = vpop.xlane.xlu0 %476
        %v478 = vsel %vm276, %v215, 0.0
        %479 = vadd.xlane.f32.xlu0 %v478
        %v480 = vpop.xlane.xlu0 %479
        %v481 = vsel %vm276, %v216, 0.0
        %482 = vadd.xlane.f32.xlu0 %v481
        %v483 = vpop.xlane.xlu0 %482
        %v484 = vsel %vm276, %v217, 0.0
        %485 = vadd.xlane.f32.xlu0 %v484
        %v486 = vpop.xlane.xlu0 %485
        %v487 = vsel %vm276, %v218, 0.0
        %488 = vadd.xlane.f32.xlu0 %v487
        %v489 = vpop.xlane.xlu0 %488
        %v490 = vsel %vm276, %v219, 0.0
        %491 = vadd.xlane.f32.xlu0 %v490
        %v492 = vpop.xlane.xlu0 %491
        %v493 = vsel %vm276, %v220, 0.0
        %494 = vadd.xlane.f32.xlu0 %v493
        %v495 = vpop.xlane.xlu0 %494
        %v496 = vsel %vm276, %v221, 0.0
        %497 = vadd.xlane.f32.xlu0 %v496
        %v498 = vpop.xlane.xlu0 %497
        %v499 = vsel %vm276, %v222, 0.0
        %500 = vadd.xlane.f32.xlu0 %v499
        %v501 = vpop.xlane.xlu0 %500
        %v502 = vsel %vm276, %v223, 0.0
        %503 = vadd.xlane.f32.xlu0 %v502
        %v504 = vpop.xlane.xlu0 %503
        %v505 = vsel %vm276, %v224, 0.0
        %506 = vadd.xlane.f32.xlu0 %v505
        %v507 = vpop.xlane.xlu0 %506
        %v508 = vsel %vm276, %v225, 0.0
        %509 = vadd.xlane.f32.xlu0 %v508
        %v510 = vpop.xlane.xlu0 %509
        %v511 = vsel %vm276, %v226, 0.0
        %512 = vadd.xlane.f32.xlu0 %v511
        %v513 = vpop.xlane.xlu0 %512
        %v514 = vsel %vm276, %v227, 0.0
        %515 = vadd.xlane.f32.xlu0 %v514
        %v516 = vpop.xlane.xlu0 %515
        %v517 = vsel %vm276, %v228, 0.0
        %518 = vadd.xlane.f32.xlu0 %v517
        %v519 = vpop.xlane.xlu0 %518
        %v520 = vsel %vm276, %v229, 0.0
        %521 = vadd.xlane.f32.xlu0 %v520
        %v522 = vpop.xlane.xlu0 %521
        %v523 = vsel %vm276, %v230, 0.0
        %524 = vadd.xlane.f32.xlu0 %v523
        %v525 = vpop.xlane.xlu0 %524
        %v526 = vsel %vm276, %v231, 0.0
        %527 = vadd.xlane.f32.xlu0 %v526
        %v528 = vpop.xlane.xlu0 %527
        %v529 = vsel %vm276, %v232, 0.0
        %530 = vadd.xlane.f32.xlu0 %v529
        %v531 = vpop.xlane.xlu0 %530
        %v532 = vsel %vm276, %v233, 0.0
        %533 = vadd.xlane.f32.xlu0 %v532
        %v534 = vpop.xlane.xlu0 %533
        %v535 = vsel %vm276, %v234, 0.0
        %536 = vadd.xlane.f32.xlu0 %v535
        %v537 = vpop.xlane.xlu0 %536
        %v538 = vsel %vm276, %v235, 0.0
        %539 = vadd.xlane.f32.xlu0 %v538
        %v540 = vpop.xlane.xlu0 %539
        %v541 = vsel %vm276, %v236, 0.0
        %542 = vadd.xlane.f32.xlu0 %v541
        %v543 = vpop.xlane.xlu0 %542
        %v544 = vsel %vm276, %v237, 0.0
        %545 = vadd.xlane.f32.xlu0 %v544
        %v546 = vpop.xlane.xlu0 %545
        %v547 = vsel %vm276, %v238, 0.0
        %548 = vadd.xlane.f32.xlu0 %v547
        %v549 = vpop.xlane.xlu0 %548
        %v550 = vsel %vm276, %v239, 0.0
        %551 = vadd.xlane.f32.xlu0 %v550
        %v552 = vpop.xlane.xlu0 %551
        %v553 = vsel %vm276, %v240, 0.0
        %554 = vadd.xlane.f32.xlu0 %v553
        %v555 = vpop.xlane.xlu0 %554
        %v556 = vsel %vm276, %v241, 0.0
        %557 = vadd.xlane.f32.xlu0 %v556
        %v558 = vpop.xlane.xlu0 %557
        %v559 = vsel %vm276, %v242, 0.0
        %560 = vadd.xlane.f32.xlu0 %v559
        %v561 = vpop.xlane.xlu0 %560
        %v562 = vsel %vm276, %v243, 0.0
        %563 = vadd.xlane.f32.xlu0 %v562
        %v564 = vpop.xlane.xlu0 %563
        %v565 = vsel %vm276, %v244, 0.0
        %566 = vadd.xlane.f32.xlu0 %v565
        %v567 = vpop.xlane.xlu0 %566
        %v568 = vsel %vm276, %v245, 0.0
        %569 = vadd.xlane.f32.xlu0 %v568
        %v570 = vpop.xlane.xlu0 %569
        %v571 = vsel %vm276, %v246, 0.0
        %572 = vadd.xlane.f32.xlu0 %v571
        %v573 = vpop.xlane.xlu0 %572
        %v574 = vsel %vm276, %v247, 0.0
        %575 = vadd.xlane.f32.xlu0 %v574
        %v576 = vpop.xlane.xlu0 %575
        %v577 = vsel %vm276, %v248, 0.0
        %578 = vadd.xlane.f32.xlu0 %v577
        %v579 = vpop.xlane.xlu0 %578
        %v580 = vsel %vm276, %v249, 0.0
        %581 = vadd.xlane.f32.xlu0 %v580
        %v582 = vpop.xlane.xlu0 %581
        %v583 = vsel %vm276, %v250, 0.0
        %584 = vadd.xlane.f32.xlu0 %v583
        %v585 = vpop.xlane.xlu0 %584
        %v586 = vsel %vm276, %v251, 0.0
        %587 = vadd.xlane.f32.xlu0 %v586
        %v588 = vpop.xlane.xlu0 %587
        %v589 = vsel %vm276, %v252, 0.0
        %590 = vadd.xlane.f32.xlu0 %v589
        %v591 = vpop.xlane.xlu0 %590
        %v592 = vsel %vm276, %v253, 0.0
        %593 = vadd.xlane.f32.xlu0 %v592
        %v594 = vpop.xlane.xlu0 %593
        %v595 = vsel %vm276, %v254, 0.0
        %596 = vadd.xlane.f32.xlu0 %v595
        %v597 = vpop.xlane.xlu0 %596
        %v598 = vsel %vm276, %v255, 0.0
        %599 = vadd.xlane.f32.xlu0 %v598
        %v600 = vpop.xlane.xlu0 %599
        %v601 = vsel %vm276, %v256, 0.0
        %602 = vadd.xlane.f32.xlu0 %v601
        %v603 = vpop.xlane.xlu0 %602
        %v604 = vsel %vm276, %v257, 0.0
        %605 = vadd.xlane.f32.xlu0 %v604
        %v606 = vpop.xlane.xlu0 %605
        %v607 = vsel %vm276, %v258, 0.0
        %608 = vadd.xlane.f32.xlu0 %v607
        %v609 = vpop.xlane.xlu0 %608
        %v610 = vsel %vm276, %v259, 0.0
        %611 = vadd.xlane.f32.xlu0 %v610
        %v612 = vpop.xlane.xlu0 %611
        %v613 = vsel %vm276, %v260, 0.0
        %614 = vadd.xlane.f32.xlu0 %v613
        %v615 = vpop.xlane.xlu0 %614
        %v616 = vsel %vm276, %v261, 0.0
        %617 = vadd.xlane.f32.xlu0 %v616
        %v618 = vpop.xlane.xlu0 %617
        %v619 = vsel %vm276, %v262, 0.0
        %620 = vadd.xlane.f32.xlu0 %v619
        %v621 = vpop.xlane.xlu0 %620
        %v622 = vsel %vm276, %v263, 0.0
        %623 = vadd.xlane.f32.xlu0 %v622
        %v624 = vpop.xlane.xlu0 %623
        %v625 = vsel %vm276, %v264, 0.0
        %626 = vadd.xlane.f32.xlu0 %v625
        %v627 = vpop.xlane.xlu0 %626
        %v628 = vsel %vm276, %v265, 0.0
        %629 = vadd.xlane.f32.xlu0 %v628
        %v630 = vpop.xlane.xlu0 %629
        %v631 = vsel %vm276, %v266, 0.0
        %632 = vadd.xlane.f32.xlu0 %v631
        %v633 = vpop.xlane.xlu0 %632
        %v634 = vsel %vm276, %v267, 0.0
        %635 = vadd.xlane.f32.xlu0 %v634
        %v636 = vpop.xlane.xlu0 %635
        %v637 = vsel %vm276, %v268, 0.0
        %638 = vadd.xlane.f32.xlu0 %v637
        %v639 = vpop.xlane.xlu0 %638
        %v640 = vsel %vm276, %v269, 0.0
        %641 = vadd.xlane.f32.xlu0 %v640
        %v642 = vpop.xlane.xlu0 %641
        %v643 = vsel %vm276, %v270, 0.0
        %644 = vadd.xlane.f32.xlu0 %v643
        %v645 = vpop.xlane.xlu0 %644
        %v646 = vsel %vm276, %v271, 0.0
        %647 = vadd.xlane.f32.xlu0 %v646
        %v648 = vpop.xlane.xlu0 %647
        %v649 = vsel %vm276, %v272, 0.0
        %650 = vadd.xlane.f32.xlu0 %v649
        %v651 = vpop.xlane.xlu0 %650
        %v652 = vsel %vm276, %v273, 0.0
        %653 = vadd.xlane.f32.xlu0 %v652
        %v654 = vpop.xlane.xlu0 %653
        %v655 = vsel %vm276, %v274, 0.0
        %656 = vadd.xlane.f32.xlu0 %v655
        %v657 = vpop.xlane.xlu0 %656
        %v658 = vsel %vm276, %v275, 0.0
        %659 = vadd.xlane.f32.xlu0 %v658
        %v660 = vpop.xlane.xlu0 %659
        %v661 = vpack.c.bf16 %v282, %v279
        %v662 = vpack.c.bf16 %v288, %v285
        %v663 = vpack.c.bf16 %v294, %v291
        %v664 = vpack.c.bf16 %v300, %v297
        %v665 = vpack.c.bf16 %v306, %v303
        %v666 = vpack.c.bf16 %v312, %v309
        %v667 = vpack.c.bf16 %v318, %v315
        %v668 = vpack.c.bf16 %v324, %v321
        %v669 = vpack.c.bf16 %v330, %v327
        %v670 = vpack.c.bf16 %v336, %v333
        %v671 = vpack.c.bf16 %v342, %v339
        %v672 = vpack.c.bf16 %v348, %v345
        %v673 = vpack.c.bf16 %v354, %v351
        %v674 = vpack.c.bf16 %v360, %v357
        %v675 = vpack.c.bf16 %v366, %v363
        %v676 = vpack.c.bf16 %v372, %v369
        %v677 = vpack.c.bf16 %v378, %v375
        %v678 = vpack.c.bf16 %v384, %v381
        %v679 = vpack.c.bf16 %v390, %v387
        %v680 = vpack.c.bf16 %v396, %v393
        %v681 = vpack.c.bf16 %v402, %v399
        %v682 = vpack.c.bf16 %v408, %v405
        %v683 = vpack.c.bf16 %v414, %v411
        %v684 = vpack.c.bf16 %v420, %v417
        %v685 = vpack.c.bf16 %v426, %v423
        %v686 = vpack.c.bf16 %v432, %v429
        %v687 = vpack.c.bf16 %v438, %v435
        %v688 = vpack.c.bf16 %v444, %v441
        %v689 = vpack.c.bf16 %v450, %v447
        %v690 = vpack.c.bf16 %v456, %v453
        %v691 = vpack.c.bf16 %v462, %v459
        %v692 = vpack.c.bf16 %v468, %v465
        %v693 = vpack.c.bf16 %v474, %v471
        %v694 = vpack.c.bf16 %v480, %v477
        %v695 = vpack.c.bf16 %v486, %v483
        %v696 = vpack.c.bf16 %v492, %v489
        %v697 = vpack.c.bf16 %v498, %v495
        %v698 = vpack.c.bf16 %v504, %v501
        %v699 = vpack.c.bf16 %v510, %v507
        %v700 = vpack.c.bf16 %v516, %v513
        %v701 = vpack.c.bf16 %v522, %v519
        %v702 = vpack.c.bf16 %v528, %v525
        %v703 = vpack.c.bf16 %v534, %v531
        %v704 = vpack.c.bf16 %v540, %v537
        %v705 = vpack.c.bf16 %v546, %v543
        %v706 = vpack.c.bf16 %v552, %v549
        %v707 = vpack.c.bf16 %v558, %v555
        %v708 = vpack.c.bf16 %v564, %v561
        %v709 = vpack.c.bf16 %v570, %v567
        %v710 = vpack.c.bf16 %v576, %v573
        %v711 = vpack.c.bf16 %v582, %v579
        %v712 = vpack.c.bf16 %v588, %v585
        %v713 = vpack.c.bf16 %v594, %v591
        %v714 = vpack.c.bf16 %v600, %v597
        %v715 = vpack.c.bf16 %v606, %v603
        %v716 = vpack.c.bf16 %v612, %v609
        %v717 = vpack.c.bf16 %v618, %v615
        %v718 = vpack.c.bf16 %v624, %v621
        %v719 = vpack.c.bf16 %v630, %v627
        %v720 = vpack.c.bf16 %v636, %v633
        %v721 = vpack.c.bf16 %v642, %v639
        %v722 = vpack.c.bf16 %v648, %v645
        %v723 = vpack.c.bf16 %v654, %v651
        %v724 = vpack.c.bf16 %v660, %v657
        %v725 = vld [vmem:[%s1] sm:$0xff]
        %v726 = vld [vmem:[%s1 + $0x8] sm:$0xff]
        %v727 = vld [vmem:[%s1 + $0x10] sm:$0xff]
        %v728 = vld [vmem:[%s1 + $0x18] sm:$0xff]
        %v729 = vld [vmem:[%s1 + $0x20] sm:$0xff]
        %v730 = vld [vmem:[%s1 + $0x28] sm:$0xff]
        %v731 = vld [vmem:[%s1 + $0x30] sm:$0xff]
        %v732 = vld [vmem:[%s1 + $0x38] sm:$0xff]
        %v733 = vld [vmem:[%s1 + $0x40] sm:$0xff]
        %v734 = vld [vmem:[%s1 + $0x48] sm:$0xff]
        %v735 = vld [vmem:[%s1 + $0x50] sm:$0xff]
        %v736 = vld [vmem:[%s1 + $0x58] sm:$0xff]
        %v737 = vld [vmem:[%s1 + $0x60] sm:$0xff]
        %v738 = vld [vmem:[%s1 + $0x68] sm:$0xff]
        %v739 = vld [vmem:[%s1 + $0x70] sm:$0xff]
        %v740 = vld [vmem:[%s1 + $0x78] sm:$0xff]
        %v805 = vunpack.c.l.b16 %v661
        %v806 = vunpack.c.h.b16 %v661
        %v807 = vunpack.c.l.b16 %v662
        %v808 = vunpack.c.h.b16 %v662
        %v809 = vunpack.c.l.b16 %v663
        %v810 = vunpack.c.h.b16 %v663
        %v811 = vunpack.c.l.b16 %v664
        %v812 = vunpack.c.h.b16 %v664
        %v813 = vunpack.c.l.b16 %v665
        %v814 = vunpack.c.h.b16 %v665
        %v815 = vunpack.c.l.b16 %v666
        %v816 = vunpack.c.h.b16 %v666
        %v817 = vunpack.c.l.b16 %v667
        %v818 = vunpack.c.h.b16 %v667
        %v819 = vunpack.c.l.b16 %v668
        %v820 = vunpack.c.h.b16 %v668
        %v821 = vunpack.c.l.b16 %v669
        %v822 = vunpack.c.h.b16 %v669
        %v823 = vunpack.c.l.b16 %v670
        %v824 = vunpack.c.h.b16 %v670
        %v825 = vunpack.c.l.b16 %v671
        %v826 = vunpack.c.h.b16 %v671
        %v827 = vunpack.c.l.b16 %v672
        %v828 = vunpack.c.h.b16 %v672
        %v829 = vunpack.c.l.b16 %v673
        %v830 = vunpack.c.h.b16 %v673
        %v831 = vunpack.c.l.b16 %v674
        %v832 = vunpack.c.h.b16 %v674
        %v833 = vunpack.c.l.b16 %v675
        %v834 = vunpack.c.h.b16 %v675
        %v835 = vunpack.c.l.b16 %v676
        %v836 = vunpack.c.h.b16 %v676
        %v837 = vunpack.c.l.b16 %v677
        %v838 = vunpack.c.h.b16 %v677
        %v839 = vunpack.c.l.b16 %v678
        %v840 = vunpack.c.h.b16 %v678
        %v841 = vunpack.c.l.b16 %v679
        %v842 = vunpack.c.h.b16 %v679
        %v843 = vunpack.c.l.b16 %v680
        %v844 = vunpack.c.h.b16 %v680
        %v845 = vunpack.c.l.b16 %v681
        %v846 = vunpack.c.h.b16 %v681
        %v847 = vunpack.c.l.b16 %v682
        %v848 = vunpack.c.h.b16 %v682
        %v849 = vunpack.c.l.b16 %v683
        %v850 = vunpack.c.h.b16 %v683
        %v851 = vunpack.c.l.b16 %v684
        %v852 = vunpack.c.h.b16 %v684
        %v853 = vunpack.c.l.b16 %v685
        %v854 = vunpack.c.h.b16 %v685
        %v855 = vunpack.c.l.b16 %v686
        %v856 = vunpack.c.h.b16 %v686
        %v857 = vunpack.c.l.b16 %v687
        %v858 = vunpack.c.h.b16 %v687
        %v859 = vunpack.c.l.b16 %v688
        %v860 = vunpack.c.h.b16 %v688
        %v861 = vunpack.c.l.b16 %v689
        %v862 = vunpack.c.h.b16 %v689
        %v863 = vunpack.c.l.b16 %v690
        %v864 = vunpack.c.h.b16 %v690
        %v865 = vunpack.c.l.b16 %v691
        %v866 = vunpack.c.h.b16 %v691
        %v867 = vunpack.c.l.b16 %v692
        %v868 = vunpack.c.h.b16 %v692
        %v869 = vunpack.c.l.b16 %v693
        %v870 = vunpack.c.h.b16 %v693
        %v871 = vunpack.c.l.b16 %v694
        %v872 = vunpack.c.h.b16 %v694
        %v873 = vunpack.c.l.b16 %v695
        %v874 = vunpack.c.h.b16 %v695
        %v875 = vunpack.c.l.b16 %v696
        %v876 = vunpack.c.h.b16 %v696
        %v877 = vunpack.c.l.b16 %v697
        %v878 = vunpack.c.h.b16 %v697
        %v879 = vunpack.c.l.b16 %v698
        %v880 = vunpack.c.h.b16 %v698
        %v881 = vunpack.c.l.b16 %v699
        %v882 = vunpack.c.h.b16 %v699
        %v883 = vunpack.c.l.b16 %v700
        %v884 = vunpack.c.h.b16 %v700
        %v885 = vunpack.c.l.b16 %v701
        %v886 = vunpack.c.h.b16 %v701
        %v887 = vunpack.c.l.b16 %v702
        %v888 = vunpack.c.h.b16 %v702
        %v889 = vunpack.c.l.b16 %v703
        %v890 = vunpack.c.h.b16 %v703
        %v891 = vunpack.c.l.b16 %v704
        %v892 = vunpack.c.h.b16 %v704
        %v893 = vunpack.c.l.b16 %v705
        %v894 = vunpack.c.h.b16 %v705
        %v895 = vunpack.c.l.b16 %v706
        %v896 = vunpack.c.h.b16 %v706
        %v897 = vunpack.c.l.b16 %v707
        %v898 = vunpack.c.h.b16 %v707
        %v899 = vunpack.c.l.b16 %v708
        %v900 = vunpack.c.h.b16 %v708
        %v901 = vunpack.c.l.b16 %v709
        %v902 = vunpack.c.h.b16 %v709
        %v903 = vunpack.c.l.b16 %v710
        %v904 = vunpack.c.h.b16 %v710
        %v905 = vunpack.c.l.b16 %v711
        %v906 = vunpack.c.h.b16 %v711
        %v907 = vunpack.c.l.b16 %v712
        %v908 = vunpack.c.h.b16 %v712
        %v909 = vunpack.c.l.b16 %v713
        %v910 = vunpack.c.h.b16 %v713
        %v911 = vunpack.c.l.b16 %v714
        %v912 = vunpack.c.h.b16 %v714
        %v913 = vunpack.c.l.b16 %v715
        %v914 = vunpack.c.h.b16 %v715
        %v915 = vunpack.c.l.b16 %v716
        %v916 = vunpack.c.h.b16 %v716
        %v917 = vunpack.c.l.b16 %v717
        %v918 = vunpack.c.h.b16 %v717
        %v919 = vunpack.c.l.b16 %v718
        %v920 = vunpack.c.h.b16 %v718
        %v921 = vunpack.c.l.b16 %v719
        %v922 = vunpack.c.h.b16 %v719
        %v923 = vunpack.c.l.b16 %v720
        %v924 = vunpack.c.h.b16 %v720
        %v925 = vunpack.c.l.b16 %v721
        %v926 = vunpack.c.h.b16 %v721
        %v927 = vunpack.c.l.b16 %v722
        %v928 = vunpack.c.h.b16 %v722
        %v929 = vunpack.c.l.b16 %v723
        %v930 = vunpack.c.h.b16 %v723
        %v931 = vunpack.c.l.b16 %v724
        %v932 = vunpack.c.h.b16 %v724
        %v933 = vlaneseq
        %v934 = vand.u32 %v933, 127
        %v935 = vlaneseq
        %v936 = vshrl.u32 %v935, 7
        %v937 = vsub.s32 %v934, %v936
        %v938 = vrot.slane %v805, %v937
        %v939 = vadd.s32 %v934, 4294967288
        %v940 = vlaneseq
        %v941 = vshrl.u32 %v940, 7
        %v942 = vsub.s32 %v939, %v941
        %v943 = vrot.slane %v806, %v942
        %vm944 = vcmask 130112
        %v945 = vsel %vm944, %v943, %v938
        %v946 = vadd.s32 %v934, 4294967280
        %v947 = vlaneseq
        %v948 = vshrl.u32 %v947, 7
        %v949 = vsub.s32 %v946, %v948
        %v950 = vrot.slane %v807, %v949
        %vm951 = vcmask 195712
        %v952 = vsel %vm951, %v950, %v945
        %v953 = vadd.s32 %v934, 4294967272
        %v954 = vlaneseq
        %v955 = vshrl.u32 %v954, 7
        %v956 = vsub.s32 %v953, %v955
        %v957 = vrot.slane %v808, %v956
        %vm958 = vcmask 261312
        %v959 = vsel %vm958, %v957, %v952
        %v960 = vadd.s32 %v934, 4294967264
        %v961 = vlaneseq
        %v962 = vshrl.u32 %v961, 7
        %v963 = vsub.s32 %v960, %v962
        %v964 = vrot.slane %v809, %v963
        %vm965 = vcmask 326912
        %v966 = vsel %vm965, %v964, %v959
        %v967 = vadd.s32 %v934, 4294967256
        %v968 = vlaneseq
        %v969 = vshrl.u32 %v968, 7
        %v970 = vsub.s32 %v967, %v969
        %v971 = vrot.slane %v810, %v970
        %vm972 = vcmask 392512
        %v973 = vsel %vm972, %v971, %v966
        %v974 = vadd.s32 %v934, 4294967248
        %v975 = vlaneseq
        %v976 = vshrl.u32 %v975, 7
        %v977 = vsub.s32 %v974, %v976
        %v978 = vrot.slane %v811, %v977
        %vm979 = vcmask 458112
        %v980 = vsel %vm979, %v978, %v973
        %v981 = vadd.s32 %v934, 4294967240
        %v982 = vlaneseq
        %v983 = vshrl.u32 %v982, 7
        %v984 = vsub.s32 %v981, %v983
        %v985 = vrot.slane %v812, %v984
        %vm986 = vcmask 523712
        %v987 = vsel %vm986, %v985, %v980
        %v988 = vadd.s32 %v934, 4294967232
        %v989 = vlaneseq
        %v990 = vshrl.u32 %v989, 7
        %v991 = vsub.s32 %v988, %v990
        %v992 = vrot.slane %v813, %v991
        %vm993 = vcmask 589312
        %v994 = vsel %vm993, %v992, %v987
        %v995 = vadd.s32 %v934, 4294967224
        %v996 = vlaneseq
        %v997 = vshrl.u32 %v996, 7
        %v998 = vsub.s32 %v995, %v997
        %v999 = vrot.slane %v814, %v998
        %vm1000 = vcmask 654912
        %v1001 = vsel %vm1000, %v999, %v994
        %v1002 = vadd.s32 %v934, 4294967216
        %v1003 = vlaneseq
        %v1004 = vshrl.u32 %v1003, 7
        %v1005 = vsub.s32 %v1002, %v1004
        %v1006 = vrot.slane %v815, %v1005
        %vm1007 = vcmask 720512
        %v1008 = vsel %vm1007, %v1006, %v1001
        %v1009 = vadd.s32 %v934, 4294967208
        %v1010 = vlaneseq
        %v1011 = vshrl.u32 %v1010, 7
        %v1012 = vsub.s32 %v1009, %v1011
        %v1013 = vrot.slane %v816, %v1012
        %vm1014 = vcmask 786112
        %v1015 = vsel %vm1014, %v1013, %v1008
        %v1016 = vadd.s32 %v934, 4294967200
        %v1017 = vlaneseq
        %v1018 = vshrl.u32 %v1017, 7
        %v1019 = vsub.s32 %v1016, %v1018
        %v1020 = vrot.slane %v817, %v1019
        %vm1021 = vcmask 851712
        %v1022 = vsel %vm1021, %v1020, %v1015
        %v1023 = vadd.s32 %v934, 4294967192
        %v1024 = vlaneseq
        %v1025 = vshrl.u32 %v1024, 7
        %v1026 = vsub.s32 %v1023, %v1025
        %v1027 = vrot.slane %v818, %v1026
        %vm1028 = vcmask 917312
        %v1029 = vsel %vm1028, %v1027, %v1022
        %v1030 = vadd.s32 %v934, 4294967184
        %v1031 = vlaneseq
        %v1032 = vshrl.u32 %v1031, 7
        %v1033 = vsub.s32 %v1030, %v1032
        %v1034 = vrot.slane %v819, %v1033
        %vm1035 = vcmask 982912
        %v1036 = vsel %vm1035, %v1034, %v1029
        %v1037 = vadd.s32 %v934, 4294967176
        %v1038 = vlaneseq
        %v1039 = vshrl.u32 %v1038, 7
        %v1040 = vsub.s32 %v1037, %v1039
        %v1041 = vrot.slane %v820, %v1040
        %vm1042 = vcmask 1048512
        %v1043 = vsel %vm1042, %v1041, %v1036
        %v1044 = vlaneseq
        %v1045 = vshrl.u32 %v1044, 7
        %v1046 = vsub.s32 %v934, %v1045
        %v1047 = vrot.slane %v821, %v1046
        %v1048 = vlaneseq
        %v1049 = vshrl.u32 %v1048, 7
        %v1050 = vsub.s32 %v939, %v1049
        %v1051 = vrot.slane %v822, %v1050
        %v1052 = vsel %vm944, %v1051, %v1047
        %v1053 = vlaneseq
        %v1054 = vshrl.u32 %v1053, 7
        %v1055 = vsub.s32 %v946, %v1054
        %v1056 = vrot.slane %v823, %v1055
        %v1057 = vsel %vm951, %v1056, %v1052
        %v1058 = vlaneseq
        %v1059 = vshrl.u32 %v1058, 7
        %v1060 = vsub.s32 %v953, %v1059
        %v1061 = vrot.slane %v824, %v1060
        %v1062 = vsel %vm958, %v1061, %v1057
        %v1063 = vlaneseq
        %v1064 = vshrl.u32 %v1063, 7
        %v1065 = vsub.s32 %v960, %v1064
        %v1066 = vrot.slane %v825, %v1065
        %v1067 = vsel %vm965, %v1066, %v1062
        %v1068 = vlaneseq
        %v1069 = vshrl.u32 %v1068, 7
        %v1070 = vsub.s32 %v967, %v1069
        %v1071 = vrot.slane %v826, %v1070
        %v1072 = vsel %vm972, %v1071, %v1067
        %v1073 = vlaneseq
        %v1074 = vshrl.u32 %v1073, 7
        %v1075 = vsub.s32 %v974, %v1074
        %v1076 = vrot.slane %v827, %v1075
        %v1077 = vsel %vm979, %v1076, %v1072
        %v1078 = vlaneseq
        %v1079 = vshrl.u32 %v1078, 7
        %v1080 = vsub.s32 %v981, %v1079
        %v1081 = vrot.slane %v828, %v1080
        %v1082 = vsel %vm986, %v1081, %v1077
        %v1083 = vlaneseq
        %v1084 = vshrl.u32 %v1083, 7
        %v1085 = vsub.s32 %v988, %v1084
        %v1086 = vrot.slane %v829, %v1085
        %v1087 = vsel %vm993, %v1086, %v1082
        %v1088 = vlaneseq
        %v1089 = vshrl.u32 %v1088, 7
        %v1090 = vsub.s32 %v995, %v1089
        %v1091 = vrot.slane %v830, %v1090
        %v1092 = vsel %vm1000, %v1091, %v1087
        %v1093 = vlaneseq
        %v1094 = vshrl.u32 %v1093, 7
        %v1095 = vsub.s32 %v1002, %v1094
        %v1096 = vrot.slane %v831, %v1095
        %v1097 = vsel %vm1007, %v1096, %v1092
        %v1098 = vlaneseq
        %v1099 = vshrl.u32 %v1098, 7
        %v1100 = vsub.s32 %v1009, %v1099
        %v1101 = vrot.slane %v832, %v1100
        %v1102 = vsel %vm1014, %v1101, %v1097
        %v1103 = vlaneseq
        %v1104 = vshrl.u32 %v1103, 7
        %v1105 = vsub.s32 %v1016, %v1104
        %v1106 = vrot.slane %v833, %v1105
        %v1107 = vsel %vm1021, %v1106, %v1102
        %v1108 = vlaneseq
        %v1109 = vshrl.u32 %v1108, 7
        %v1110 = vsub.s32 %v1023, %v1109
        %v1111 = vrot.slane %v834, %v1110
        %v1112 = vsel %vm1028, %v1111, %v1107
        %v1113 = vlaneseq
        %v1114 = vshrl.u32 %v1113, 7
        %v1115 = vsub.s32 %v1030, %v1114
        %v1116 = vrot.slane %v835, %v1115
        %v1117 = vsel %vm1035, %v1116, %v1112
        %v1118 = vlaneseq
        %v1119 = vshrl.u32 %v1118, 7
        %v1120 = vsub.s32 %v1037, %v1119
        %v1121 = vrot.slane %v836, %v1120
        %v1122 = vsel %vm1042, %v1121, %v1117
        %v1123 = vlaneseq
        %v1124 = vshrl.u32 %v1123, 7
        %v1125 = vsub.s32 %v934, %v1124
        %v1126 = vrot.slane %v837, %v1125
        %v1127 = vlaneseq
        %v1128 = vshrl.u32 %v1127, 7
        %v1129 = vsub.s32 %v939, %v1128
        %v1130 = vrot.slane %v838, %v1129
        %v1131 = vsel %vm944, %v1130, %v1126
        %v1132 = vlaneseq
        %v1133 = vshrl.u32 %v1132, 7
        %v1134 = vsub.s32 %v946, %v1133
        %v1135 = vrot.slane %v839, %v1134
        %v1136 = vsel %vm951, %v1135, %v1131
        %v1137 = vlaneseq
        %v1138 = vshrl.u32 %v1137, 7
        %v1139 = vsub.s32 %v953, %v1138
        %v1140 = vrot.slane %v840, %v1139
        %v1141 = vsel %vm958, %v1140, %v1136
        %v1142 = vlaneseq
        %v1143 = vshrl.u32 %v1142, 7
        %v1144 = vsub.s32 %v960, %v1143
        %v1145 = vrot.slane %v841, %v1144
        %v1146 = vsel %vm965, %v1145, %v1141
        %v1147 = vlaneseq
        %v1148 = vshrl.u32 %v1147, 7
        %v1149 = vsub.s32 %v967, %v1148
        %v1150 = vrot.slane %v842, %v1149
        %v1151 = vsel %vm972, %v1150, %v1146
        %v1152 = vlaneseq
        %v1153 = vshrl.u32 %v1152, 7
        %v1154 = vsub.s32 %v974, %v1153
        %v1155 = vrot.slane %v843, %v1154
        %v1156 = vsel %vm979, %v1155, %v1151
        %v1157 = vlaneseq
        %v1158 = vshrl.u32 %v1157, 7
        %v1159 = vsub.s32 %v981, %v1158
        %v1160 = vrot.slane %v844, %v1159
        %v1161 = vsel %vm986, %v1160, %v1156
        %v1162 = vlaneseq
        %v1163 = vshrl.u32 %v1162, 7
        %v1164 = vsub.s32 %v988, %v1163
        %v1165 = vrot.slane %v845, %v1164
        %v1166 = vsel %vm993, %v1165, %v1161
        %v1167 = vlaneseq
        %v1168 = vshrl.u32 %v1167, 7
        %v1169 = vsub.s32 %v995, %v1168
        %v1170 = vrot.slane %v846, %v1169
        %v1171 = vsel %vm1000, %v1170, %v1166
        %v1172 = vlaneseq
        %v1173 = vshrl.u32 %v1172, 7
        %v1174 = vsub.s32 %v1002, %v1173
        %v1175 = vrot.slane %v847, %v1174
        %v1176 = vsel %vm1007, %v1175, %v1171
        %v1177 = vlaneseq
        %v1178 = vshrl.u32 %v1177, 7
        %v1179 = vsub.s32 %v1009, %v1178
        %v1180 = vrot.slane %v848, %v1179
        %v1181 = vsel %vm1014, %v1180, %v1176
        %v1182 = vlaneseq
        %v1183 = vshrl.u32 %v1182, 7
        %v1184 = vsub.s32 %v1016, %v1183
        %v1185 = vrot.slane %v849, %v1184
        %v1186 = vsel %vm1021, %v1185, %v1181
        %v1187 = vlaneseq
        %v1188 = vshrl.u32 %v1187, 7
        %v1189 = vsub.s32 %v1023, %v1188
        %v1190 = vrot.slane %v850, %v1189
        %v1191 = vsel %vm1028, %v1190, %v1186
        %v1192 = vlaneseq
        %v1193 = vshrl.u32 %v1192, 7
        %v1194 = vsub.s32 %v1030, %v1193
        %v1195 = vrot.slane %v851, %v1194
        %v1196 = vsel %vm1035, %v1195, %v1191
        %v1197 = vlaneseq
        %v1198 = vshrl.u32 %v1197, 7
        %v1199 = vsub.s32 %v1037, %v1198
        %v1200 = vrot.slane %v852, %v1199
        %v1201 = vsel %vm1042, %v1200, %v1196
        %v1202 = vlaneseq
        %v1203 = vshrl.u32 %v1202, 7
        %v1204 = vsub.s32 %v934, %v1203
        %v1205 = vrot.slane %v853, %v1204
        %v1206 = vlaneseq
        %v1207 = vshrl.u32 %v1206, 7
        %v1208 = vsub.s32 %v939, %v1207
        %v1209 = vrot.slane %v854, %v1208
        %v1210 = vsel %vm944, %v1209, %v1205
        %v1211 = vlaneseq
        %v1212 = vshrl.u32 %v1211, 7
        %v1213 = vsub.s32 %v946, %v1212
        %v1214 = vrot.slane %v855, %v1213
        %v1215 = vsel %vm951, %v1214, %v1210
        %v1216 = vlaneseq
        %v1217 = vshrl.u32 %v1216, 7
        %v1218 = vsub.s32 %v953, %v1217
        %v1219 = vrot.slane %v856, %v1218
        %v1220 = vsel %vm958, %v1219, %v1215
        %v1221 = vlaneseq
        %v1222 = vshrl.u32 %v1221, 7
        %v1223 = vsub.s32 %v960, %v1222
        %v1224 = vrot.slane %v857, %v1223
        %v1225 = vsel %vm965, %v1224, %v1220
        %v1226 = vlaneseq
        %v1227 = vshrl.u32 %v1226, 7
        %v1228 = vsub.s32 %v967, %v1227
        %v1229 = vrot.slane %v858, %v1228
        %v1230 = vsel %vm972, %v1229, %v1225
        %v1231 = vlaneseq
        %v1232 = vshrl.u32 %v1231, 7
        %v1233 = vsub.s32 %v974, %v1232
        %v1234 = vrot.slane %v859, %v1233
        %v1235 = vsel %vm979, %v1234, %v1230
        %v1236 = vlaneseq
        %v1237 = vshrl.u32 %v1236, 7
        %v1238 = vsub.s32 %v981, %v1237
        %v1239 = vrot.slane %v860, %v1238
        %v1240 = vsel %vm986, %v1239, %v1235
        %v1241 = vlaneseq
        %v1242 = vshrl.u32 %v1241, 7
        %v1243 = vsub.s32 %v988, %v1242
        %v1244 = vrot.slane %v861, %v1243
        %v1245 = vsel %vm993, %v1244, %v1240
        %v1246 = vlaneseq
        %v1247 = vshrl.u32 %v1246, 7
        %v1248 = vsub.s32 %v995, %v1247
        %v1249 = vrot.slane %v862, %v1248
        %v1250 = vsel %vm1000, %v1249, %v1245
        %v1251 = vlaneseq
        %v1252 = vshrl.u32 %v1251, 7
        %v1253 = vsub.s32 %v1002, %v1252
        %v1254 = vrot.slane %v863, %v1253
        %v1255 = vsel %vm1007, %v1254, %v1250
        %v1256 = vlaneseq
        %v1257 = vshrl.u32 %v1256, 7
        %v1258 = vsub.s32 %v1009, %v1257
        %v1259 = vrot.slane %v864, %v1258
        %v1260 = vsel %vm1014, %v1259, %v1255
        %v1261 = vlaneseq
        %v1262 = vshrl.u32 %v1261, 7
        %v1263 = vsub.s32 %v1016, %v1262
        %v1264 = vrot.slane %v865, %v1263
        %v1265 = vsel %vm1021, %v1264, %v1260
        %v1266 = vlaneseq
        %v1267 = vshrl.u32 %v1266, 7
        %v1268 = vsub.s32 %v1023, %v1267
        %v1269 = vrot.slane %v866, %v1268
        %v1270 = vsel %vm1028, %v1269, %v1265
        %v1271 = vlaneseq
        %v1272 = vshrl.u32 %v1271, 7
        %v1273 = vsub.s32 %v1030, %v1272
        %v1274 = vrot.slane %v867, %v1273
        %v1275 = vsel %vm1035, %v1274, %v1270
        %v1276 = vlaneseq
        %v1277 = vshrl.u32 %v1276, 7
        %v1278 = vsub.s32 %v1037, %v1277
        %v1279 = vrot.slane %v868, %v1278
        %v1280 = vsel %vm1042, %v1279, %v1275
        %v1281 = vlaneseq
        %v1282 = vshrl.u32 %v1281, 7
        %v1283 = vsub.s32 %v934, %v1282
        %v1284 = vrot.slane %v869, %v1283
        %v1285 = vlaneseq
        %v1286 = vshrl.u32 %v1285, 7
        %v1287 = vsub.s32 %v939, %v1286
        %v1288 = vrot.slane %v870, %v1287
        %v1289 = vsel %vm944, %v1288, %v1284
        %v1290 = vlaneseq
        %v1291 = vshrl.u32 %v1290, 7
        %v1292 = vsub.s32 %v946, %v1291
        %v1293 = vrot.slane %v871, %v1292
        %v1294 = vsel %vm951, %v1293, %v1289
        %v1295 = vlaneseq
        %v1296 = vshrl.u32 %v1295, 7
        %v1297 = vsub.s32 %v953, %v1296
        %v1298 = vrot.slane %v872, %v1297
        %v1299 = vsel %vm958, %v1298, %v1294
        %v1300 = vlaneseq
        %v1301 = vshrl.u32 %v1300, 7
        %v1302 = vsub.s32 %v960, %v1301
        %v1303 = vrot.slane %v873, %v1302
        %v1304 = vsel %vm965, %v1303, %v1299
        %v1305 = vlaneseq
        %v1306 = vshrl.u32 %v1305, 7
        %v1307 = vsub.s32 %v967, %v1306
        %v1308 = vrot.slane %v874, %v1307
        %v1309 = vsel %vm972, %v1308, %v1304
        %v1310 = vlaneseq
        %v1311 = vshrl.u32 %v1310, 7
        %v1312 = vsub.s32 %v974, %v1311
        %v1313 = vrot.slane %v875, %v1312
        %v1314 = vsel %vm979, %v1313, %v1309
        %v1315 = vlaneseq
        %v1316 = vshrl.u32 %v1315, 7
        %v1317 = vsub.s32 %v981, %v1316
        %v1318 = vrot.slane %v876, %v1317
        %v1319 = vsel %vm986, %v1318, %v1314
        %v1320 = vlaneseq
        %v1321 = vshrl.u32 %v1320, 7
        %v1322 = vsub.s32 %v988, %v1321
        %v1323 = vrot.slane %v877, %v1322
        %v1324 = vsel %vm993, %v1323, %v1319
        %v1325 = vlaneseq
        %v1326 = vshrl.u32 %v1325, 7
        %v1327 = vsub.s32 %v995, %v1326
        %v1328 = vrot.slane %v878, %v1327
        %v1329 = vsel %vm1000, %v1328, %v1324
        %v1330 = vlaneseq
        %v1331 = vshrl.u32 %v1330, 7
        %v1332 = vsub.s32 %v1002, %v1331
        %v1333 = vrot.slane %v879, %v1332
        %v1334 = vsel %vm1007, %v1333, %v1329
        %v1335 = vlaneseq
        %v1336 = vshrl.u32 %v1335, 7
        %v1337 = vsub.s32 %v1009, %v1336
        %v1338 = vrot.slane %v880, %v1337
        %v1339 = vsel %vm1014, %v1338, %v1334
        %v1340 = vlaneseq
        %v1341 = vshrl.u32 %v1340, 7
        %v1342 = vsub.s32 %v1016, %v1341
        %v1343 = vrot.slane %v881, %v1342
        %v1344 = vsel %vm1021, %v1343, %v1339
        %v1345 = vlaneseq
        %v1346 = vshrl.u32 %v1345, 7
        %v1347 = vsub.s32 %v1023, %v1346
        %v1348 = vrot.slane %v882, %v1347
        %v1349 = vsel %vm1028, %v1348, %v1344
        %v1350 = vlaneseq
        %v1351 = vshrl.u32 %v1350, 7
        %v1352 = vsub.s32 %v1030, %v1351
        %v1353 = vrot.slane %v883, %v1352
        %v1354 = vsel %vm1035, %v1353, %v1349
        %v1355 = vlaneseq
        %v1356 = vshrl.u32 %v1355, 7
        %v1357 = vsub.s32 %v1037, %v1356
        %v1358 = vrot.slane %v884, %v1357
        %v1359 = vsel %vm1042, %v1358, %v1354
        %v1360 = vlaneseq
        %v1361 = vshrl.u32 %v1360, 7
        %v1362 = vsub.s32 %v934, %v1361
        %v1363 = vrot.slane %v885, %v1362
        %v1364 = vlaneseq
        %v1365 = vshrl.u32 %v1364, 7
        %v1366 = vsub.s32 %v939, %v1365
        %v1367 = vrot.slane %v886, %v1366
        %v1368 = vsel %vm944, %v1367, %v1363
        %v1369 = vlaneseq
        %v1370 = vshrl.u32 %v1369, 7
        %v1371 = vsub.s32 %v946, %v1370
        %v1372 = vrot.slane %v887, %v1371
        %v1373 = vsel %vm951, %v1372, %v1368
        %v1374 = vlaneseq
        %v1375 = vshrl.u32 %v1374, 7
        %v1376 = vsub.s32 %v953, %v1375
        %v1377 = vrot.slane %v888, %v1376
        %v1378 = vsel %vm958, %v1377, %v1373
        %v1379 = vlaneseq
        %v1380 = vshrl.u32 %v1379, 7
        %v1381 = vsub.s32 %v960, %v1380
        %v1382 = vrot.slane %v889, %v1381
        %v1383 = vsel %vm965, %v1382, %v1378
        %v1384 = vlaneseq
        %v1385 = vshrl.u32 %v1384, 7
        %v1386 = vsub.s32 %v967, %v1385
        %v1387 = vrot.slane %v890, %v1386
        %v1388 = vsel %vm972, %v1387, %v1383
        %v1389 = vlaneseq
        %v1390 = vshrl.u32 %v1389, 7
        %v1391 = vsub.s32 %v974, %v1390
        %v1392 = vrot.slane %v891, %v1391
        %v1393 = vsel %vm979, %v1392, %v1388
        %v1394 = vlaneseq
        %v1395 = vshrl.u32 %v1394, 7
        %v1396 = vsub.s32 %v981, %v1395
        %v1397 = vrot.slane %v892, %v1396
        %v1398 = vsel %vm986, %v1397, %v1393
        %v1399 = vlaneseq
        %v1400 = vshrl.u32 %v1399, 7
        %v1401 = vsub.s32 %v988, %v1400
        %v1402 = vrot.slane %v893, %v1401
        %v1403 = vsel %vm993, %v1402, %v1398
        %v1404 = vlaneseq
        %v1405 = vshrl.u32 %v1404, 7
        %v1406 = vsub.s32 %v995, %v1405
        %v1407 = vrot.slane %v894, %v1406
        %v1408 = vsel %vm1000, %v1407, %v1403
        %v1409 = vlaneseq
        %v1410 = vshrl.u32 %v1409, 7
        %v1411 = vsub.s32 %v1002, %v1410
        %v1412 = vrot.slane %v895, %v1411
        %v1413 = vsel %vm1007, %v1412, %v1408
        %v1414 = vlaneseq
        %v1415 = vshrl.u32 %v1414, 7
        %v1416 = vsub.s32 %v1009, %v1415
        %v1417 = vrot.slane %v896, %v1416
        %v1418 = vsel %vm1014, %v1417, %v1413
        %v1419 = vlaneseq
        %v1420 = vshrl.u32 %v1419, 7
        %v1421 = vsub.s32 %v1016, %v1420
        %v1422 = vrot.slane %v897, %v1421
        %v1423 = vsel %vm1021, %v1422, %v1418
        %v1424 = vlaneseq
        %v1425 = vshrl.u32 %v1424, 7
        %v1426 = vsub.s32 %v1023, %v1425
        %v1427 = vrot.slane %v898, %v1426
        %v1428 = vsel %vm1028, %v1427, %v1423
        %v1429 = vlaneseq
        %v1430 = vshrl.u32 %v1429, 7
        %v1431 = vsub.s32 %v1030, %v1430
        %v1432 = vrot.slane %v899, %v1431
        %v1433 = vsel %vm1035, %v1432, %v1428
        %v1434 = vlaneseq
        %v1435 = vshrl.u32 %v1434, 7
        %v1436 = vsub.s32 %v1037, %v1435
        %v1437 = vrot.slane %v900, %v1436
        %v1438 = vsel %vm1042, %v1437, %v1433
        %v1439 = vlaneseq
        %v1440 = vshrl.u32 %v1439, 7
        %v1441 = vsub.s32 %v934, %v1440
        %v1442 = vrot.slane %v901, %v1441
        %v1443 = vlaneseq
        %v1444 = vshrl.u32 %v1443, 7
        %v1445 = vsub.s32 %v939, %v1444
        %v1446 = vrot.slane %v902, %v1445
        %v1447 = vsel %vm944, %v1446, %v1442
        %v1448 = vlaneseq
        %v1449 = vshrl.u32 %v1448, 7
        %v1450 = vsub.s32 %v946, %v1449
        %v1451 = vrot.slane %v903, %v1450
        %v1452 = vsel %vm951, %v1451, %v1447
        %v1453 = vlaneseq
        %v1454 = vshrl.u32 %v1453, 7
        %v1455 = vsub.s32 %v953, %v1454
        %v1456 = vrot.slane %v904, %v1455
        %v1457 = vsel %vm958, %v1456, %v1452
        %v1458 = vlaneseq
        %v1459 = vshrl.u32 %v1458, 7
        %v1460 = vsub.s32 %v960, %v1459
        %v1461 = vrot.slane %v905, %v1460
        %v1462 = vsel %vm965, %v1461, %v1457
        %v1463 = vlaneseq
        %v1464 = vshrl.u32 %v1463, 7
        %v1465 = vsub.s32 %v967, %v1464
        %v1466 = vrot.slane %v906, %v1465
        %v1467 = vsel %vm972, %v1466, %v1462
        %v1468 = vlaneseq
        %v1469 = vshrl.u32 %v1468, 7
        %v1470 = vsub.s32 %v974, %v1469
        %v1471 = vrot.slane %v907, %v1470
        %v1472 = vsel %vm979, %v1471, %v1467
        %v1473 = vlaneseq
        %v1474 = vshrl.u32 %v1473, 7
        %v1475 = vsub.s32 %v981, %v1474
        %v1476 = vrot.slane %v908, %v1475
        %v1477 = vsel %vm986, %v1476, %v1472
        %v1478 = vlaneseq
        %v1479 = vshrl.u32 %v1478, 7
        %v1480 = vsub.s32 %v988, %v1479
        %v1481 = vrot.slane %v909, %v1480
        %v1482 = vsel %vm993, %v1481, %v1477
        %v1483 = vlaneseq
        %v1484 = vshrl.u32 %v1483, 7
        %v1485 = vsub.s32 %v995, %v1484
        %v1486 = vrot.slane %v910, %v1485
        %v1487 = vsel %vm1000, %v1486, %v1482
        %v1488 = vlaneseq
        %v1489 = vshrl.u32 %v1488, 7
        %v1490 = vsub.s32 %v1002, %v1489
        %v1491 = vrot.slane %v911, %v1490
        %v1492 = vsel %vm1007, %v1491, %v1487
        %v1493 = vlaneseq
        %v1494 = vshrl.u32 %v1493, 7
        %v1495 = vsub.s32 %v1009, %v1494
        %v1496 = vrot.slane %v912, %v1495
        %v1497 = vsel %vm1014, %v1496, %v1492
        %v1498 = vlaneseq
        %v1499 = vshrl.u32 %v1498, 7
        %v1500 = vsub.s32 %v1016, %v1499
        %v1501 = vrot.slane %v913, %v1500
        %v1502 = vsel %vm1021, %v1501, %v1497
        %v1503 = vlaneseq
        %v1504 = vshrl.u32 %v1503, 7
        %v1505 = vsub.s32 %v1023, %v1504
        %v1506 = vrot.slane %v914, %v1505
        %v1507 = vsel %vm1028, %v1506, %v1502
        %v1508 = vlaneseq
        %v1509 = vshrl.u32 %v1508, 7
        %v1510 = vsub.s32 %v1030, %v1509
        %v1511 = vrot.slane %v915, %v1510
        %v1512 = vsel %vm1035, %v1511, %v1507
        %v1513 = vlaneseq
        %v1514 = vshrl.u32 %v1513, 7
        %v1515 = vsub.s32 %v1037, %v1514
        %v1516 = vrot.slane %v916, %v1515
        %v1517 = vsel %vm1042, %v1516, %v1512
        %v1518 = vlaneseq
        %v1519 = vshrl.u32 %v1518, 7
        %v1520 = vsub.s32 %v934, %v1519
        %v1521 = vrot.slane %v917, %v1520
        %v1522 = vlaneseq
        %v1523 = vshrl.u32 %v1522, 7
        %v1524 = vsub.s32 %v939, %v1523
        %v1525 = vrot.slane %v918, %v1524
        %v1526 = vsel %vm944, %v1525, %v1521
        %v1527 = vlaneseq
        %v1528 = vshrl.u32 %v1527, 7
        %v1529 = vsub.s32 %v946, %v1528
        %v1530 = vrot.slane %v919, %v1529
        %v1531 = vsel %vm951, %v1530, %v1526
        %v1532 = vlaneseq
        %v1533 = vshrl.u32 %v1532, 7
        %v1534 = vsub.s32 %v953, %v1533
        %v1535 = vrot.slane %v920, %v1534
        %v1536 = vsel %vm958, %v1535, %v1531
        %v1537 = vlaneseq
        %v1538 = vshrl.u32 %v1537, 7
        %v1539 = vsub.s32 %v960, %v1538
        %v1540 = vrot.slane %v921, %v1539
        %v1541 = vsel %vm965, %v1540, %v1536
        %v1542 = vlaneseq
        %v1543 = vshrl.u32 %v1542, 7
        %v1544 = vsub.s32 %v967, %v1543
        %v1545 = vrot.slane %v922, %v1544
        %v1546 = vsel %vm972, %v1545, %v1541
        %v1547 = vlaneseq
        %v1548 = vshrl.u32 %v1547, 7
        %v1549 = vsub.s32 %v974, %v1548
        %v1550 = vrot.slane %v923, %v1549
        %v1551 = vsel %vm979, %v1550, %v1546
        %v1552 = vlaneseq
        %v1553 = vshrl.u32 %v1552, 7
        %v1554 = vsub.s32 %v981, %v1553
        %v1555 = vrot.slane %v924, %v1554
        %v1556 = vsel %vm986, %v1555, %v1551
        %v1557 = vlaneseq
        %v1558 = vshrl.u32 %v1557, 7
        %v1559 = vsub.s32 %v988, %v1558
        %v1560 = vrot.slane %v925, %v1559
        %v1561 = vsel %vm993, %v1560, %v1556
        %v1562 = vlaneseq
        %v1563 = vshrl.u32 %v1562, 7
        %v1564 = vsub.s32 %v995, %v1563
        %v1565 = vrot.slane %v926, %v1564
        %v1566 = vsel %vm1000, %v1565, %v1561
        %v1567 = vlaneseq
        %v1568 = vshrl.u32 %v1567, 7
        %v1569 = vsub.s32 %v1002, %v1568
        %v1570 = vrot.slane %v927, %v1569
        %v1571 = vsel %vm1007, %v1570, %v1566
        %v1572 = vlaneseq
        %v1573 = vshrl.u32 %v1572, 7
        %v1574 = vsub.s32 %v1009, %v1573
        %v1575 = vrot.slane %v928, %v1574
        %v1576 = vsel %vm1014, %v1575, %v1571
        %v1577 = vlaneseq
        %v1578 = vshrl.u32 %v1577, 7
        %v1579 = vsub.s32 %v1016, %v1578
        %v1580 = vrot.slane %v929, %v1579
        %v1581 = vsel %vm1021, %v1580, %v1576
        %v1582 = vlaneseq
        %v1583 = vshrl.u32 %v1582, 7
        %v1584 = vsub.s32 %v1023, %v1583
        %v1585 = vrot.slane %v930, %v1584
        %v1586 = vsel %vm1028, %v1585, %v1581
        %v1587 = vlaneseq
        %v1588 = vshrl.u32 %v1587, 7
        %v1589 = vsub.s32 %v1030, %v1588
        %v1590 = vrot.slane %v931, %v1589
        %v1591 = vsel %vm1035, %v1590, %v1586
        %v1592 = vlaneseq
        %v1593 = vshrl.u32 %v1592, 7
        %v1594 = vsub.s32 %v1037, %v1593
        %v1595 = vrot.slane %v932, %v1594
        %v1596 = vsel %vm1042, %v1595, %v1591
        %vm1597 = vcmask 1041409
        %v1598 = vsel %vm1597, %v1122, %v1043
        %vm1599 = vcmask 1042434
        %v1600 = vsel %vm1599, %v1201, %v1598
        %vm1601 = vcmask 1043459
        %v1602 = vsel %vm1601, %v1280, %v1600
        %vm1603 = vcmask 1044484
        %v1604 = vsel %vm1603, %v1359, %v1602
        %vm1605 = vcmask 1045509
        %v1606 = vsel %vm1605, %v1438, %v1604
        %vm1607 = vcmask 1046534
        %v1608 = vsel %vm1607, %v1517, %v1606
        %vm1609 = vcmask 1047559
        %v1610 = vsel %vm1609, %v1596, %v1608
        %v1611 = vpack.c.b16 %v1610, %v1610
        %v1629 = vunpack.c.l.b16 %v725
        %v1630 = vunpack.c.h.b16 %v725
        %v1631 = vunpack.c.l.b16 %v726
        %v1632 = vunpack.c.h.b16 %v726
        %v1633 = vunpack.c.l.b16 %v727
        %v1634 = vunpack.c.h.b16 %v727
        %v1635 = vunpack.c.l.b16 %v728
        %v1636 = vunpack.c.h.b16 %v728
        %v1637 = vunpack.c.l.b16 %v729
        %v1638 = vunpack.c.h.b16 %v729
        %v1639 = vunpack.c.l.b16 %v730
        %v1640 = vunpack.c.h.b16 %v730
        %v1641 = vunpack.c.l.b16 %v731
        %v1642 = vunpack.c.h.b16 %v731
        %v1643 = vunpack.c.l.b16 %v732
        %v1644 = vunpack.c.h.b16 %v732
        %v1645 = vunpack.c.l.b16 %v733
        %v1646 = vunpack.c.h.b16 %v733
        %v1647 = vunpack.c.l.b16 %v734
        %v1648 = vunpack.c.h.b16 %v734
        %v1649 = vunpack.c.l.b16 %v735
        %v1650 = vunpack.c.h.b16 %v735
        %v1651 = vunpack.c.l.b16 %v736
        %v1652 = vunpack.c.h.b16 %v736
        %v1653 = vunpack.c.l.b16 %v737
        %v1654 = vunpack.c.h.b16 %v737
        %v1655 = vunpack.c.l.b16 %v738
        %v1656 = vunpack.c.h.b16 %v738
        %v1657 = vunpack.c.l.b16 %v739
        %v1658 = vunpack.c.h.b16 %v739
        %v1659 = vunpack.c.l.b16 %v740
        %v1660 = vunpack.c.h.b16 %v740
        %v1661 = vpack.c.b16 %v1631, %v1629
        %v1662 = vpack.c.b16 %v1632, %v1630
        %v1663 = vpack.c.b16 %v1635, %v1633
        %v1664 = vpack.c.b16 %v1636, %v1634
        %v1665 = vpack.c.b16 %v1639, %v1637
        %v1666 = vpack.c.b16 %v1640, %v1638
        %v1667 = vpack.c.b16 %v1643, %v1641
        %v1668 = vpack.c.b16 %v1644, %v1642
        %v1669 = vpack.c.b16 %v1647, %v1645
        %v1670 = vpack.c.b16 %v1648, %v1646
        %v1671 = vpack.c.b16 %v1651, %v1649
        %v1672 = vpack.c.b16 %v1652, %v1650
        %v1673 = vpack.c.b16 %v1655, %v1653
        %v1674 = vpack.c.b16 %v1656, %v1654
        %v1675 = vpack.c.b16 %v1659, %v1657
        %v1676 = vpack.c.b16 %v1660, %v1658
        %1693 = vmatprep.subr.bf16.mxu0 %v1662
        %1694 = vmatpush1.bf16.msra.mxu0 %v1661
        %1695 = vmatprep.subr.bf16.mxu0 %v1664
        %1696 = vmatpush1.bf16.msra.mxu0 %v1663
        %1697 = vmatprep.subr.bf16.mxu0 %v1666
        %1698 = vmatpush1.bf16.msra.mxu0 %v1665
        %1699 = vmatprep.subr.bf16.mxu0 %v1668
        %1700 = vmatpush1.bf16.msra.mxu0 %v1667
        %1701 = vmatprep.subr.bf16.mxu0 %v1670
        %1702 = vmatpush1.bf16.msra.mxu0 %v1669
        %1703 = vmatprep.subr.bf16.mxu0 %v1672
        %1704 = vmatpush1.bf16.msra.mxu0 %v1671
        %1705 = vmatprep.subr.bf16.mxu0 %v1674
        %1706 = vmatpush1.bf16.msra.mxu0 %v1673
        %1707 = vmatprep.subr.bf16.mxu0 %v1676
        %1708 = vmatpush1.bf16.msra.mxu0 %v1675
        %1709 = vmatprep.subr.bf16.mxu0 0
        %1710 = vmatpush1.bf16.msra.mxu0 0
        %1711 = vmatprep.subr.bf16.mxu0 0
        %1712 = vmatpush1.bf16.msra.mxu0 0
        %1713 = vmatprep.subr.bf16.mxu0 0
        %1714 = vmatpush1.bf16.msra.mxu0 0
        %1715 = vmatprep.subr.bf16.mxu0 0
        %1716 = vmatpush1.bf16.msra.mxu0 0
        %1717 = vmatprep.subr.bf16.mxu0 0
        %1718 = vmatpush1.bf16.msra.mxu0 0
        %1719 = vmatprep.subr.bf16.mxu0 0
        %1720 = vmatpush1.bf16.msra.mxu0 0
        %1721 = vmatprep.subr.bf16.mxu0 0
        %1722 = vmatpush1.bf16.msra.mxu0 0
        %1723 = vmatprep.subr.bf16.mxu0 0
        %1724 = vmatpush1.bf16.msra.mxu0 0
        %1725 = vmatprep.mubr.bf16.mxu0 0
        %1726 = vmatmul.mubr.bf16.gmra.mrb[0].mxu0 %v1611
        %v1727 = vpop.f32.mrb[0].mxu0
        %v1728 = vadd.f32 0.0, %v1727
        %v1729 = vpop.f32.mrb[0].mxu0
        %v1730 = vadd.f32 0.0, %v1729
        %v1731 = vpop.f32.mrb[0].mxu0
        %v1732 = vpop.f32.mrb[0].mxu0
        %1733 = vdwg.mxu0
        %1734 = vst [vmem:[%s139] sm:$0xff] %v1728
        %1735 = vst [vmem:[%s139 + $0x8] sm:$0xff] %v1730
        %s1736 = sand.u32 %s71, 1
        %s1737 = scalar_lea.sflag [#allocation3], %s1736
        %s1738 = sand.u32 %s71, 1
        %s1739 = smul.addr %s1738, 16
        %s1740 = scalar_lea.vmem [#allocation2], %s1739
        // Predicated region
        $region29: #{tpu_custom_call.1} parent=27 // pred_check
          %p1741 = pneg %p81
        $region30: #{tpu_custom_call.1} parent=27 // pred_check_branch
          %1743 = sbr.rel (%p1741) target = $region32
        $region31: #{tpu_custom_call.1} parent=27 // pred_region
          %s1745 = ssub.s32 256, 256
          %1746 = vsyncadd %s1737, %s1745
          %s1747 = smul.addr %s16, 2
          %s1748 = smul.addr %s1747, 128
          %s1749 = scalar_lea.hbm %s2, %s1748
          %s1751 = sshll.u32 %s1740, 4
          %s1752 = int_to_ptr.vmem [resolvable:$true] %s1751
          %1754 = dma.vmem_to_hbm [thread:$0]  %s1752, 256, %s1749, %s1737
        $region32: #{tpu_custom_call.1} parent=27 // pred_fallthru
          _
      $region28: #{tpu_custom_call.1} parent=5 // pred_fallthru
        _
      %p1755 = scmp.le.s32.totalorder 2, %s11
      // Predicated region
      $region33: #{tpu_custom_call.1} parent=5 // pred_check
        %p1756 = pneg %p1755
      $region34: #{tpu_custom_call.1} parent=5 // pred_check_branch
        %1758 = sbr.rel (%p1756) target = $region36
      $region35: #{tpu_custom_call.1} parent=5 // pred_region
        %s1759 = ssub.s32 %s11, 2
        // Predicated region
        $region37: #{tpu_custom_call.1} parent=35 // pred_check
          %p1760 = pneg %p87
        $region38: #{tpu_custom_call.1} parent=35 // pred_check_branch
          %1762 = sbr.rel (%p1760) target = $region40
        $region39: #{tpu_custom_call.1} parent=35 // pred_region
          %s1763 = sand.u32 %s72, 1
          %s1764 = scalar_lea.sflag [#allocation3], %s1763
          %s1765 = sand.u32 %s72, 1
          %s1766 = smul.addr %s1765, 16
          %s1767 = scalar_lea.vmem [#allocation2], %s1766
          %1768 = dma.done %s1764, 256
        $region40: #{tpu_custom_call.1} parent=35 // pred_fallthru
          _
      $region36: #{tpu_custom_call.1} parent=5 // pred_fallthru
        _
    $region6: #{tpu_custom_call.1} parent=1 // loop_footer
      %s15 = sadd.s32 1, %s11
    $region7: #{tpu_custom_call.1} parent=1 // loop_footer_branch
      %10 = sbr.rel target = $region3
    $region8: #{tpu_custom_call.1} parent=1 // loop_exit
      _
    %1769 = vsyncpa [#allocation3], 1
    %s1770 = scalar_lea.sflag [#allocation3], 1
    %1771 = vsyncpa %s1770, 1

// kernel: tpu_custom_call.1
$region0: #{tpu_custom_call.1}
  #allocation0 [shape = 'u32[]', space=smem, size = 0x4, offset = 0x4, fixed_abs, tag = 'smem constant byte address 0x4 - core index']
  #allocation1 [shape = 'u32[144,128]{1,0:T(1,128)}', space=vmem, size = 0x12000, scoped, tag = 'internal scratch']
  %s0 = inlined_call_operand.vmem [shape: f32[32,128,16], index: 0, kind: input, shape index: {}]
  %s1 = inlined_call_operand.vmem [shape: bf16[128,256], index: 1, kind: input, shape index: {}]
  %s2 = inlined_call_operand.hbm [shape: f32[32,256], index: 2, kind: output, shape index: {}]
  %s3 = sld [smem:[#allocation0]]
  $region41: #{tpu_custom_call.1} parent=0
    _
  %s5 = ssub.s32 1, %s3
  %s6 = scalar_select 0, %s5, %s3
  $region1: #{tpu_custom_call.1} parent=0
    #allocation2 [shape = 'u8[16384]{0}', space=vmem, size = 0x4000, scoped, tag = 'output window, operand 0']
    #allocation3 [shape = 's32[2]{0}', space=sflag, size = 0x8, scoped, tag = 'scoped memory for tpu_custom_call.1']
    %7 = vsyncpa [#allocation3], 0
    %s8 = scalar_lea.sflag [#allocation3], 1
    %9 = vsyncpa %s8, 0
    loop: start=0, step=1, limit=6
    $region2: #{tpu_custom_call.1} parent=1 // loop_pre_header
      _
    $region3: #{tpu_custom_call.1} parent=1 // loop_header
      %s11 = sphi 0, %s15
      %p12 = scmp.ge.s32.totalorder %s11, 6
      %s21 = sphi 0, %s23
      %s24 = sphi 0, %s21
      %s25 = sphi 0, %s24
      %s41 = sphi 0, %s25
      %s45 = sphi 0, %s45
      %s47 = sphi 0, %s45
      %s48 = sphi 0, %s47
      %s62 = sphi 0, %s48
      %s68 = sphi 0, %s70
      %s71 = sphi 0, %s68
      %s72 = sphi 0, %s71
      %s88 = sphi 0, %s72
    $region4: #{tpu_custom_call.1} parent=1 // loop_header_branch
      %14 = sbr.rel (%p12) target = $region8
    $region5: #{tpu_custom_call.1} parent=1 // loop_body
      %s16 = ssub.s32 %s11, 1
      %s17 = ssub.s32 %s11, 2
      %s18 = sadd.s32 %s11, 1
      %s19 = ssub.s32 %s11, %s18
      %p20 = scmp.eq.s32.totalorder %s19, 0
      %s22 = sadd.s32 %s21, 1
      %s23 = scalar_select %p20, %s21, %s22
      %p26 = pneg %p20
      %p27 = scmp.eq.s32.totalorder %s11, 3
      %p28 = por %p26, %p27
      %p29 = scmp.ne.s32.totalorder %s21, %s24
      %p30 = scmp.eq.s32.totalorder %s11, 0
      %p31 = por %p29, %p30
      %p32 = scmp.ne.s32.totalorder %s21, %s24
      %p33 = scmp.eq.s32.totalorder %s16, 3
      %p34 = por %p32, %p33
      %p35 = scmp.ne.s32.totalorder %s24, %s25
      %p36 = scmp.eq.s32.totalorder %s16, 0
      %p37 = por %p35, %p36
      %p38 = scmp.ne.s32.totalorder %s24, %s25
      %p39 = scmp.eq.s32.totalorder %s17, 3
      %p40 = por %p38, %p39
      %p42 = scmp.ne.s32.totalorder %s25, %s41
      %p43 = scmp.eq.s32.totalorder %s17, 0
      %p44 = por %p42, %p43
      %s46 = sadd.s32 %s45, 1
      %p49 = scmp.eq.s32.totalorder %s11, 3
      %p50 = scmp.ne.s32.totalorder %s45, %s47
      %p51 = scmp.eq.s32.totalorder %s11, 0
      %p52 = por %p50, %p51
      %p53 = scmp.ne.s32.totalorder %s45, %s47
      %p54 = scmp.eq.s32.totalorder %s16, 3
      %p55 = por %p53, %p54
      %p56 = scmp.ne.s32.totalorder %s47, %s48
      %p57 = scmp.eq.s32.totalorder %s16, 0
      %p58 = por %p56, %p57
      %p59 = scmp.ne.s32.totalorder %s47, %s48
      %p60 = scmp.eq.s32.totalorder %s17, 3
      %p61 = por %p59, %p60
      %p63 = scmp.ne.s32.totalorder %s48, %s62
      %p64 = scmp.eq.s32.totalorder %s17, 0
      %p65 = por %p63, %p64
      %s66 = ssub.s32 %s11, %s18
      %p67 = scmp.eq.s32.totalorder %s66, 0
      %s69 = sadd.s32 %s68, 1
      %s70 = scalar_select %p67, %s68, %s69
      %p73 = pneg %p67
      %p74 = scmp.eq.s32.totalorder %s11, 3
      %p75 = por %p73, %p74
      %p76 = scmp.ne.s32.totalorder %s68, %s71
      %p77 = scmp.eq.s32.totalorder %s11, 0
      %p78 = por %p76, %p77
      %p79 = scmp.ne.s32.totalorder %s68, %s71
      %p80 = scmp.eq.s32.totalorder %s16, 3
      %p81 = por %p79, %p80
      %p82 = scmp.ne.s32.totalorder %s71, %s72
      %p83 = scmp.eq.s32.totalorder %s16, 0
      %p84 = por %p82, %p83
      %p85 = scmp.ne.s32.totalorder %s71, %s72
      %p86 = scmp.eq.s32.totalorder %s17, 3
      %p87 = por %p85, %p86
      %p89 = scmp.ne.s32.totalorder %s72, %s88
      %p90 = scmp.eq.s32.totalorder %s17, 0
      %p91 = por %p89, %p90
      %p92 = scmp.le.s32.totalorder 1, %s11
      %p93 = scmp.lt.s32.totalorder %s11, 5
      %p94 = pnand %p92, %p93
      %p95 = pneg %p94
      // Predicated region
      $region9: #{tpu_custom_call.1} parent=5 // pred_check
        _
      $region10: #{tpu_custom_call.1} parent=5 // pred_check_branch
        %97 = sbr.rel (%p94) target = $region12
      $region11: #{tpu_custom_call.1} parent=5 // pred_region
        %s98 = ssub.s32 %s11, 1
        // Predicated region
        $region13: #{tpu_custom_call.1} parent=11 // pred_check
          %p99 = pneg %p58
        $region14: #{tpu_custom_call.1} parent=11 // pred_check_branch
          %101 = sbr.rel (%p99) target = $region16
        $region15: #{tpu_custom_call.1} parent=11 // pred_region
          _
        $region16: #{tpu_custom_call.1} parent=11 // pred_fallthru
          _
      $region12: #{tpu_custom_call.1} parent=5 // pred_fallthru
        _
      %p102 = scmp.lt.s32.totalorder %s11, 4
      // Predicated region
      $region17: #{tpu_custom_call.1} parent=5 // pred_check
        %p103 = pneg %p102
      $region18: #{tpu_custom_call.1} parent=5 // pred_check_branch
        %105 = sbr.rel (%p103) target = $region20
      $region19: #{tpu_custom_call.1} parent=5 // pred_region
        // Predicated region
        $region21: #{tpu_custom_call.1} parent=19 // pred_check
          %p106 = pneg %p31
        $region22: #{tpu_custom_call.1} parent=19 // pred_check_branch
          %108 = sbr.rel (%p106) target = $region24
        $region23: #{tpu_custom_call.1} parent=19 // pred_region
          %s109 = smul.u32 8, %s11
          %p110 = scmp.lt.s32.totalorder %s109, 31
          %s111 = scalar_select %p110, %s109, 31
          %s112 = smul.addr %s111, 16
          %s113 = smul.addr %s112, 8
          %s114 = scalar_lea.vmem %s0, %s113
          %s115 = smul.u32 8, %s11
        $region24: #{tpu_custom_call.1} parent=19 // pred_fallthru
          _
      $region20: #{tpu_custom_call.1} parent=5 // pred_fallthru
        _
      %p116 = scmp.le.s32.totalorder 1, %s11
      %p117 = scmp.lt.s32.totalorder %s11, 5
      %p118 = pnand %p116, %p117
      %p119 = pneg %p118
      // Predicated region
      $region25: #{tpu_custom_call.1} parent=5 // pred_check
        _
      $region26: #{tpu_custom_call.1} parent=5 // pred_check_branch
        %121 = sbr.rel (%p118) target = $region28
      $region27: #{tpu_custom_call.1} parent=5 // pred_region
        %s122 = ssub.s32 %s11, 1
        %s123 = smul.u32 8, %s16
        %p124 = scmp.lt.s32.totalorder %s123, 31
        %s125 = scalar_select %p124, %s123, 31
        %s126 = smul.addr %s125, 16
        %s127 = smul.addr %s126, 8
        %s128 = scalar_lea.vmem %s0, %s127
        %p129 = pneg %p37
        %p130 = pneg %p34
        %p131 = pneg %p58
        %p132 = pneg %p55
        %p133 = pneg %p84
        %p134 = pneg %p81
        %s135 = sand.u32 %s71, 1
        %s136 = scalar_lea.sflag [#allocation3], %s135
        %s137 = sand.u32 %s71, 1
        %s138 = smul.addr %s137, 16
        %s139 = scalar_lea.vmem [#allocation2], %s138
        %s140 = smul.u32 8, %s16
        %p141 = scmp.lt.s32.totalorder %s140, 31
        %s142 = scalar_select %p141, %s140, 31
        %s143 = smul.addr %s142, 16
        %s144 = smul.addr %s143, 8
        %s145 = scalar_lea.vmem %s0, %s144
        %s146 = smul.u32 8, %s16
        %v148 = vld [vmem:[%s145] sm:$0xff]
        %v149 = vld [vmem:[%s145 + $0x8] sm:$0xff]
        %v150 = vld [vmem:[%s145 + $0x10] sm:$0xff]
        %v151 = vld [vmem:[%s145 + $0x18] sm:$0xff]
        %v152 = vld [vmem:[%s145 + $0x20] sm:$0xff]
        %v153 = vld [vmem:[%s145 + $0x28] sm:$0xff]
        %v154 = vld [vmem:[%s145 + $0x30] sm:$0xff]
        %v155 = vld [vmem:[%s145 + $0x38] sm:$0xff]
        %v156 = vld [vmem:[%s145 + $0x40] sm:$0xff]
        %v157 = vld [vmem:[%s145 + $0x48] sm:$0xff]
        %v158 = vld [vmem:[%s145 + $0x50] sm:$0xff]
        %v159 = vld [vmem:[%s145 + $0x58] sm:$0xff]
        %v160 = vld [vmem:[%s145 + $0x60] sm:$0xff]
        %v161 = vld [vmem:[%s145 + $0x68] sm:$0xff]
        %v162 = vld [vmem:[%s145 + $0x70] sm:$0xff]
        %v163 = vld [vmem:[%s145 + $0x78] sm:$0xff]
        %v164 = vld [vmem:[%s145 + $0x80] sm:$0xff]
        %v165 = vld [vmem:[%s145 + $0x88] sm:$0xff]
        %v166 = vld [vmem:[%s145 + $0x90] sm:$0xff]
        %v167 = vld [vmem:[%s145 + $0x98] sm:$0xff]
        %v168 = vld [vmem:[%s145 + $0xa0] sm:$0xff]
        %v169 = vld [vmem:[%s145 + $0xa8] sm:$0xff]
        %v170 = vld [vmem:[%s145 + $0xb0] sm:$0xff]
        %v171 = vld [vmem:[%s145 + $0xb8] sm:$0xff]
        %v172 = vld [vmem:[%s145 + $0xc0] sm:$0xff]
        %v173 = vld [vmem:[%s145 + $0xc8] sm:$0xff]
        %v174 = vld [vmem:[%s145 + $0xd0] sm:$0xff]
        %v175 = vld [vmem:[%s145 + $0xd8] sm:$0xff]
        %v176 = vld [vmem:[%s145 + $0xe0] sm:$0xff]
        %v177 = vld [vmem:[%s145 + $0xe8] sm:$0xff]
        %v178 = vld [vmem:[%s145 + $0xf0] sm:$0xff]
        %v179 = vld [vmem:[%s145 + $0xf8] sm:$0xff]
        %v180 = vld [vmem:[%s145 + $0x100] sm:$0xff]
        %v181 = vld [vmem:[%s145 + $0x108] sm:$0xff]
        %v182 = vld [vmem:[%s145 + $0x110] sm:$0xff]
        %v183 = vld [vmem:[%s145 + $0x118] sm:$0xff]
        %v184 = vld [vmem:[%s145 + $0x120] sm:$0xff]
        %v185 = vld [vmem:[%s145 + $0x128] sm:$0xff]
        %v186 = vld [vmem:[%s145 + $0x130] sm:$0xff]
        %v187 = vld [vmem:[%s145 + $0x138] sm:$0xff]
        %v188 = vld [vmem:[%s145 + $0x140] sm:$0xff]
        %v189 = vld [vmem:[%s145 + $0x148] sm:$0xff]
        %v190 = vld [vmem:[%s145 + $0x150] sm:$0xff]
        %v191 = vld [vmem:[%s145 + $0x158] sm:$0xff]
        %v192 = vld [vmem:[%s145 + $0x160] sm:$0xff]
        %v193 = vld [vmem:[%s145 + $0x168] sm:$0xff]
        %v194 = vld [vmem:[%s145 + $0x170] sm:$0xff]
        %v195 = vld [vmem:[%s145 + $0x178] sm:$0xff]
        %v196 = vld [vmem:[%s145 + $0x180] sm:$0xff]
        %v197 = vld [vmem:[%s145 + $0x188] sm:$0xff]
        %v198 = vld [vmem:[%s145 + $0x190] sm:$0xff]
        %v199 = vld [vmem:[%s145 + $0x198] sm:$0xff]
        %v200 = vld [vmem:[%s145 + $0x1a0] sm:$0xff]
        %v201 = vld [vmem:[%s145 + $0x1a8] sm:$0xff]
        %v202 = vld [vmem:[%s145 + $0x1b0] sm:$0xff]
        %v203 = vld [vmem:[%s145 + $0x1b8] sm:$0xff]
        %v204 = vld [vmem:[%s145 + $0x1c0] sm:$0xff]
        %v205 = vld [vmem:[%s145 + $0x1c8] sm:$0xff]
        %v206 = vld [vmem:[%s145 + $0x1d0] sm:$0xff]
        %v207 = vld [vmem:[%s145 + $0x1d8] sm:$0xff]
        %v208 = vld [vmem:[%s145 + $0x1e0] sm:$0xff]
        %v209 = vld [vmem:[%s145 + $0x1e8] sm:$0xff]
        %v210 = vld [vmem:[%s145 + $0x1f0] sm:$0xff]
        %v211 = vld [vmem:[%s145 + $0x1f8] sm:$0xff]
        %v212 = vld [vmem:[%s145 + $0x200] sm:$0xff]
        %v213 = vld [vmem:[%s145 + $0x208] sm:$0xff]
        %v214 = vld [vmem:[%s145 + $0x210] sm:$0xff]
        %v215 = vld [vmem:[%s145 + $0x218] sm:$0xff]
        %v216 = vld [vmem:[%s145 + $0x220] sm:$0xff]
        %v217 = vld [vmem:[%s145 + $0x228] sm:$0xff]
        %v218 = vld [vmem:[%s145 + $0x230] sm:$0xff]
        %v219 = vld [vmem:[%s145 + $0x238] sm:$0xff]
        %v220 = vld [vmem:[%s145 + $0x240] sm:$0xff]
        %v221 = vld [vmem:[%s145 + $0x248] sm:$0xff]
        %v222 = vld [vmem:[%s145 + $0x250] sm:$0xff]
        %v223 = vld [vmem:[%s145 + $0x258] sm:$0xff]
        %v224 = vld [vmem:[%s145 + $0x260] sm:$0xff]
        %v225 = vld [vmem:[%s145 + $0x268] sm:$0xff]
        %v226 = vld [vmem:[%s145 + $0x270] sm:$0xff]
        %v227 = vld [vmem:[%s145 + $0x278] sm:$0xff]
        %v228 = vld [vmem:[%s145 + $0x280] sm:$0xff]
        %v229 = vld [vmem:[%s145 + $0x288] sm:$0xff]
        %v230 = vld [vmem:[%s145 + $0x290] sm:$0xff]
        %v231 = vld [vmem:[%s145 + $0x298] sm:$0xff]
        %v232 = vld [vmem:[%s145 + $0x2a0] sm:$0xff]
        %v233 = vld [vmem:[%s145 + $0x2a8] sm:$0xff]
        %v234 = vld [vmem:[%s145 + $0x2b0] sm:$0xff]
        %v235 = vld [vmem:[%s145 + $0x2b8] sm:$0xff]
        %v236 = vld [vmem:[%s145 + $0x2c0] sm:$0xff]
        %v237 = vld [vmem:[%s145 + $0x2c8] sm:$0xff]
        %v238 = vld [vmem:[%s145 + $0x2d0] sm:$0xff]
        %v239 = vld [vmem:[%s145 + $0x2d8] sm:$0xff]
        %v240 = vld [vmem:[%s145 + $0x2e0] sm:$0xff]
        %v241 = vld [vmem:[%s145 + $0x2e8] sm:$0xff]
        %v242 = vld [vmem:[%s145 + $0x2f0] sm:$0xff]
        %v243 = vld [vmem:[%s145 + $0x2f8] sm:$0xff]
        %v244 = vld [vmem:[%s145 + $0x300] sm:$0xff]
        %v245 = vld [vmem:[%s145 + $0x308] sm:$0xff]
        %v246 = vld [vmem:[%s145 + $0x310] sm:$0xff]
        %v247 = vld [vmem:[%s145 + $0x318] sm:$0xff]
        %v248 = vld [vmem:[%s145 + $0x320] sm:$0xff]
        %v249 = vld [vmem:[%s145 + $0x328] sm:$0xff]
        %v250 = vld [vmem:[%s145 + $0x330] sm:$0xff]
        %v251 = vld [vmem:[%s145 + $0x338] sm:$0xff]
        %v252 = vld [vmem:[%s145 + $0x340] sm:$0xff]
        %v253 = vld [vmem:[%s145 + $0x348] sm:$0xff]
        %v254 = vld [vmem:[%s145 + $0x350] sm:$0xff]
        %v255 = vld [vmem:[%s145 + $0x358] sm:$0xff]
        %v256 = vld [vmem:[%s145 + $0x360] sm:$0xff]
        %v257 = vld [vmem:[%s145 + $0x368] sm:$0xff]
        %v258 = vld [vmem:[%s145 + $0x370] sm:$0xff]
        %v259 = vld [vmem:[%s145 + $0x378] sm:$0xff]
        %v260 = vld [vmem:[%s145 + $0x380] sm:$0xff]
        %v261 = vld [vmem:[%s145 + $0x388] sm:$0xff]
        %v262 = vld [vmem:[%s145 + $0x390] sm:$0xff]
        %v263 = vld [vmem:[%s145 + $0x398] sm:$0xff]
        %v264 = vld [vmem:[%s145 + $0x3a0] sm:$0xff]
        %v265 = vld [vmem:[%s145 + $0x3a8] sm:$0xff]
        %v266 = vld [vmem:[%s145 + $0x3b0] sm:$0xff]
        %v267 = vld [vmem:[%s145 + $0x3b8] sm:$0xff]
        %v268 = vld [vmem:[%s145 + $0x3c0] sm:$0xff]
        %v269 = vld [vmem:[%s145 + $0x3c8] sm:$0xff]
        %v270 = vld [vmem:[%s145 + $0x3d0] sm:$0xff]
        %v271 = vld [vmem:[%s145 + $0x3d8] sm:$0xff]
        %v272 = vld [vmem:[%s145 + $0x3e0] sm:$0xff]
        %v273 = vld [vmem:[%s145 + $0x3e8] sm:$0xff]
        %v274 = vld [vmem:[%s145 + $0x3f0] sm:$0xff]
        %v275 = vld [vmem:[%s145 + $0x3f8] sm:$0xff]
        %vm276 = vcmask 130048
        %v277 = vsel %vm276, %v148, 0.0
        %278 = vadd.xlane.f32.xlu0 %v277
        %v279 = vpop.xlane.xlu0 %278
        %v280 = vsel %vm276, %v149, 0.0
        %281 = vadd.xlane.f32.xlu0 %v280
        %v282 = vpop.xlane.xlu0 %281
        %v283 = vsel %vm276, %v150, 0.0
        %284 = vadd.xlane.f32.xlu0 %v283
        %v285 = vpop.xlane.xlu0 %284
        %v286 = vsel %vm276, %v151, 0.0
        %287 = vadd.xlane.f32.xlu0 %v286
        %v288 = vpop.xlane.xlu0 %287
        %v289 = vsel %vm276, %v152, 0.0
        %290 = vadd.xlane.f32.xlu0 %v289
        %v291 = vpop.xlane.xlu0 %290
        %v292 = vsel %vm276, %v153, 0.0
        %293 = vadd.xlane.f32.xlu0 %v292
        %v294 = vpop.xlane.xlu0 %293
        %v295 = vsel %vm276, %v154, 0.0
        %296 = vadd.xlane.f32.xlu0 %v295
        %v297 = vpop.xlane.xlu0 %296
        %v298 = vsel %vm276, %v155, 0.0
        %299 = vadd.xlane.f32.xlu0 %v298
        %v300 = vpop.xlane.xlu0 %299
        %v301 = vsel %vm276, %v156, 0.0
        %302 = vadd.xlane.f32.xlu0 %v301
        %v303 = vpop.xlane.xlu0 %302
        %v304 = vsel %vm276, %v157, 0.0
        %305 = vadd.xlane.f32.xlu0 %v304
        %v306 = vpop.xlane.xlu0 %305
        %v307 = vsel %vm276, %v158, 0.0
        %308 = vadd.xlane.f32.xlu0 %v307
        %v309 = vpop.xlane.xlu0 %308
        %v310 = vsel %vm276, %v159, 0.0
        %311 = vadd.xlane.f32.xlu0 %v310
        %v312 = vpop.xlane.xlu0 %311
        %v313 = vsel %vm276, %v160, 0.0
        %314 = vadd.xlane.f32.xlu0 %v313
        %v315 = vpop.xlane.xlu0 %314
        %v316 = vsel %vm276, %v161, 0.0
        %317 = vadd.xlane.f32.xlu0 %v316
        %v318 = vpop.xlane.xlu0 %317
        %v319 = vsel %vm276, %v162, 0.0
        %320 = vadd.xlane.f32.xlu0 %v319
        %v321 = vpop.xlane.xlu0 %320
        %v322 = vsel %vm276, %v163, 0.0
        %323 = vadd.xlane.f32.xlu0 %v322
        %v324 = vpop.xlane.xlu0 %323
        %v325 = vsel %vm276, %v164, 0.0
        %326 = vadd.xlane.f32.xlu0 %v325
        %v327 = vpop.xlane.xlu0 %326
        %v328 = vsel %vm276, %v165, 0.0
        %329 = vadd.xlane.f32.xlu0 %v328
        %v330 = vpop.xlane.xlu0 %329
        %v331 = vsel %vm276, %v166, 0.0
        %332 = vadd.xlane.f32.xlu0 %v331
        %v333 = vpop.xlane.xlu0 %332
        %v334 = vsel %vm276, %v167, 0.0
        %335 = vadd.xlane.f32.xlu0 %v334
        %v336 = vpop.xlane.xlu0 %335
        %v337 = vsel %vm276, %v168, 0.0
        %338 = vadd.xlane.f32.xlu0 %v337
        %v339 = vpop.xlane.xlu0 %338
        %v340 = vsel %vm276, %v169, 0.0
        %341 = vadd.xlane.f32.xlu0 %v340
        %v342 = vpop.xlane.xlu0 %341
        %v343 = vsel %vm276, %v170, 0.0
        %344 = vadd.xlane.f32.xlu0 %v343
        %v345 = vpop.xlane.xlu0 %344
        %v346 = vsel %vm276, %v171, 0.0
        %347 = vadd.xlane.f32.xlu0 %v346
        %v348 = vpop.xlane.xlu0 %347
        %v349 = vsel %vm276, %v172, 0.0
        %350 = vadd.xlane.f32.xlu0 %v349
        %v351 = vpop.xlane.xlu0 %350
        %v352 = vsel %vm276, %v173, 0.0
        %353 = vadd.xlane.f32.xlu0 %v352
        %v354 = vpop.xlane.xlu0 %353
        %v355 = vsel %vm276, %v174, 0.0
        %356 = vadd.xlane.f32.xlu0 %v355
        %v357 = vpop.xlane.xlu0 %356
        %v358 = vsel %vm276, %v175, 0.0
        %359 = vadd.xlane.f32.xlu0 %v358
        %v360 = vpop.xlane.xlu0 %359
        %v361 = vsel %vm276, %v176, 0.0
        %362 = vadd.xlane.f32.xlu0 %v361
        %v363 = vpop.xlane.xlu0 %362
        %v364 = vsel %vm276, %v177, 0.0
        %365 = vadd.xlane.f32.xlu0 %v364
        %v366 = vpop.xlane.xlu0 %365
        %v367 = vsel %vm276, %v178, 0.0
        %368 = vadd.xlane.f32.xlu0 %v367
        %v369 = vpop.xlane.xlu0 %368
        %v370 = vsel %vm276, %v179, 0.0
        %371 = vadd.xlane.f32.xlu0 %v370
        %v372 = vpop.xlane.xlu0 %371
        %v373 = vsel %vm276, %v180, 0.0
        %374 = vadd.xlane.f32.xlu0 %v373
        %v375 = vpop.xlane.xlu0 %374
        %v376 = vsel %vm276, %v181, 0.0
        %377 = vadd.xlane.f32.xlu0 %v376
        %v378 = vpop.xlane.xlu0 %377
        %v379 = vsel %vm276, %v182, 0.0
        %380 = vadd.xlane.f32.xlu0 %v379
        %v381 = vpop.xlane.xlu0 %380
        %v382 = vsel %vm276, %v183, 0.0
        %383 = vadd.xlane.f32.xlu0 %v382
        %v384 = vpop.xlane.xlu0 %383
        %v385 = vsel %vm276, %v184, 0.0
        %386 = vadd.xlane.f32.xlu0 %v385
        %v387 = vpop.xlane.xlu0 %386
        %v388 = vsel %vm276, %v185, 0.0
        %389 = vadd.xlane.f32.xlu0 %v388
        %v390 = vpop.xlane.xlu0 %389
        %v391 = vsel %vm276, %v186, 0.0
        %392 = vadd.xlane.f32.xlu0 %v391
        %v393 = vpop.xlane.xlu0 %392
        %v394 = vsel %vm276, %v187, 0.0
        %395 = vadd.xlane.f32.xlu0 %v394
        %v396 = vpop.xlane.xlu0 %395
        %v397 = vsel %vm276, %v188, 0.0
        %398 = vadd.xlane.f32.xlu0 %v397
        %v399 = vpop.xlane.xlu0 %398
        %v400 = vsel %vm276, %v189, 0.0
        %401 = vadd.xlane.f32.xlu0 %v400
        %v402 = vpop.xlane.xlu0 %401
        %v403 = vsel %vm276, %v190, 0.0
        %404 = vadd.xlane.f32.xlu0 %v403
        %v405 = vpop.xlane.xlu0 %404
        %v406 = vsel %vm276, %v191, 0.0
        %407 = vadd.xlane.f32.xlu0 %v406
        %v408 = vpop.xlane.xlu0 %407
        %v409 = vsel %vm276, %v192, 0.0
        %410 = vadd.xlane.f32.xlu0 %v409
        %v411 = vpop.xlane.xlu0 %410
        %v412 = vsel %vm276, %v193, 0.0
        %413 = vadd.xlane.f32.xlu0 %v412
        %v414 = vpop.xlane.xlu0 %413
        %v415 = vsel %vm276, %v194, 0.0
        %416 = vadd.xlane.f32.xlu0 %v415
        %v417 = vpop.xlane.xlu0 %416
        %v418 = vsel %vm276, %v195, 0.0
        %419 = vadd.xlane.f32.xlu0 %v418
        %v420 = vpop.xlane.xlu0 %419
        %v421 = vsel %vm276, %v196, 0.0
        %422 = vadd.xlane.f32.xlu0 %v421
        %v423 = vpop.xlane.xlu0 %422
        %v424 = vsel %vm276, %v197, 0.0
        %425 = vadd.xlane.f32.xlu0 %v424
        %v426 = vpop.xlane.xlu0 %425
        %v427 = vsel %vm276, %v198, 0.0
        %428 = vadd.xlane.f32.xlu0 %v427
        %v429 = vpop.xlane.xlu0 %428
        %v430 = vsel %vm276, %v199, 0.0
        %431 = vadd.xlane.f32.xlu0 %v430
        %v432 = vpop.xlane.xlu0 %431
        %v433 = vsel %vm276, %v200, 0.0
        %434 = vadd.xlane.f32.xlu0 %v433
        %v435 = vpop.xlane.xlu0 %434
        %v436 = vsel %vm276, %v201, 0.0
        %437 = vadd.xlane.f32.xlu0 %v436
        %v438 = vpop.xlane.xlu0 %437
        %v439 = vsel %vm276, %v202, 0.0
        %440 = vadd.xlane.f32.xlu0 %v439
        %v441 = vpop.xlane.xlu0 %440
        %v442 = vsel %vm276, %v203, 0.0
        %443 = vadd.xlane.f32.xlu0 %v442
        %v444 = vpop.xlane.xlu0 %443
        %v445 = vsel %vm276, %v204, 0.0
        %446 = vadd.xlane.f32.xlu0 %v445
        %v447 = vpop.xlane.xlu0 %446
        %v448 = vsel %vm276, %v205, 0.0
        %449 = vadd.xlane.f32.xlu0 %v448
        %v450 = vpop.xlane.xlu0 %449
        %v451 = vsel %vm276, %v206, 0.0
        %452 = vadd.xlane.f32.xlu0 %v451
        %v453 = vpop.xlane.xlu0 %452
        %v454 = vsel %vm276, %v207, 0.0
        %455 = vadd.xlane.f32.xlu0 %v454
        %v456 = vpop.xlane.xlu0 %455
        %v457 = vsel %vm276, %v208, 0.0
        %458 = vadd.xlane.f32.xlu0 %v457
        %v459 = vpop.xlane.xlu0 %458
        %v460 = vsel %vm276, %v209, 0.0
        %461 = vadd.xlane.f32.xlu0 %v460
        %v462 = vpop.xlane.xlu0 %461
        %v463 = vsel %vm276, %v210, 0.0
        %464 = vadd.xlane.f32.xlu0 %v463
        %v465 = vpop.xlane.xlu0 %464
        %v466 = vsel %vm276, %v211, 0.0
        %467 = vadd.xlane.f32.xlu0 %v466
        %v468 = vpop.xlane.xlu0 %467
        %v469 = vsel %vm276, %v212, 0.0
        %470 = vadd.xlane.f32.xlu0 %v469
        %v471 = vpop.xlane.xlu0 %470
        %v472 = vsel %vm276, %v213, 0.0
        %473 = vadd.xlane.f32.xlu0 %v472
        %v474 = vpop.xlane.xlu0 %473
        %v475 = vsel %vm276, %v214, 0.0
        %476 = vadd.xlane.f32.xlu0 %v475
        %v477 = vpop.xlane.xlu0 %476
        %v478 = vsel %vm276, %v215, 0.0
        %479 = vadd.xlane.f32.xlu0 %v478
        %v480 = vpop.xlane.xlu0 %479
        %v481 = vsel %vm276, %v216, 0.0
        %482 = vadd.xlane.f32.xlu0 %v481
        %v483 = vpop.xlane.xlu0 %482
        %v484 = vsel %vm276, %v217, 0.0
        %485 = vadd.xlane.f32.xlu0 %v484
        %v486 = vpop.xlane.xlu0 %485
        %v487 = vsel %vm276, %v218, 0.0
        %488 = vadd.xlane.f32.xlu0 %v487
        %v489 = vpop.xlane.xlu0 %488
        %v490 = vsel %vm276, %v219, 0.0
        %491 = vadd.xlane.f32.xlu0 %v490
        %v492 = vpop.xlane.xlu0 %491
        %v493 = vsel %vm276, %v220, 0.0
        %494 = vadd.xlane.f32.xlu0 %v493
        %v495 = vpop.xlane.xlu0 %494
        %v496 = vsel %vm276, %v221, 0.0
        %497 = vadd.xlane.f32.xlu0 %v496
        %v498 = vpop.xlane.xlu0 %497
        %v499 = vsel %vm276, %v222, 0.0
        %500 = vadd.xlane.f32.xlu0 %v499
        %v501 = vpop.xlane.xlu0 %500
        %v502 = vsel %vm276, %v223, 0.0
        %503 = vadd.xlane.f32.xlu0 %v502
        %v504 = vpop.xlane.xlu0 %503
        %v505 = vsel %vm276, %v224, 0.0
        %506 = vadd.xlane.f32.xlu0 %v505
        %v507 = vpop.xlane.xlu0 %506
        %v508 = vsel %vm276, %v225, 0.0
        %509 = vadd.xlane.f32.xlu0 %v508
        %v510 = vpop.xlane.xlu0 %509
        %v511 = vsel %vm276, %v226, 0.0
        %512 = vadd.xlane.f32.xlu0 %v511
        %v513 = vpop.xlane.xlu0 %512
        %v514 = vsel %vm276, %v227, 0.0
        %515 = vadd.xlane.f32.xlu0 %v514
        %v516 = vpop.xlane.xlu0 %515
        %v517 = vsel %vm276, %v228, 0.0
        %518 = vadd.xlane.f32.xlu0 %v517
        %v519 = vpop.xlane.xlu0 %518
        %v520 = vsel %vm276, %v229, 0.0
        %521 = vadd.xlane.f32.xlu0 %v520
        %v522 = vpop.xlane.xlu0 %521
        %v523 = vsel %vm276, %v230, 0.0
        %524 = vadd.xlane.f32.xlu0 %v523
        %v525 = vpop.xlane.xlu0 %524
        %v526 = vsel %vm276, %v231, 0.0
        %527 = vadd.xlane.f32.xlu0 %v526
        %v528 = vpop.xlane.xlu0 %527
        %v529 = vsel %vm276, %v232, 0.0
        %530 = vadd.xlane.f32.xlu0 %v529
        %v531 = vpop.xlane.xlu0 %530
        %v532 = vsel %vm276, %v233, 0.0
        %533 = vadd.xlane.f32.xlu0 %v532
        %v534 = vpop.xlane.xlu0 %533
        %v535 = vsel %vm276, %v234, 0.0
        %536 = vadd.xlane.f32.xlu0 %v535
        %v537 = vpop.xlane.xlu0 %536
        %v538 = vsel %vm276, %v235, 0.0
        %539 = vadd.xlane.f32.xlu0 %v538
        %v540 = vpop.xlane.xlu0 %539
        %v541 = vsel %vm276, %v236, 0.0
        %542 = vadd.xlane.f32.xlu0 %v541
        %v543 = vpop.xlane.xlu0 %542
        %v544 = vsel %vm276, %v237, 0.0
        %545 = vadd.xlane.f32.xlu0 %v544
        %v546 = vpop.xlane.xlu0 %545
        %v547 = vsel %vm276, %v238, 0.0
        %548 = vadd.xlane.f32.xlu0 %v547
        %v549 = vpop.xlane.xlu0 %548
        %v550 = vsel %vm276, %v239, 0.0
        %551 = vadd.xlane.f32.xlu0 %v550
        %v552 = vpop.xlane.xlu0 %551
        %v553 = vsel %vm276, %v240, 0.0
        %554 = vadd.xlane.f32.xlu0 %v553
        %v555 = vpop.xlane.xlu0 %554
        %v556 = vsel %vm276, %v241, 0.0
        %557 = vadd.xlane.f32.xlu0 %v556
        %v558 = vpop.xlane.xlu0 %557
        %v559 = vsel %vm276, %v242, 0.0
        %560 = vadd.xlane.f32.xlu0 %v559
        %v561 = vpop.xlane.xlu0 %560
        %v562 = vsel %vm276, %v243, 0.0
        %563 = vadd.xlane.f32.xlu0 %v562
        %v564 = vpop.xlane.xlu0 %563
        %v565 = vsel %vm276, %v244, 0.0
        %566 = vadd.xlane.f32.xlu0 %v565
        %v567 = vpop.xlane.xlu0 %566
        %v568 = vsel %vm276, %v245, 0.0
        %569 = vadd.xlane.f32.xlu0 %v568
        %v570 = vpop.xlane.xlu0 %569
        %v571 = vsel %vm276, %v246, 0.0
        %572 = vadd.xlane.f32.xlu0 %v571
        %v573 = vpop.xlane.xlu0 %572
        %v574 = vsel %vm276, %v247, 0.0
        %575 = vadd.xlane.f32.xlu0 %v574
        %v576 = vpop.xlane.xlu0 %575
        %v577 = vsel %vm276, %v248, 0.0
        %578 = vadd.xlane.f32.xlu0 %v577
        %v579 = vpop.xlane.xlu0 %578
        %v580 = vsel %vm276, %v249, 0.0
        %581 = vadd.xlane.f32.xlu0 %v580
        %v582 = vpop.xlane.xlu0 %581
        %v583 = vsel %vm276, %v250, 0.0
        %584 = vadd.xlane.f32.xlu0 %v583
        %v585 = vpop.xlane.xlu0 %584
        %v586 = vsel %vm276, %v251, 0.0
        %587 = vadd.xlane.f32.xlu0 %v586
        %v588 = vpop.xlane.xlu0 %587
        %v589 = vsel %vm276, %v252, 0.0
        %590 = vadd.xlane.f32.xlu0 %v589
        %v591 = vpop.xlane.xlu0 %590
        %v592 = vsel %vm276, %v253, 0.0
        %593 = vadd.xlane.f32.xlu0 %v592
        %v594 = vpop.xlane.xlu0 %593
        %v595 = vsel %vm276, %v254, 0.0
        %596 = vadd.xlane.f32.xlu0 %v595
        %v597 = vpop.xlane.xlu0 %596
        %v598 = vsel %vm276, %v255, 0.0
        %599 = vadd.xlane.f32.xlu0 %v598
        %v600 = vpop.xlane.xlu0 %599
        %v601 = vsel %vm276, %v256, 0.0
        %602 = vadd.xlane.f32.xlu0 %v601
        %v603 = vpop.xlane.xlu0 %602
        %v604 = vsel %vm276, %v257, 0.0
        %605 = vadd.xlane.f32.xlu0 %v604
        %v606 = vpop.xlane.xlu0 %605
        %v607 = vsel %vm276, %v258, 0.0
        %608 = vadd.xlane.f32.xlu0 %v607
        %v609 = vpop.xlane.xlu0 %608
        %v610 = vsel %vm276, %v259, 0.0
        %611 = vadd.xlane.f32.xlu0 %v610
        %v612 = vpop.xlane.xlu0 %611
        %v613 = vsel %vm276, %v260, 0.0
        %614 = vadd.xlane.f32.xlu0 %v613
        %v615 = vpop.xlane.xlu0 %614
        %v616 = vsel %vm276, %v261, 0.0
        %617 = vadd.xlane.f32.xlu0 %v616
        %v618 = vpop.xlane.xlu0 %617
        %v619 = vsel %vm276, %v262, 0.0
        %620 = vadd.xlane.f32.xlu0 %v619
        %v621 = vpop.xlane.xlu0 %620
        %v622 = vsel %vm276, %v263, 0.0
        %623 = vadd.xlane.f32.xlu0 %v622
        %v624 = vpop.xlane.xlu0 %623
        %v625 = vsel %vm276, %v264, 0.0
        %626 = vadd.xlane.f32.xlu0 %v625
        %v627 = vpop.xlane.xlu0 %626
        %v628 = vsel %vm276, %v265, 0.0
        %629 = vadd.xlane.f32.xlu0 %v628
        %v630 = vpop.xlane.xlu0 %629
        %v631 = vsel %vm276, %v266, 0.0
        %632 = vadd.xlane.f32.xlu0 %v631
        %v633 = vpop.xlane.xlu0 %632
        %v634 = vsel %vm276, %v267, 0.0
        %635 = vadd.xlane.f32.xlu0 %v634
        %v636 = vpop.xlane.xlu0 %635
        %v637 = vsel %vm276, %v268, 0.0
        %638 = vadd.xlane.f32.xlu0 %v637
        %v639 = vpop.xlane.xlu0 %638
        %v640 = vsel %vm276, %v269, 0.0
        %641 = vadd.xlane.f32.xlu0 %v640
        %v642 = vpop.xlane.xlu0 %641
        %v643 = vsel %vm276, %v270, 0.0
        %644 = vadd.xlane.f32.xlu0 %v643
        %v645 = vpop.xlane.xlu0 %644
        %v646 = vsel %vm276, %v271, 0.0
        %647 = vadd.xlane.f32.xlu0 %v646
        %v648 = vpop.xlane.xlu0 %647
        %v649 = vsel %vm276, %v272, 0.0
        %650 = vadd.xlane.f32.xlu0 %v649
        %v651 = vpop.xlane.xlu0 %650
        %v652 = vsel %vm276, %v273, 0.0
        %653 = vadd.xlane.f32.xlu0 %v652
        %v654 = vpop.xlane.xlu0 %653
        %v655 = vsel %vm276, %v274, 0.0
        %656 = vadd.xlane.f32.xlu0 %v655
        %v657 = vpop.xlane.xlu0 %656
        %v658 = vsel %vm276, %v275, 0.0
        %659 = vadd.xlane.f32.xlu0 %v658
        %v660 = vpop.xlane.xlu0 %659
        %v661 = vpack.c.bf16 %v282, %v279
        %v662 = vpack.c.bf16 %v288, %v285
        %v663 = vpack.c.bf16 %v294, %v291
        %v664 = vpack.c.bf16 %v300, %v297
        %v665 = vpack.c.bf16 %v306, %v303
        %v666 = vpack.c.bf16 %v312, %v309
        %v667 = vpack.c.bf16 %v318, %v315
        %v668 = vpack.c.bf16 %v324, %v321
        %v669 = vpack.c.bf16 %v330, %v327
        %v670 = vpack.c.bf16 %v336, %v333
        %v671 = vpack.c.bf16 %v342, %v339
        %v672 = vpack.c.bf16 %v348, %v345
        %v673 = vpack.c.bf16 %v354, %v351
        %v674 = vpack.c.bf16 %v360, %v357
        %v675 = vpack.c.bf16 %v366, %v363
        %v676 = vpack.c.bf16 %v372, %v369
        %v677 = vpack.c.bf16 %v378, %v375
        %v678 = vpack.c.bf16 %v384, %v381
        %v679 = vpack.c.bf16 %v390, %v387
        %v680 = vpack.c.bf16 %v396, %v393
        %v681 = vpack.c.bf16 %v402, %v399
        %v682 = vpack.c.bf16 %v408, %v405
        %v683 = vpack.c.bf16 %v414, %v411
        %v684 = vpack.c.bf16 %v420, %v417
        %v685 = vpack.c.bf16 %v426, %v423
        %v686 = vpack.c.bf16 %v432, %v429
        %v687 = vpack.c.bf16 %v438, %v435
        %v688 = vpack.c.bf16 %v444, %v441
        %v689 = vpack.c.bf16 %v450, %v447
        %v690 = vpack.c.bf16 %v456, %v453
        %v691 = vpack.c.bf16 %v462, %v459
        %v692 = vpack.c.bf16 %v468, %v465
        %v693 = vpack.c.bf16 %v474, %v471
        %v694 = vpack.c.bf16 %v480, %v477
        %v695 = vpack.c.bf16 %v486, %v483
        %v696 = vpack.c.bf16 %v492, %v489
        %v697 = vpack.c.bf16 %v498, %v495
        %v698 = vpack.c.bf16 %v504, %v501
        %v699 = vpack.c.bf16 %v510, %v507
        %v700 = vpack.c.bf16 %v516, %v513
        %v701 = vpack.c.bf16 %v522, %v519
        %v702 = vpack.c.bf16 %v528, %v525
        %v703 = vpack.c.bf16 %v534, %v531
        %v704 = vpack.c.bf16 %v540, %v537
        %v705 = vpack.c.bf16 %v546, %v543
        %v706 = vpack.c.bf16 %v552, %v549
        %v707 = vpack.c.bf16 %v558, %v555
        %v708 = vpack.c.bf16 %v564, %v561
        %v709 = vpack.c.bf16 %v570, %v567
        %v710 = vpack.c.bf16 %v576, %v573
        %v711 = vpack.c.bf16 %v582, %v579
        %v712 = vpack.c.bf16 %v588, %v585
        %v713 = vpack.c.bf16 %v594, %v591
        %v714 = vpack.c.bf16 %v600, %v597
        %v715 = vpack.c.bf16 %v606, %v603
        %v716 = vpack.c.bf16 %v612, %v609
        %v717 = vpack.c.bf16 %v618, %v615
        %v718 = vpack.c.bf16 %v624, %v621
        %v719 = vpack.c.bf16 %v630, %v627
        %v720 = vpack.c.bf16 %v636, %v633
        %v721 = vpack.c.bf16 %v642, %v639
        %v722 = vpack.c.bf16 %v648, %v645
        %v723 = vpack.c.bf16 %v654, %v651
        %v724 = vpack.c.bf16 %v660, %v657
        %v725 = vld [vmem:[%s1] sm:$0xff]
        %v726 = vld [vmem:[%s1 + $0x8] sm:$0xff]
        %v727 = vld [vmem:[%s1 + $0x10] sm:$0xff]
        %v728 = vld [vmem:[%s1 + $0x18] sm:$0xff]
        %v729 = vld [vmem:[%s1 + $0x20] sm:$0xff]
        %v730 = vld [vmem:[%s1 + $0x28] sm:$0xff]
        %v731 = vld [vmem:[%s1 + $0x30] sm:$0xff]
        %v732 = vld [vmem:[%s1 + $0x38] sm:$0xff]
        %v733 = vld [vmem:[%s1 + $0x40] sm:$0xff]
        %v734 = vld [vmem:[%s1 + $0x48] sm:$0xff]
        %v735 = vld [vmem:[%s1 + $0x50] sm:$0xff]
        %v736 = vld [vmem:[%s1 + $0x58] sm:$0xff]
        %v737 = vld [vmem:[%s1 + $0x60] sm:$0xff]
        %v738 = vld [vmem:[%s1 + $0x68] sm:$0xff]
        %v739 = vld [vmem:[%s1 + $0x70] sm:$0xff]
        %v740 = vld [vmem:[%s1 + $0x78] sm:$0xff]
        %v805 = vunpack.c.l.b16 %v661
        %v806 = vunpack.c.h.b16 %v661
        %v807 = vunpack.c.l.b16 %v662
        %v808 = vunpack.c.h.b16 %v662
        %v809 = vunpack.c.l.b16 %v663
        %v810 = vunpack.c.h.b16 %v663
        %v811 = vunpack.c.l.b16 %v664
        %v812 = vunpack.c.h.b16 %v664
        %v813 = vunpack.c.l.b16 %v665
        %v814 = vunpack.c.h.b16 %v665
        %v815 = vunpack.c.l.b16 %v666
        %v816 = vunpack.c.h.b16 %v666
        %v817 = vunpack.c.l.b16 %v667
        %v818 = vunpack.c.h.b16 %v667
        %v819 = vunpack.c.l.b16 %v668
        %v820 = vunpack.c.h.b16 %v668
        %v821 = vunpack.c.l.b16 %v669
        %v822 = vunpack.c.h.b16 %v669
        %v823 = vunpack.c.l.b16 %v670
        %v824 = vunpack.c.h.b16 %v670
        %v825 = vunpack.c.l.b16 %v671
        %v826 = vunpack.c.h.b16 %v671
        %v827 = vunpack.c.l.b16 %v672
        %v828 = vunpack.c.h.b16 %v672
        %v829 = vunpack.c.l.b16 %v673
        %v830 = vunpack.c.h.b16 %v673
        %v831 = vunpack.c.l.b16 %v674
        %v832 = vunpack.c.h.b16 %v674
        %v833 = vunpack.c.l.b16 %v675
        %v834 = vunpack.c.h.b16 %v675
        %v835 = vunpack.c.l.b16 %v676
        %v836 = vunpack.c.h.b16 %v676
        %v837 = vunpack.c.l.b16 %v677
        %v838 = vunpack.c.h.b16 %v677
        %v839 = vunpack.c.l.b16 %v678
        %v840 = vunpack.c.h.b16 %v678
        %v841 = vunpack.c.l.b16 %v679
        %v842 = vunpack.c.h.b16 %v679
        %v843 = vunpack.c.l.b16 %v680
        %v844 = vunpack.c.h.b16 %v680
        %v845 = vunpack.c.l.b16 %v681
        %v846 = vunpack.c.h.b16 %v681
        %v847 = vunpack.c.l.b16 %v682
        %v848 = vunpack.c.h.b16 %v682
        %v849 = vunpack.c.l.b16 %v683
        %v850 = vunpack.c.h.b16 %v683
        %v851 = vunpack.c.l.b16 %v684
        %v852 = vunpack.c.h.b16 %v684
        %v853 = vunpack.c.l.b16 %v685
        %v854 = vunpack.c.h.b16 %v685
        %v855 = vunpack.c.l.b16 %v686
        %v856 = vunpack.c.h.b16 %v686
        %v857 = vunpack.c.l.b16 %v687
        %v858 = vunpack.c.h.b16 %v687
        %v859 = vunpack.c.l.b16 %v688
        %v860 = vunpack.c.h.b16 %v688
        %v861 = vunpack.c.l.b16 %v689
        %v862 = vunpack.c.h.b16 %v689
        %v863 = vunpack.c.l.b16 %v690
        %v864 = vunpack.c.h.b16 %v690
        %v865 = vunpack.c.l.b16 %v691
        %v866 = vunpack.c.h.b16 %v691
        %v867 = vunpack.c.l.b16 %v692
        %v868 = vunpack.c.h.b16 %v692
        %v869 = vunpack.c.l.b16 %v693
        %v870 = vunpack.c.h.b16 %v693
        %v871 = vunpack.c.l.b16 %v694
        %v872 = vunpack.c.h.b16 %v694
        %v873 = vunpack.c.l.b16 %v695
        %v874 = vunpack.c.h.b16 %v695
        %v875 = vunpack.c.l.b16 %v696
        %v876 = vunpack.c.h.b16 %v696
        %v877 = vunpack.c.l.b16 %v697
        %v878 = vunpack.c.h.b16 %v697
        %v879 = vunpack.c.l.b16 %v698
        %v880 = vunpack.c.h.b16 %v698
        %v881 = vunpack.c.l.b16 %v699
        %v882 = vunpack.c.h.b16 %v699
        %v883 = vunpack.c.l.b16 %v700
        %v884 = vunpack.c.h.b16 %v700
        %v885 = vunpack.c.l.b16 %v701
        %v886 = vunpack.c.h.b16 %v701
        %v887 = vunpack.c.l.b16 %v702
        %v888 = vunpack.c.h.b16 %v702
        %v889 = vunpack.c.l.b16 %v703
        %v890 = vunpack.c.h.b16 %v703
        %v891 = vunpack.c.l.b16 %v704
        %v892 = vunpack.c.h.b16 %v704
        %v893 = vunpack.c.l.b16 %v705
        %v894 = vunpack.c.h.b16 %v705
        %v895 = vunpack.c.l.b16 %v706
        %v896 = vunpack.c.h.b16 %v706
        %v897 = vunpack.c.l.b16 %v707
        %v898 = vunpack.c.h.b16 %v707
        %v899 = vunpack.c.l.b16 %v708
        %v900 = vunpack.c.h.b16 %v708
        %v901 = vunpack.c.l.b16 %v709
        %v902 = vunpack.c.h.b16 %v709
        %v903 = vunpack.c.l.b16 %v710
        %v904 = vunpack.c.h.b16 %v710
        %v905 = vunpack.c.l.b16 %v711
        %v906 = vunpack.c.h.b16 %v711
        %v907 = vunpack.c.l.b16 %v712
        %v908 = vunpack.c.h.b16 %v712
        %v909 = vunpack.c.l.b16 %v713
        %v910 = vunpack.c.h.b16 %v713
        %v911 = vunpack.c.l.b16 %v714
        %v912 = vunpack.c.h.b16 %v714
        %v913 = vunpack.c.l.b16 %v715
        %v914 = vunpack.c.h.b16 %v715
        %v915 = vunpack.c.l.b16 %v716
        %v916 = vunpack.c.h.b16 %v716
        %v917 = vunpack.c.l.b16 %v717
        %v918 = vunpack.c.h.b16 %v717
        %v919 = vunpack.c.l.b16 %v718
        %v920 = vunpack.c.h.b16 %v718
        %v921 = vunpack.c.l.b16 %v719
        %v922 = vunpack.c.h.b16 %v719
        %v923 = vunpack.c.l.b16 %v720
        %v924 = vunpack.c.h.b16 %v720
        %v925 = vunpack.c.l.b16 %v721
        %v926 = vunpack.c.h.b16 %v721
        %v927 = vunpack.c.l.b16 %v722
        %v928 = vunpack.c.h.b16 %v722
        %v929 = vunpack.c.l.b16 %v723
        %v930 = vunpack.c.h.b16 %v723
        %v931 = vunpack.c.l.b16 %v724
        %v932 = vunpack.c.h.b16 %v724
        %v933 = vlaneseq
        %v934 = vand.u32 %v933, 127
        %v935 = vlaneseq
        %v936 = vshrl.u32 %v935, 7
        %v937 = vsub.s32 %v934, %v936
        %v938 = vrot.slane %v805, %v937
        %v939 = vadd.s32 %v934, 4294967288
        %v940 = vlaneseq
        %v941 = vshrl.u32 %v940, 7
        %v942 = vsub.s32 %v939, %v941
        %v943 = vrot.slane %v806, %v942
        %vm944 = vcmask 130112
        %v945 = vsel %vm944, %v943, %v938
        %v946 = vadd.s32 %v934, 4294967280
        %v947 = vlaneseq
        %v948 = vshrl.u32 %v947, 7
        %v949 = vsub.s32 %v946, %v948
        %v950 = vrot.slane %v807, %v949
        %vm951 = vcmask 195712
        %v952 = vsel %vm951, %v950, %v945
        %v953 = vadd.s32 %v934, 4294967272
        %v954 = vlaneseq
        %v955 = vshrl.u32 %v954, 7
        %v956 = vsub.s32 %v953, %v955
        %v957 = vrot.slane %v808, %v956
        %vm958 = vcmask 261312
        %v959 = vsel %vm958, %v957, %v952
        %v960 = vadd.s32 %v934, 4294967264
        %v961 = vlaneseq
        %v962 = vshrl.u32 %v961, 7
        %v963 = vsub.s32 %v960, %v962
        %v964 = vrot.slane %v809, %v963
        %vm965 = vcmask 326912
        %v966 = vsel %vm965, %v964, %v959
        %v967 = vadd.s32 %v934, 4294967256
        %v968 = vlaneseq
        %v969 = vshrl.u32 %v968, 7
        %v970 = vsub.s32 %v967, %v969
        %v971 = vrot.slane %v810, %v970
        %vm972 = vcmask 392512
        %v973 = vsel %vm972, %v971, %v966
        %v974 = vadd.s32 %v934, 4294967248
        %v975 = vlaneseq
        %v976 = vshrl.u32 %v975, 7
        %v977 = vsub.s32 %v974, %v976
        %v978 = vrot.slane %v811, %v977
        %vm979 = vcmask 458112
        %v980 = vsel %vm979, %v978, %v973
        %v981 = vadd.s32 %v934, 4294967240
        %v982 = vlaneseq
        %v983 = vshrl.u32 %v982, 7
        %v984 = vsub.s32 %v981, %v983
        %v985 = vrot.slane %v812, %v984
        %vm986 = vcmask 523712
        %v987 = vsel %vm986, %v985, %v980
        %v988 = vadd.s32 %v934, 4294967232
        %v989 = vlaneseq
        %v990 = vshrl.u32 %v989, 7
        %v991 = vsub.s32 %v988, %v990
        %v992 = vrot.slane %v813, %v991
        %vm993 = vcmask 589312
        %v994 = vsel %vm993, %v992, %v987
        %v995 = vadd.s32 %v934, 4294967224
        %v996 = vlaneseq
        %v997 = vshrl.u32 %v996, 7
        %v998 = vsub.s32 %v995, %v997
        %v999 = vrot.slane %v814, %v998
        %vm1000 = vcmask 654912
        %v1001 = vsel %vm1000, %v999, %v994
        %v1002 = vadd.s32 %v934, 4294967216
        %v1003 = vlaneseq
        %v1004 = vshrl.u32 %v1003, 7
        %v1005 = vsub.s32 %v1002, %v1004
        %v1006 = vrot.slane %v815, %v1005
        %vm1007 = vcmask 720512
        %v1008 = vsel %vm1007, %v1006, %v1001
        %v1009 = vadd.s32 %v934, 4294967208
        %v1010 = vlaneseq
        %v1011 = vshrl.u32 %v1010, 7
        %v1012 = vsub.s32 %v1009, %v1011
        %v1013 = vrot.slane %v816, %v1012
        %vm1014 = vcmask 786112
        %v1015 = vsel %vm1014, %v1013, %v1008
        %v1016 = vadd.s32 %v934, 4294967200
        %v1017 = vlaneseq
        %v1018 = vshrl.u32 %v1017, 7
        %v1019 = vsub.s32 %v1016, %v1018
        %v1020 = vrot.slane %v817, %v1019
        %vm1021 = vcmask 851712
        %v1022 = vsel %vm1021, %v1020, %v1015
        %v1023 = vadd.s32 %v934, 4294967192
        %v1024 = vlaneseq
        %v1025 = vshrl.u32 %v1024, 7
        %v1026 = vsub.s32 %v1023, %v1025
        %v1027 = vrot.slane %v818, %v1026
        %vm1028 = vcmask 917312
        %v1029 = vsel %vm1028, %v1027, %v1022
        %v1030 = vadd.s32 %v934, 4294967184
        %v1031 = vlaneseq
        %v1032 = vshrl.u32 %v1031, 7
        %v1033 = vsub.s32 %v1030, %v1032
        %v1034 = vrot.slane %v819, %v1033
        %vm1035 = vcmask 982912
        %v1036 = vsel %vm1035, %v1034, %v1029
        %v1037 = vadd.s32 %v934, 4294967176
        %v1038 = vlaneseq
        %v1039 = vshrl.u32 %v1038, 7
        %v1040 = vsub.s32 %v1037, %v1039
        %v1041 = vrot.slane %v820, %v1040
        %vm1042 = vcmask 1048512
        %v1043 = vsel %vm1042, %v1041, %v1036
        %v1044 = vlaneseq
        %v1045 = vshrl.u32 %v1044, 7
        %v1046 = vsub.s32 %v934, %v1045
        %v1047 = vrot.slane %v821, %v1046
        %v1048 = vlaneseq
        %v1049 = vshrl.u32 %v1048, 7
        %v1050 = vsub.s32 %v939, %v1049
        %v1051 = vrot.slane %v822, %v1050
        %v1052 = vsel %vm944, %v1051, %v1047
        %v1053 = vlaneseq
        %v1054 = vshrl.u32 %v1053, 7
        %v1055 = vsub.s32 %v946, %v1054
        %v1056 = vrot.slane %v823, %v1055
        %v1057 = vsel %vm951, %v1056, %v1052
        %v1058 = vlaneseq
        %v1059 = vshrl.u32 %v1058, 7
        %v1060 = vsub.s32 %v953, %v1059
        %v1061 = vrot.slane %v824, %v1060
        %v1062 = vsel %vm958, %v1061, %v1057
        %v1063 = vlaneseq
        %v1064 = vshrl.u32 %v1063, 7
        %v1065 = vsub.s32 %v960, %v1064
        %v1066 = vrot.slane %v825, %v1065
        %v1067 = vsel %vm965, %v1066, %v1062
        %v1068 = vlaneseq
        %v1069 = vshrl.u32 %v1068, 7
        %v1070 = vsub.s32 %v967, %v1069
        %v1071 = vrot.slane %v826, %v1070
        %v1072 = vsel %vm972, %v1071, %v1067
        %v1073 = vlaneseq
        %v1074 = vshrl.u32 %v1073, 7
        %v1075 = vsub.s32 %v974, %v1074
        %v1076 = vrot.slane %v827, %v1075
        %v1077 = vsel %vm979, %v1076, %v1072
        %v1078 = vlaneseq
        %v1079 = vshrl.u32 %v1078, 7
        %v1080 = vsub.s32 %v981, %v1079
        %v1081 = vrot.slane %v828, %v1080
        %v1082 = vsel %vm986, %v1081, %v1077
        %v1083 = vlaneseq
        %v1084 = vshrl.u32 %v1083, 7
        %v1085 = vsub.s32 %v988, %v1084
        %v1086 = vrot.slane %v829, %v1085
        %v1087 = vsel %vm993, %v1086, %v1082
        %v1088 = vlaneseq
        %v1089 = vshrl.u32 %v1088, 7
        %v1090 = vsub.s32 %v995, %v1089
        %v1091 = vrot.slane %v830, %v1090
        %v1092 = vsel %vm1000, %v1091, %v1087
        %v1093 = vlaneseq
        %v1094 = vshrl.u32 %v1093, 7
        %v1095 = vsub.s32 %v1002, %v1094
        %v1096 = vrot.slane %v831, %v1095
        %v1097 = vsel %vm1007, %v1096, %v1092
        %v1098 = vlaneseq
        %v1099 = vshrl.u32 %v1098, 7
        %v1100 = vsub.s32 %v1009, %v1099
        %v1101 = vrot.slane %v832, %v1100
        %v1102 = vsel %vm1014, %v1101, %v1097
        %v1103 = vlaneseq
        %v1104 = vshrl.u32 %v1103, 7
        %v1105 = vsub.s32 %v1016, %v1104
        %v1106 = vrot.slane %v833, %v1105
        %v1107 = vsel %vm1021, %v1106, %v1102
        %v1108 = vlaneseq
        %v1109 = vshrl.u32 %v1108, 7
        %v1110 = vsub.s32 %v1023, %v1109
        %v1111 = vrot.slane %v834, %v1110
        %v1112 = vsel %vm1028, %v1111, %v1107
        %v1113 = vlaneseq
        %v1114 = vshrl.u32 %v1113, 7
        %v1115 = vsub.s32 %v1030, %v1114
        %v1116 = vrot.slane %v835, %v1115
        %v1117 = vsel %vm1035, %v1116, %v1112
        %v1118 = vlaneseq
        %v1119 = vshrl.u32 %v1118, 7
        %v1120 = vsub.s32 %v1037, %v1119
        %v1121 = vrot.slane %v836, %v1120
        %v1122 = vsel %vm1042, %v1121, %v1117
        %v1123 = vlaneseq
        %v1124 = vshrl.u32 %v1123, 7
        %v1125 = vsub.s32 %v934, %v1124
        %v1126 = vrot.slane %v837, %v1125
        %v1127 = vlaneseq
        %v1128 = vshrl.u32 %v1127, 7
        %v1129 = vsub.s32 %v939, %v1128
        %v1130 = vrot.slane %v838, %v1129
        %v1131 = vsel %vm944, %v1130, %v1126
        %v1132 = vlaneseq
        %v1133 = vshrl.u32 %v1132, 7
        %v1134 = vsub.s32 %v946, %v1133
        %v1135 = vrot.slane %v839, %v1134
        %v1136 = vsel %vm951, %v1135, %v1131
        %v1137 = vlaneseq
        %v1138 = vshrl.u32 %v1137, 7
        %v1139 = vsub.s32 %v953, %v1138
        %v1140 = vrot.slane %v840, %v1139
        %v1141 = vsel %vm958, %v1140, %v1136
        %v1142 = vlaneseq
        %v1143 = vshrl.u32 %v1142, 7
        %v1144 = vsub.s32 %v960, %v1143
        %v1145 = vrot.slane %v841, %v1144
        %v1146 = vsel %vm965, %v1145, %v1141
        %v1147 = vlaneseq
        %v1148 = vshrl.u32 %v1147, 7
        %v1149 = vsub.s32 %v967, %v1148
        %v1150 = vrot.slane %v842, %v1149
        %v1151 = vsel %vm972, %v1150, %v1146
        %v1152 = vlaneseq
        %v1153 = vshrl.u32 %v1152, 7
        %v1154 = vsub.s32 %v974, %v1153
        %v1155 = vrot.slane %v843, %v1154
        %v1156 = vsel %vm979, %v1155, %v1151
        %v1157 = vlaneseq
        %v1158 = vshrl.u32 %v1157, 7
        %v1159 = vsub.s32 %v981, %v1158
        %v1160 = vrot.slane %v844, %v1159
        %v1161 = vsel %vm986, %v1160, %v1156
        %v1162 = vlaneseq
        %v1163 = vshrl.u32 %v1162, 7
        %v1164 = vsub.s32 %v988, %v1163
        %v1165 = vrot.slane %v845, %v1164
        %v1166 = vsel %vm993, %v1165, %v1161
        %v1167 = vlaneseq
        %v1168 = vshrl.u32 %v1167, 7
        %v1169 = vsub.s32 %v995, %v1168
        %v1170 = vrot.slane %v846, %v1169
        %v1171 = vsel %vm1000, %v1170, %v1166
        %v1172 = vlaneseq
        %v1173 = vshrl.u32 %v1172, 7
        %v1174 = vsub.s32 %v1002, %v1173
        %v1175 = vrot.slane %v847, %v1174
        %v1176 = vsel %vm1007, %v1175, %v1171
        %v1177 = vlaneseq
        %v1178 = vshrl.u32 %v1177, 7
        %v1179 = vsub.s32 %v1009, %v1178
        %v1180 = vrot.slane %v848, %v1179
        %v1181 = vsel %vm1014, %v1180, %v1176
        %v1182 = vlaneseq
        %v1183 = vshrl.u32 %v1182, 7
        %v1184 = vsub.s32 %v1016, %v1183
        %v1185 = vrot.slane %v849, %v1184
        %v1186 = vsel %vm1021, %v1185, %v1181
        %v1187 = vlaneseq
        %v1188 = vshrl.u32 %v1187, 7
        %v1189 = vsub.s32 %v1023, %v1188
        %v1190 = vrot.slane %v850, %v1189
        %v1191 = vsel %vm1028, %v1190, %v1186
        %v1192 = vlaneseq
        %v1193 = vshrl.u32 %v1192, 7
        %v1194 = vsub.s32 %v1030, %v1193
        %v1195 = vrot.slane %v851, %v1194
        %v1196 = vsel %vm1035, %v1195, %v1191
        %v1197 = vlaneseq
        %v1198 = vshrl.u32 %v1197, 7
        %v1199 = vsub.s32 %v1037, %v1198
        %v1200 = vrot.slane %v852, %v1199
        %v1201 = vsel %vm1042, %v1200, %v1196
        %v1202 = vlaneseq
        %v1203 = vshrl.u32 %v1202, 7
        %v1204 = vsub.s32 %v934, %v1203
        %v1205 = vrot.slane %v853, %v1204
        %v1206 = vlaneseq
        %v1207 = vshrl.u32 %v1206, 7
        %v1208 = vsub.s32 %v939, %v1207
        %v1209 = vrot.slane %v854, %v1208
        %v1210 = vsel %vm944, %v1209, %v1205
        %v1211 = vlaneseq
        %v1212 = vshrl.u32 %v1211, 7
        %v1213 = vsub.s32 %v946, %v1212
        %v1214 = vrot.slane %v855, %v1213
        %v1215 = vsel %vm951, %v1214, %v1210
        %v1216 = vlaneseq
        %v1217 = vshrl.u32 %v1216, 7
        %v1218 = vsub.s32 %v953, %v1217
        %v1219 = vrot.slane %v856, %v1218
        %v1220 = vsel %vm958, %v1219, %v1215
        %v1221 = vlaneseq
        %v1222 = vshrl.u32 %v1221, 7
        %v1223 = vsub.s32 %v960, %v1222
        %v1224 = vrot.slane %v857, %v1223
        %v1225 = vsel %vm965, %v1224, %v1220
        %v1226 = vlaneseq
        %v1227 = vshrl.u32 %v1226, 7
        %v1228 = vsub.s32 %v967, %v1227
        %v1229 = vrot.slane %v858, %v1228
        %v1230 = vsel %vm972, %v1229, %v1225
        %v1231 = vlaneseq
        %v1232 = vshrl.u32 %v1231, 7
        %v1233 = vsub.s32 %v974, %v1232
        %v1234 = vrot.slane %v859, %v1233
        %v1235 = vsel %vm979, %v1234, %v1230
        %v1236 = vlaneseq
        %v1237 = vshrl.u32 %v1236, 7
        %v1238 = vsub.s32 %v981, %v1237
        %v1239 = vrot.slane %v860, %v1238
        %v1240 = vsel %vm986, %v1239, %v1235
        %v1241 = vlaneseq
        %v1242 = vshrl.u32 %v1241, 7
        %v1243 = vsub.s32 %v988, %v1242
        %v1244 = vrot.slane %v861, %v1243
        %v1245 = vsel %vm993, %v1244, %v1240
        %v1246 = vlaneseq
        %v1247 = vshrl.u32 %v1246, 7
        %v1248 = vsub.s32 %v995, %v1247
        %v1249 = vrot.slane %v862, %v1248
        %v1250 = vsel %vm1000, %v1249, %v1245
        %v1251 = vlaneseq
        %v1252 = vshrl.u32 %v1251, 7
        %v1253 = vsub.s32 %v1002, %v1252
        %v1254 = vrot.slane %v863, %v1253
        %v1255 = vsel %vm1007, %v1254, %v1250
        %v1256 = vlaneseq
        %v1257 = vshrl.u32 %v1256, 7
        %v1258 = vsub.s32 %v1009, %v1257
        %v1259 = vrot.slane %v864, %v1258
        %v1260 = vsel %vm1014, %v1259, %v1255
        %v1261 = vlaneseq
        %v1262 = vshrl.u32 %v1261, 7
        %v1263 = vsub.s32 %v1016, %v1262
        %v1264 = vrot.slane %v865, %v1263
        %v1265 = vsel %vm1021, %v1264, %v1260
        %v1266 = vlaneseq
        %v1267 = vshrl.u32 %v1266, 7
        %v1268 = vsub.s32 %v1023, %v1267
        %v1269 = vrot.slane %v866, %v1268
        %v1270 = vsel %vm1028, %v1269, %v1265
        %v1271 = vlaneseq
        %v1272 = vshrl.u32 %v1271, 7
        %v1273 = vsub.s32 %v1030, %v1272
        %v1274 = vrot.slane %v867, %v1273
        %v1275 = vsel %vm1035, %v1274, %v1270
        %v1276 = vlaneseq
        %v1277 = vshrl.u32 %v1276, 7
        %v1278 = vsub.s32 %v1037, %v1277
        %v1279 = vrot.slane %v868, %v1278
        %v1280 = vsel %vm1042, %v1279, %v1275
        %v1281 = vlaneseq
        %v1282 = vshrl.u32 %v1281, 7
        %v1283 = vsub.s32 %v934, %v1282
        %v1284 = vrot.slane %v869, %v1283
        %v1285 = vlaneseq
        %v1286 = vshrl.u32 %v1285, 7
        %v1287 = vsub.s32 %v939, %v1286
        %v1288 = vrot.slane %v870, %v1287
        %v1289 = vsel %vm944, %v1288, %v1284
        %v1290 = vlaneseq
        %v1291 = vshrl.u32 %v1290, 7
        %v1292 = vsub.s32 %v946, %v1291
        %v1293 = vrot.slane %v871, %v1292
        %v1294 = vsel %vm951, %v1293, %v1289
        %v1295 = vlaneseq
        %v1296 = vshrl.u32 %v1295, 7
        %v1297 = vsub.s32 %v953, %v1296
        %v1298 = vrot.slane %v872, %v1297
        %v1299 = vsel %vm958, %v1298, %v1294
        %v1300 = vlaneseq
        %v1301 = vshrl.u32 %v1300, 7
        %v1302 = vsub.s32 %v960, %v1301
        %v1303 = vrot.slane %v873, %v1302
        %v1304 = vsel %vm965, %v1303, %v1299
        %v1305 = vlaneseq
        %v1306 = vshrl.u32 %v1305, 7
        %v1307 = vsub.s32 %v967, %v1306
        %v1308 = vrot.slane %v874, %v1307
        %v1309 = vsel %vm972, %v1308, %v1304
        %v1310 = vlaneseq
        %v1311 = vshrl.u32 %v1310, 7
        %v1312 = vsub.s32 %v974, %v1311
        %v1313 = vrot.slane %v875, %v1312
        %v1314 = vsel %vm979, %v1313, %v1309
        %v1315 = vlaneseq
        %v1316 = vshrl.u32 %v1315, 7
        %v1317 = vsub.s32 %v981, %v1316
        %v1318 = vrot.slane %v876, %v1317
        %v1319 = vsel %vm986, %v1318, %v1314
        %v1320 = vlaneseq
        %v1321 = vshrl.u32 %v1320, 7
        %v1322 = vsub.s32 %v988, %v1321
        %v1323 = vrot.slane %v877, %v1322
        %v1324 = vsel %vm993, %v1323, %v1319
        %v1325 = vlaneseq
        %v1326 = vshrl.u32 %v1325, 7
        %v1327 = vsub.s32 %v995, %v1326
        %v1328 = vrot.slane %v878, %v1327
        %v1329 = vsel %vm1000, %v1328, %v1324
        %v1330 = vlaneseq
        %v1331 = vshrl.u32 %v1330, 7
        %v1332 = vsub.s32 %v1002, %v1331
        %v1333 = vrot.slane %v879, %v1332
        %v1334 = vsel %vm1007, %v1333, %v1329
        %v1335 = vlaneseq
        %v1336 = vshrl.u32 %v1335, 7
        %v1337 = vsub.s32 %v1009, %v1336
        %v1338 = vrot.slane %v880, %v1337
        %v1339 = vsel %vm1014, %v1338, %v1334
        %v1340 = vlaneseq
        %v1341 = vshrl.u32 %v1340, 7
        %v1342 = vsub.s32 %v1016, %v1341
        %v1343 = vrot.slane %v881, %v1342
        %v1344 = vsel %vm1021, %v1343, %v1339
        %v1345 = vlaneseq
        %v1346 = vshrl.u32 %v1345, 7
        %v1347 = vsub.s32 %v1023, %v1346
        %v1348 = vrot.slane %v882, %v1347
        %v1349 = vsel %vm1028, %v1348, %v1344
        %v1350 = vlaneseq
        %v1351 = vshrl.u32 %v1350, 7
        %v1352 = vsub.s32 %v1030, %v1351
        %v1353 = vrot.slane %v883, %v1352
        %v1354 = vsel %vm1035, %v1353, %v1349
        %v1355 = vlaneseq
        %v1356 = vshrl.u32 %v1355, 7
        %v1357 = vsub.s32 %v1037, %v1356
        %v1358 = vrot.slane %v884, %v1357
        %v1359 = vsel %vm1042, %v1358, %v1354
        %v1360 = vlaneseq
        %v1361 = vshrl.u32 %v1360, 7
        %v1362 = vsub.s32 %v934, %v1361
        %v1363 = vrot.slane %v885, %v1362
        %v1364 = vlaneseq
        %v1365 = vshrl.u32 %v1364, 7
        %v1366 = vsub.s32 %v939, %v1365
        %v1367 = vrot.slane %v886, %v1366
        %v1368 = vsel %vm944, %v1367, %v1363
        %v1369 = vlaneseq
        %v1370 = vshrl.u32 %v1369, 7
        %v1371 = vsub.s32 %v946, %v1370
        %v1372 = vrot.slane %v887, %v1371
        %v1373 = vsel %vm951, %v1372, %v1368
        %v1374 = vlaneseq
        %v1375 = vshrl.u32 %v1374, 7
        %v1376 = vsub.s32 %v953, %v1375
        %v1377 = vrot.slane %v888, %v1376
        %v1378 = vsel %vm958, %v1377, %v1373
        %v1379 = vlaneseq
        %v1380 = vshrl.u32 %v1379, 7
        %v1381 = vsub.s32 %v960, %v1380
        %v1382 = vrot.slane %v889, %v1381
        %v1383 = vsel %vm965, %v1382, %v1378
        %v1384 = vlaneseq
        %v1385 = vshrl.u32 %v1384, 7
        %v1386 = vsub.s32 %v967, %v1385
        %v1387 = vrot.slane %v890, %v1386
        %v1388 = vsel %vm972, %v1387, %v1383
        %v1389 = vlaneseq
        %v1390 = vshrl.u32 %v1389, 7
        %v1391 = vsub.s32 %v974, %v1390
        %v1392 = vrot.slane %v891, %v1391
        %v1393 = vsel %vm979, %v1392, %v1388
        %v1394 = vlaneseq
        %v1395 = vshrl.u32 %v1394, 7
        %v1396 = vsub.s32 %v981, %v1395
        %v1397 = vrot.slane %v892, %v1396
        %v1398 = vsel %vm986, %v1397, %v1393
        %v1399 = vlaneseq
        %v1400 = vshrl.u32 %v1399, 7
        %v1401 = vsub.s32 %v988, %v1400
        %v1402 = vrot.slane %v893, %v1401
        %v1403 = vsel %vm993, %v1402, %v1398
        %v1404 = vlaneseq
        %v1405 = vshrl.u32 %v1404, 7
        %v1406 = vsub.s32 %v995, %v1405
        %v1407 = vrot.slane %v894, %v1406
        %v1408 = vsel %vm1000, %v1407, %v1403
        %v1409 = vlaneseq
        %v1410 = vshrl.u32 %v1409, 7
        %v1411 = vsub.s32 %v1002, %v1410
        %v1412 = vrot.slane %v895, %v1411
        %v1413 = vsel %vm1007, %v1412, %v1408
        %v1414 = vlaneseq
        %v1415 = vshrl.u32 %v1414, 7
        %v1416 = vsub.s32 %v1009, %v1415
        %v1417 = vrot.slane %v896, %v1416
        %v1418 = vsel %vm1014, %v1417, %v1413
        %v1419 = vlaneseq
        %v1420 = vshrl.u32 %v1419, 7
        %v1421 = vsub.s32 %v1016, %v1420
        %v1422 = vrot.slane %v897, %v1421
        %v1423 = vsel %vm1021, %v1422, %v1418
        %v1424 = vlaneseq
        %v1425 = vshrl.u32 %v1424, 7
        %v1426 = vsub.s32 %v1023, %v1425
        %v1427 = vrot.slane %v898, %v1426
        %v1428 = vsel %vm1028, %v1427, %v1423
        %v1429 = vlaneseq
        %v1430 = vshrl.u32 %v1429, 7
        %v1431 = vsub.s32 %v1030, %v1430
        %v1432 = vrot.slane %v899, %v1431
        %v1433 = vsel %vm1035, %v1432, %v1428
        %v1434 = vlaneseq
        %v1435 = vshrl.u32 %v1434, 7
        %v1436 = vsub.s32 %v1037, %v1435
        %v1437 = vrot.slane %v900, %v1436
        %v1438 = vsel %vm1042, %v1437, %v1433
        %v1439 = vlaneseq
        %v1440 = vshrl.u32 %v1439, 7
        %v1441 = vsub.s32 %v934, %v1440
        %v1442 = vrot.slane %v901, %v1441
        %v1443 = vlaneseq
        %v1444 = vshrl.u32 %v1443, 7
        %v1445 = vsub.s32 %v939, %v1444
        %v1446 = vrot.slane %v902, %v1445
        %v1447 = vsel %vm944, %v1446, %v1442
        %v1448 = vlaneseq
        %v1449 = vshrl.u32 %v1448, 7
        %v1450 = vsub.s32 %v946, %v1449
        %v1451 = vrot.slane %v903, %v1450
        %v1452 = vsel %vm951, %v1451, %v1447
        %v1453 = vlaneseq
        %v1454 = vshrl.u32 %v1453, 7
        %v1455 = vsub.s32 %v953, %v1454
        %v1456 = vrot.slane %v904, %v1455
        %v1457 = vsel %vm958, %v1456, %v1452
        %v1458 = vlaneseq
        %v1459 = vshrl.u32 %v1458, 7
        %v1460 = vsub.s32 %v960, %v1459
        %v1461 = vrot.slane %v905, %v1460
        %v1462 = vsel %vm965, %v1461, %v1457
        %v1463 = vlaneseq
        %v1464 = vshrl.u32 %v1463, 7
        %v1465 = vsub.s32 %v967, %v1464
        %v1466 = vrot.slane %v906, %v1465
        %v1467 = vsel %vm972, %v1466, %v1462
        %v1468 = vlaneseq
        %v1469 = vshrl.u32 %v1468, 7
        %v1470 = vsub.s32 %v974, %v1469
        %v1471 = vrot.slane %v907, %v1470
        %v1472 = vsel %vm979, %v1471, %v1467
        %v1473 = vlaneseq
        %v1474 = vshrl.u32 %v1473, 7
        %v1475 = vsub.s32 %v981, %v1474
        %v1476 = vrot.slane %v908, %v1475
        %v1477 = vsel %vm986, %v1476, %v1472
        %v1478 = vlaneseq
        %v1479 = vshrl.u32 %v1478, 7
        %v1480 = vsub.s32 %v988, %v1479
        %v1481 = vrot.slane %v909, %v1480
        %v1482 = vsel %vm993, %v1481, %v1477
        %v1483 = vlaneseq
        %v1484 = vshrl.u32 %v1483, 7
        %v1485 = vsub.s32 %v995, %v1484
        %v1486 = vrot.slane %v910, %v1485
        %v1487 = vsel %vm1000, %v1486, %v1482
        %v1488 = vlaneseq
        %v1489 = vshrl.u32 %v1488, 7
        %v1490 = vsub.s32 %v1002, %v1489
        %v1491 = vrot.slane %v911, %v1490
        %v1492 = vsel %vm1007, %v1491, %v1487
        %v1493 = vlaneseq
        %v1494 = vshrl.u32 %v1493, 7
        %v1495 = vsub.s32 %v1009, %v1494
        %v1496 = vrot.slane %v912, %v1495
        %v1497 = vsel %vm1014, %v1496, %v1492
        %v1498 = vlaneseq
        %v1499 = vshrl.u32 %v1498, 7
        %v1500 = vsub.s32 %v1016, %v1499
        %v1501 = vrot.slane %v913, %v1500
        %v1502 = vsel %vm1021, %v1501, %v1497
        %v1503 = vlaneseq
        %v1504 = vshrl.u32 %v1503, 7
        %v1505 = vsub.s32 %v1023, %v1504
        %v1506 = vrot.slane %v914, %v1505
        %v1507 = vsel %vm1028, %v1506, %v1502
        %v1508 = vlaneseq
        %v1509 = vshrl.u32 %v1508, 7
        %v1510 = vsub.s32 %v1030, %v1509
        %v1511 = vrot.slane %v915, %v1510
        %v1512 = vsel %vm1035, %v1511, %v1507
        %v1513 = vlaneseq
        %v1514 = vshrl.u32 %v1513, 7
        %v1515 = vsub.s32 %v1037, %v1514
        %v1516 = vrot.slane %v916, %v1515
        %v1517 = vsel %vm1042, %v1516, %v1512
        %v1518 = vlaneseq
        %v1519 = vshrl.u32 %v1518, 7
        %v1520 = vsub.s32 %v934, %v1519
        %v1521 = vrot.slane %v917, %v1520
        %v1522 = vlaneseq
        %v1523 = vshrl.u32 %v1522, 7
        %v1524 = vsub.s32 %v939, %v1523
        %v1525 = vrot.slane %v918, %v1524
        %v1526 = vsel %vm944, %v1525, %v1521
        %v1527 = vlaneseq
        %v1528 = vshrl.u32 %v1527, 7
        %v1529 = vsub.s32 %v946, %v1528
        %v1530 = vrot.slane %v919, %v1529
        %v1531 = vsel %vm951, %v1530, %v1526
        %v1532 = vlaneseq
        %v1533 = vshrl.u32 %v1532, 7
        %v1534 = vsub.s32 %v953, %v1533
        %v1535 = vrot.slane %v920, %v1534
        %v1536 = vsel %vm958, %v1535, %v1531
        %v1537 = vlaneseq
        %v1538 = vshrl.u32 %v1537, 7
        %v1539 = vsub.s32 %v960, %v1538
        %v1540 = vrot.slane %v921, %v1539
        %v1541 = vsel %vm965, %v1540, %v1536
        %v1542 = vlaneseq
        %v1543 = vshrl.u32 %v1542, 7
        %v1544 = vsub.s32 %v967, %v1543
        %v1545 = vrot.slane %v922, %v1544
        %v1546 = vsel %vm972, %v1545, %v1541
        %v1547 = vlaneseq
        %v1548 = vshrl.u32 %v1547, 7
        %v1549 = vsub.s32 %v974, %v1548
        %v1550 = vrot.slane %v923, %v1549
        %v1551 = vsel %vm979, %v1550, %v1546
        %v1552 = vlaneseq
        %v1553 = vshrl.u32 %v1552, 7
        %v1554 = vsub.s32 %v981, %v1553
        %v1555 = vrot.slane %v924, %v1554
        %v1556 = vsel %vm986, %v1555, %v1551
        %v1557 = vlaneseq
        %v1558 = vshrl.u32 %v1557, 7
        %v1559 = vsub.s32 %v988, %v1558
        %v1560 = vrot.slane %v925, %v1559
        %v1561 = vsel %vm993, %v1560, %v1556
        %v1562 = vlaneseq
        %v1563 = vshrl.u32 %v1562, 7
        %v1564 = vsub.s32 %v995, %v1563
        %v1565 = vrot.slane %v926, %v1564
        %v1566 = vsel %vm1000, %v1565, %v1561
        %v1567 = vlaneseq
        %v1568 = vshrl.u32 %v1567, 7
        %v1569 = vsub.s32 %v1002, %v1568
        %v1570 = vrot.slane %v927, %v1569
        %v1571 = vsel %vm1007, %v1570, %v1566
        %v1572 = vlaneseq
        %v1573 = vshrl.u32 %v1572, 7
        %v1574 = vsub.s32 %v1009, %v1573
        %v1575 = vrot.slane %v928, %v1574
        %v1576 = vsel %vm1014, %v1575, %v1571
        %v1577 = vlaneseq
        %v1578 = vshrl.u32 %v1577, 7
        %v1579 = vsub.s32 %v1016, %v1578
        %v1580 = vrot.slane %v929, %v1579
        %v1581 = vsel %vm1021, %v1580, %v1576
        %v1582 = vlaneseq
        %v1583 = vshrl.u32 %v1582, 7
        %v1584 = vsub.s32 %v1023, %v1583
        %v1585 = vrot.slane %v930, %v1584
        %v1586 = vsel %vm1028, %v1585, %v1581
        %v1587 = vlaneseq
        %v1588 = vshrl.u32 %v1587, 7
        %v1589 = vsub.s32 %v1030, %v1588
        %v1590 = vrot.slane %v931, %v1589
        %v1591 = vsel %vm1035, %v1590, %v1586
        %v1592 = vlaneseq
        %v1593 = vshrl.u32 %v1592, 7
        %v1594 = vsub.s32 %v1037, %v1593
        %v1595 = vrot.slane %v932, %v1594
        %v1596 = vsel %vm1042, %v1595, %v1591
        %vm1597 = vcmask 1041409
        %v1598 = vsel %vm1597, %v1122, %v1043
        %vm1599 = vcmask 1042434
        %v1600 = vsel %vm1599, %v1201, %v1598
        %vm1601 = vcmask 1043459
        %v1602 = vsel %vm1601, %v1280, %v1600
        %vm1603 = vcmask 1044484
        %v1604 = vsel %vm1603, %v1359, %v1602
        %vm1605 = vcmask 1045509
        %v1606 = vsel %vm1605, %v1438, %v1604
        %vm1607 = vcmask 1046534
        %v1608 = vsel %vm1607, %v1517, %v1606
        %vm1609 = vcmask 1047559
        %v1610 = vsel %vm1609, %v1596, %v1608
        %v1611 = vpack.c.b16 %v1610, %v1610
        %v1629 = vunpack.c.l.b16 %v725
        %v1630 = vunpack.c.h.b16 %v725
        %v1631 = vunpack.c.l.b16 %v726
        %v1632 = vunpack.c.h.b16 %v726
        %v1633 = vunpack.c.l.b16 %v727
        %v1634 = vunpack.c.h.b16 %v727
        %v1635 = vunpack.c.l.b16 %v728
        %v1636 = vunpack.c.h.b16 %v728
        %v1637 = vunpack.c.l.b16 %v729
        %v1638 = vunpack.c.h.b16 %v729
        %v1639 = vunpack.c.l.b16 %v730
        %v1640 = vunpack.c.h.b16 %v730
        %v1641 = vunpack.c.l.b16 %v731
        %v1642 = vunpack.c.h.b16 %v731
        %v1643 = vunpack.c.l.b16 %v732
        %v1644 = vunpack.c.h.b16 %v732
        %v1645 = vunpack.c.l.b16 %v733
        %v1646 = vunpack.c.h.b16 %v733
        %v1647 = vunpack.c.l.b16 %v734
        %v1648 = vunpack.c.h.b16 %v734
        %v1649 = vunpack.c.l.b16 %v735
        %v1650 = vunpack.c.h.b16 %v735
        %v1651 = vunpack.c.l.b16 %v736
        %v1652 = vunpack.c.h.b16 %v736
        %v1653 = vunpack.c.l.b16 %v737
        %v1654 = vunpack.c.h.b16 %v737
        %v1655 = vunpack.c.l.b16 %v738
        %v1656 = vunpack.c.h.b16 %v738
        %v1657 = vunpack.c.l.b16 %v739
        %v1658 = vunpack.c.h.b16 %v739
        %v1659 = vunpack.c.l.b16 %v740
        %v1660 = vunpack.c.h.b16 %v740
        %v1661 = vpack.c.b16 %v1631, %v1629
        %v1662 = vpack.c.b16 %v1632, %v1630
        %v1663 = vpack.c.b16 %v1635, %v1633
        %v1664 = vpack.c.b16 %v1636, %v1634
        %v1665 = vpack.c.b16 %v1639, %v1637
        %v1666 = vpack.c.b16 %v1640, %v1638
        %v1667 = vpack.c.b16 %v1643, %v1641
        %v1668 = vpack.c.b16 %v1644, %v1642
        %v1669 = vpack.c.b16 %v1647, %v1645
        %v1670 = vpack.c.b16 %v1648, %v1646
        %v1671 = vpack.c.b16 %v1651, %v1649
        %v1672 = vpack.c.b16 %v1652, %v1650
        %v1673 = vpack.c.b16 %v1655, %v1653
        %v1674 = vpack.c.b16 %v1656, %v1654
        %v1675 = vpack.c.b16 %v1659, %v1657
        %v1676 = vpack.c.b16 %v1660, %v1658
        %1693 = vmatprep.subr.bf16.mxu0 %v1662
        %1694 = vmatpush1.bf16.msra.mxu0 %v1661
        %1695 = vmatprep.subr.bf16.mxu0 %v1664
        %1696 = vmatpush1.bf16.msra.mxu0 %v1663
        %1697 = vmatprep.subr.bf16.mxu0 %v1666
        %1698 = vmatpush1.bf16.msra.mxu0 %v1665
        %1699 = vmatprep.subr.bf16.mxu0 %v1668
        %1700 = vmatpush1.bf16.msra.mxu0 %v1667
        %1701 = vmatprep.subr.bf16.mxu0 %v1670
        %1702 = vmatpush1.bf16.msra.mxu0 %v1669
        %1703 = vmatprep.subr.bf16.mxu0 %v1672
        %1704 = vmatpush1.bf16.msra.mxu0 %v1671
        %1705 = vmatprep.subr.bf16.mxu0 %v1674
        %1706 = vmatpush1.bf16.msra.mxu0 %v1673
        %1707 = vmatprep.subr.bf16.mxu0 %v1676
        %1708 = vmatpush1.bf16.msra.mxu0 %v1675
        %1709 = vmatprep.subr.bf16.mxu0 0
        %1710 = vmatpush1.bf16.msra.mxu0 0
        %1711 = vmatprep.subr.bf16.mxu0 0
        %1712 = vmatpush1.bf16.msra.mxu0 0
        %1713 = vmatprep.subr.bf16.mxu0 0
        %1714 = vmatpush1.bf16.msra.mxu0 0
        %1715 = vmatprep.subr.bf16.mxu0 0
        %1716 = vmatpush1.bf16.msra.mxu0 0
        %1717 = vmatprep.subr.bf16.mxu0 0
        %1718 = vmatpush1.bf16.msra.mxu0 0
        %1719 = vmatprep.subr.bf16.mxu0 0
        %1720 = vmatpush1.bf16.msra.mxu0 0
        %1721 = vmatprep.subr.bf16.mxu0 0
        %1722 = vmatpush1.bf16.msra.mxu0 0
        %1723 = vmatprep.subr.bf16.mxu0 0
        %1724 = vmatpush1.bf16.msra.mxu0 0
        %1725 = vmatprep.mubr.bf16.mxu0 0
        %1726 = vmatmul.mubr.bf16.gmra.mrb[0].mxu0 %v1611
        %v1727 = vpop.f32.mrb[0].mxu0
        %v1728 = vadd.f32 0.0, %v1727
        %v1729 = vpop.f32.mrb[0].mxu0
        %v1730 = vadd.f32 0.0, %v1729
        %v1731 = vpop.f32.mrb[0].mxu0
        %v1732 = vpop.f32.mrb[0].mxu0
        %1733 = vdwg.mxu0
        %1734 = vst [vmem:[%s139] sm:$0xff] %v1728
        %1735 = vst [vmem:[%s139 + $0x8] sm:$0xff] %v1730
        %s1736 = sand.u32 %s71, 1
        %s1737 = scalar_lea.sflag [#allocation3], %s1736
        %s1738 = sand.u32 %s71, 1
        %s1739 = smul.addr %s1738, 16
        %s1740 = scalar_lea.vmem [#allocation2], %s1739
        // Predicated region
        $region29: #{tpu_custom_call.1} parent=27 // pred_check
          %p1741 = pneg %p81
        $region30: #{tpu_custom_call.1} parent=27 // pred_check_branch
          %1743 = sbr.rel (%p1741) target = $region32
        $region31: #{tpu_custom_call.1} parent=27 // pred_region
          %s1745 = ssub.s32 256, 256
          %1746 = vsyncadd %s1737, %s1745
          %s1747 = smul.addr %s16, 2
          %s1748 = smul.addr %s1747, 128
          %s1749 = scalar_lea.hbm %s2, %s1748
          %s1751 = sshll.u32 %s1740, 4
          %s1752 = int_to_ptr.vmem [resolvable:$true] %s1751
          %1754 = dma.vmem_to_hbm [thread:$0]  %s1752, 256, %s1749, %s1737
        $region32: #{tpu_custom_call.1} parent=27 // pred_fallthru
          _
      $region28: #{tpu_custom_call.1} parent=5 // pred_fallthru
        _
      %p1755 = scmp.le.s32.totalorder 2, %s11
      // Predicated region
      $region33: #{tpu_custom_call.1} parent=5 // pred_check
        %p1756 = pneg %p1755
      $region34: #{tpu_custom_call.1} parent=5 // pred_check_branch
        %1758 = sbr.rel (%p1756) target = $region36
      $region35: #{tpu_custom_call.1} parent=5 // pred_region
        %s1759 = ssub.s32 %s11, 2
        // Predicated region
        $region37: #{tpu_custom_call.1} parent=35 // pred_check
          %p1760 = pneg %p87
        $region38: #{tpu_custom_call.1} parent=35 // pred_check_branch
          %1762 = sbr.rel (%p1760) target = $region40
        $region39: #{tpu_custom_call.1} parent=35 // pred_region
          %s1763 = sand.u32 %s72, 1
          %s1764 = scalar_lea.sflag [#allocation3], %s1763
          %s1765 = sand.u32 %s72, 1
          %s1766 = smul.addr %s1765, 16
          %s1767 = scalar_lea.vmem [#allocation2], %s1766
          %1768 = dma.done %s1764, 256
        $region40: #{tpu_custom_call.1} parent=35 // pred_fallthru
          _
      $region36: #{tpu_custom_call.1} parent=5 // pred_fallthru
        _
    $region6: #{tpu_custom_call.1} parent=1 // loop_footer
      %s15 = sadd.s32 1, %s11
    $region7: #{tpu_custom_call.1} parent=1 // loop_footer_branch
      %10 = sbr.rel target = $region3
    $region8: #{tpu_custom_call.1} parent=1 // loop_exit
      _
    %1769 = vsyncpa [#allocation3], 1
    %s1770 = scalar_lea.sflag [#allocation3], 1
    %1771 = vsyncpa %s1770, 1

</llo_original>
